<compile_context>
chip_gen: v7x
topology: tpu7x:2x2x1
jax: 0.10.0
libtpu: 0.0.40
codegen_flags: <defaults>
</compile_context>

<pallas_src>
import functools

import jax
import jax.numpy as jnp
from jax.experimental import pallas as pl
from jax.experimental.pallas import tpu as pltpu


# --------------------------------------------------------------------------
# exact (erf) GELU, implemented with ops that lower cleanly in Mosaic.
# Abramowitz & Stegun 7.1.26 rational erf approximation, |err| <= 1.5e-7.
# --------------------------------------------------------------------------
def _erf(z):
    a1, a2, a3, a4, a5 = 0.254829592, -0.284496736, 1.421413741, -1.453152027, 1.061405429
    p = 0.3275911
    az = jnp.abs(z)
    t = 1.0 / (1.0 + p * az)
    poly = ((((a5 * t + a4) * t + a3) * t + a2) * t + a1) * t
    y = 1.0 - poly * jnp.exp(-az * az)
    return jnp.where(z < 0.0, -y, y)


def _gelu_exact(x):
    # matches torch F.gelu (erf form) to ~1e-7
    return 0.5 * x * (1.0 + _erf(x * 0.7071067811865476))


# --------------------------------------------------------------------------
# Fused branch kernel:  1x1 conv (Cin -> 2C)  +  3x3 depthwise (pad=1)  +
#   gated=True : gelu(first C) * (last C)   -> one (band,W,C) output
#   gated=False: k = first C, v = last C    -> two (band,W,C) outputs
# The 2C channels are pre-split in the wrapper into the (a, b) halves so the
# kernel never lane-slices; padding is built in a VMEM scratch (no jnp.pad).
# --------------------------------------------------------------------------
def _make_branch_kernel(band, w, cin, c, gated):
    def kernel(xb_ref, xt_ref, xbt_ref, w1_ref, b1_ref, wdw_ref, bdw_ref, *rest):
        if gated:
            o_ref, pa_ref, pb_ref = rest
        else:
            k_ref, v_ref, pa_ref, pb_ref = rest

        r = pl.program_id(1)
        last = pl.num_programs(1) - 1
        zero_top = r == 0          # image border -> dwconv sees padded zeros
        zero_bot = r == last

        xb = xb_ref[0]             # (band, w, cin)  current row band
        xt = xt_ref[0]             # (1, w, cin)     halo row above (clamped)
        xbo = xbt_ref[0]           # (1, w, cin)     halo row below (clamped)

        def pw(x3d, wmat, bias):   # 1x1 conv on a group of rows, bf16 MXU, f32 acc
            rows = x3d.shape[0]
            y = jnp.dot(x3d.reshape(rows * w, cin).astype(jnp.bfloat16), wmat,
                        preferred_element_type=jnp.float32)
            return y.reshape(rows, w, c) + bias

        # assemble the zero-padded (band+2, w+2, c) dwconv input for each half
        for pad_ref, wmat, bias in ((pa_ref, w1_ref[0], b1_ref[0]),
                                    (pb_ref, w1_ref[1], b1_ref[1])):
            pad_ref[...] = jnp.zeros_like(pad_ref)             # border rows/cols = 0
            pad_ref[1:band + 1, 1:w + 1, :] = pw(xb, wmat, bias)
            pad_ref[0:1, 1:w + 1, :] = jnp.where(zero_top, 0.0, pw(xt, wmat, bias))
            pad_ref[band + 1:band + 2, 1:w + 1, :] = jnp.where(zero_bot, 0.0,
                                                               pw(xbo, wmat, bias))

        # 9-tap depthwise conv on the band (static unrolled; band stays register-resident)
        wdwa = wdw_ref[0]          # (3, 3, c)
        wdwb = wdw_ref[1]
        acc_a = jnp.zeros((band, w, c), jnp.float32)
        acc_b = jnp.zeros((band, w, c), jnp.float32)
        for dy in range(3):
            for dx in range(3):
                acc_a = acc_a + pa_ref[dy:dy + band, dx:dx + w, :] * wdwa[dy, dx, :]
                acc_b = acc_b + pb_ref[dy:dy + band, dx:dx + w, :] * wdwb[dy, dx, :]
        ya = acc_a + bdw_ref[0]    # (band, w, c)
        yb = acc_b + bdw_ref[1]

        if gated:
            o_ref[0] = _gelu_exact(ya) * yb       # fused gate, stored exactly once
        else:
            k_ref[0] = ya                         # fused chunk: k / v stored exactly once
            v_ref[0] = yb

    return kernel


def _pick_band(h, w, c, cap_rows=16, acc_budget_bytes=256 * 1024):
    # largest divisor of H (<= cap) keeping the two f32 accumulator bands in vregs
    cap = max(1, min(cap_rows, acc_budget_bytes // max(1, 2 * w * c * 4)))
    band = 1
    for d in range(1, h + 1):
        if h % d == 0 and d <= cap:
            band = d
    return band


def fused_gated_branch(x_nhwc, w1, b1, wdw, bdw, *, gated):
    """Fused 1x1 (Cin->2C) + 3x3 depthwise + (gelu gate | chunk), row-band tiled."""
    B, H, W, Cin = x_nhwc.shape
    C2 = w1.shape[1]
    C = C2 // 2
    band = _pick_band(H, W, C)
    nb = H // band

    # split the 2C channels into the two halves once, in the wrapper (tiny tensors);
    # matmul weights cast to bf16 for the MXU, everything else stays f32.
    w1s = jnp.stack([w1[:, :C], w1[:, C:]], axis=0).astype(jnp.bfloat16)        # (2,Cin,C)
    b1s = jnp.stack([b1[:C], b1[C:]], axis=0).reshape(2, 1, C).astype(jnp.float32)
    wdws = jnp.stack([wdw[..., :C], wdw[..., C:]], axis=0).astype(jnp.float32)  # (2,3,3,C)
    bdws = jnp.stack([bdw[:C], bdw[C:]], axis=0).reshape(2, 1, C).astype(jnp.float32)

    band_spec = pl.BlockSpec((1, band, W, Cin), lambda b, r: (b, r, 0, 0))
    # 1-row halos above/below the band; clamped at the image border, zeroed in-kernel
    top_spec = pl.BlockSpec((1, 1, W, Cin),
                            lambda b, r: (b, jnp.maximum(r * band - 1, 0), 0, 0))
    bot_spec = pl.BlockSpec((1, 1, W, Cin),
                            lambda b, r: (b, jnp.minimum(r * band + band, H - 1), 0, 0))
    out_spec = pl.BlockSpec((1, band, W, C), lambda b, r: (b, r, 0, 0))

    if gated:
        out_shape = jax.ShapeDtypeStruct((B, H, W, C), jnp.float32)
        out_specs = out_spec
    else:
        out_shape = (jax.ShapeDtypeStruct((B, H, W, C), jnp.float32),
                     jax.ShapeDtypeStruct((B, H, W, C), jnp.float32))
        out_specs = (out_spec, out_spec)

    return pl.pallas_call(
        _make_branch_kernel(band, W, Cin, C, gated),
        out_shape=out_shape,
        grid=(B, nb),
        in_specs=[
            band_spec, top_spec, bot_spec,
            pl.BlockSpec((2, Cin, C), lambda b, r: (0, 0, 0)),
            pl.BlockSpec((2, 1, C), lambda b, r: (0, 0, 0)),
            pl.BlockSpec((2, 3, 3, C), lambda b, r: (0, 0, 0, 0)),
            pl.BlockSpec((2, 1, C), lambda b, r: (0, 0, 0)),
        ],
        out_specs=out_specs,
        scratch_shapes=[pltpu.VMEM((band + 2, W + 2, C), jnp.float32),
                        pltpu.VMEM((band + 2, W + 2, C), jnp.float32)],
        compiler_params=pltpu.CompilerParams(
            dimension_semantics=("parallel", "parallel")),
    )(x_nhwc, x_nhwc, x_nhwc, w1s, b1s, wdws, bdws)


# --------------------------------------------------------------------------
# Fused channel attention + project_out.
# q/k/v stay channel-last (B, HW, C); all heads are computed in a single
# (C x C) matmul (contraction over HW) with a block-diagonal head mask, so no
# head rearranges or transposes ever touch HBM.  Per-head temperature is
# applied column-wise (equivalent inside the block-diagonal mask).
# --------------------------------------------------------------------------
def _attn_projout_kernel(q_ref, k_ref, v_ref, t_ref, mask_ref, wo_ref, bo_ref, o_ref):
    q = q_ref[0]                               # (HW, C) f32
    k = k_ref[0]
    v = v_ref[0]
    eps2 = 1e-24                               # (torch F.normalize eps)^2

    # L2 normalize over the spatial (HW) axis, f32, rsqrt on the EUP
    inv_q = jax.lax.rsqrt(jnp.maximum(jnp.sum(q * q, axis=0, keepdims=True), eps2))
    inv_k = jax.lax.rsqrt(jnp.maximum(jnp.sum(k * k, axis=0, keepdims=True), eps2))
    qn = (q * inv_q).astype(jnp.bfloat16)
    kn = (k * inv_k).astype(jnp.bfloat16)

    # all heads at once: attn[i, j] = sum_hw qn[hw, i] * kn[hw, j]
    attn = jax.lax.dot_general(qn, kn, (((0,), (0,)), ((), ())),
                               preferred_element_type=jnp.float32)          # (C, C)
    attn = attn * t_ref[...] + mask_ref[...]   # per-head temperature + block-diag mask

    # softmax over the (masked) channel axis, f32
    m = jnp.max(attn, axis=-1, keepdims=True)
    e = jnp.exp(attn - m)
    p = e * pl.reciprocal(jnp.sum(e, axis=-1, keepdims=True), approx=True)

    # out[hw, i] = sum_j v[hw, j] * p[i, j]  -> already channel-last, no transpose back
    out = jax.lax.dot_general(v.astype(jnp.bfloat16), p.astype(jnp.bfloat16),
                              (((1,), (1,)), ((), ())),
                              preferred_element_type=jnp.float32)           # (HW, C)

    # fused 1x1 project_out
    o_ref[0] = jnp.dot(out.astype(jnp.bfloat16), wo_ref[...],
                       preferred_element_type=jnp.float32) + bo_ref[...]


def attention_project_out(q, k, v, temperature, wo, bo, num_heads):
    B, HW, C = q.shape
    ch = C // num_heads
    # column-wise per-head temperature (equivalent to row-wise inside the diag blocks)
    t_cols = jnp.repeat(temperature.astype(jnp.float32), ch).reshape(1, C)
    hid = jnp.arange(C, dtype=jnp.int32) // ch
    head_mask = jnp.where(hid[:, None] == hid[None, :], 0.0, -1e30).astype(jnp.float32)

    blk = pl.BlockSpec((1, HW, C), lambda b: (b, 0, 0))
    # TODO(synk): for very large HW (v7x 64 MiB VMEM), add an HW "arbitrary" reduction
    #             grid axis that accumulates the sum-of-squares and q@k^T partials in
    #             VMEM scratch instead of holding full (HW, C) blocks per step.
    return pl.pallas_call(
        _attn_projout_kernel,
        out_shape=jax.ShapeDtypeStruct((B, HW, C), jnp.float32),
        grid=(B,),
        in_specs=[
            blk, blk, blk,
            pl.BlockSpec((1, C), lambda b: (0, 0)),
            pl.BlockSpec((C, C), lambda b: (0, 0)),
            pl.BlockSpec((C, C), lambda b: (0, 0)),
            pl.BlockSpec((1, C), lambda b: (0, 0)),
        ],
        out_specs=blk,
        compiler_params=pltpu.CompilerParams(dimension_semantics=("parallel",)),
    )(q, k, v, t_cols, head_mask,
      wo.astype(jnp.bfloat16), bo.reshape(1, C).astype(jnp.float32))


# --------------------------------------------------------------------------
# Parameter init (deterministic, synthetic) and forward pass
# --------------------------------------------------------------------------
def init_params(key, dim, num_heads):
    hidden = dim  # ffn_expansion_factor = 1 in Gated_qdwconv
    ks = jax.random.split(key, 10)
    w1x1 = lambda k, ci, co: 0.1 * jax.random.normal(k, (ci, co), jnp.float32)
    wdw = lambda k, c: 0.1 * jax.random.normal(k, (3, 3, c), jnp.float32)
    bvec = lambda k, c: 0.05 * jax.random.normal(k, (c,), jnp.float32)
    return {
        "q_proj_in_w": w1x1(ks[0], dim, 2 * hidden),
        "q_proj_in_b": bvec(ks[1], 2 * hidden),
        "q_dw_w": wdw(ks[2], 2 * hidden),       # w[dy,dx,c] = torch_w[c,0,dy,dx]
        "q_dw_b": bvec(ks[3], 2 * hidden),
        "kv_w": w1x1(ks[4], dim, 2 * dim),
        "kv_b": bvec(ks[5], 2 * dim),
        "kv_dw_w": wdw(ks[6], 2 * dim),
        "kv_dw_b": bvec(ks[7], 2 * dim),
        "proj_out_w": w1x1(ks[8], dim, dim),
        "proj_out_b": bvec(ks[9], dim),
        # nn.Parameter(torch.ones(num_heads, 1, 1))
        "temperature": jnp.ones((num_heads,), jnp.float32),
    }


def gated_attention_forward(params, x_v, x_r, num_heads):
    b, c, h, w = x_v.shape
    hw = h * w
    to_nhwc = lambda x: jnp.transpose(x, (0, 2, 3, 1))       # NCHW -> NHWC (C-sized tensors only)
    xr, xv = to_nhwc(x_r), to_nhwc(x_v)

    # q branch: Gated_qdwconv = 1x1 project_in -> 3x3 dwconv -> gelu(x1)*x2 (fused)
    q = fused_gated_branch(xr, params["q_proj_in_w"], params["q_proj_in_b"],
                           params["q_dw_w"], params["q_dw_b"], gated=True)
    # kv branch: 1x1 kv -> 3x3 dwconv -> chunk into k, v (fused)
    k, v = fused_gated_branch(xv, params["kv_w"], params["kv_b"],
                              params["kv_dw_w"], params["kv_dw_b"], gated=False)

    # channel attention over heads + fused project_out, all channel-last (free reshapes)
    out = attention_project_out(q.reshape(b, hw, c), k.reshape(b, hw, c),
                                v.reshape(b, hw, c), params["temperature"],
                                params["proj_out_w"], params["proj_out_b"], num_heads)
    return out.reshape(b, h, w, c).transpose(0, 3, 1, 2)     # back to NCHW


if __name__ == "__main__":
    batch, dim, num_heads, h, w = 2, 16, 4, 8, 8
    key = jax.random.PRNGKey(0)
    kp, kxv, kxr = jax.random.split(key, 3)
    params = init_params(kp, dim, num_heads)
    x_v = jax.random.normal(kxv, (batch, dim, h, w), jnp.float32)
    x_r = jax.random.normal(kxr, (batch, dim, h, w), jnp.float32)

    fwd = jax.jit(functools.partial(gated_attention_forward, num_heads=num_heads))
    out = jax.block_until_ready(fwd(params, x_v, x_r))
    assert out.shape == (batch, dim, h, w), out.shape
    assert bool(jnp.all(jnp.isfinite(out)))
    print("KERNEL_OK")
</pallas_src>

<mosaic_0001>
module attributes {stable_mosaic.version = 11 : i64} {
  func.func @_attn_projout_kernel(%arg0: i32, %arg1: memref<1x64x16xf32, #tpu.memory_space<vmem>>, %arg2: memref<1x64x16xf32, #tpu.memory_space<vmem>>, %arg3: memref<1x64x16xf32, #tpu.memory_space<vmem>>, %arg4: memref<1x16xf32, #tpu.memory_space<vmem>>, %arg5: memref<16x16xf32, #tpu.memory_space<vmem>>, %arg6: memref<16x16xbf16, #tpu.memory_space<vmem>>, %arg7: memref<1x16xf32, #tpu.memory_space<vmem>>, %arg8: memref<1x64x16xf32, #tpu.memory_space<vmem>>) attributes {dimension_semantics = [#tpu.dimension_semantics<parallel>], iteration_bounds = array<i64: 2>, scalar_prefetch = 0 : i64, scratch_operands = 0 : i64, tpu.core_type = #tpu.core_type<tc>, window_params = [{transform_indices = @transform_0, window_bounds = array<i64: 1, 64, 16>}, {transform_indices = @transform_1, window_bounds = array<i64: 1, 64, 16>}, {transform_indices = @transform_2, window_bounds = array<i64: 1, 64, 16>}, {pipeline_mode = #tpu.pipeline_mode<synchronous>, transform_indices = @transform_3, window_bounds = array<i64: 1, 16>}, {pipeline_mode = #tpu.pipeline_mode<synchronous>, transform_indices = @transform_4, window_bounds = array<i64: 16, 16>}, {pipeline_mode = #tpu.pipeline_mode<synchronous>, transform_indices = @transform_5, window_bounds = array<i64: 16, 16>}, {pipeline_mode = #tpu.pipeline_mode<synchronous>, transform_indices = @transform_6, window_bounds = array<i64: 1, 16>}, {transform_indices = @transform_7, window_bounds = array<i64: 1, 64, 16>}]} {
    %c0 = arith.constant 0 : index
    %c0_0 = arith.constant 0 : index
    %c0_1 = arith.constant 0 : index
    %0 = vector.load %arg1[%c0, %c0_0, %c0_1] : memref<1x64x16xf32, #tpu.memory_space<vmem>>, vector<1x64x16xf32>
    %1 = vector.shape_cast %0 : vector<1x64x16xf32> to vector<64x16xf32>
    %c0_2 = arith.constant 0 : index
    %c0_3 = arith.constant 0 : index
    %c0_4 = arith.constant 0 : index
    %2 = vector.load %arg2[%c0_2, %c0_3, %c0_4] : memref<1x64x16xf32, #tpu.memory_space<vmem>>, vector<1x64x16xf32>
    %3 = vector.shape_cast %2 : vector<1x64x16xf32> to vector<64x16xf32>
    %c0_5 = arith.constant 0 : index
    %c0_6 = arith.constant 0 : index
    %c0_7 = arith.constant 0 : index
    %4 = vector.load %arg3[%c0_5, %c0_6, %c0_7] : memref<1x64x16xf32, #tpu.memory_space<vmem>>, vector<1x64x16xf32>
    %5 = vector.shape_cast %4 : vector<1x64x16xf32> to vector<64x16xf32>
    %6 = arith.mulf %1, %1 : vector<64x16xf32>
    %cst = arith.constant dense<0.000000e+00> : vector<16xf32>
    %7 = vector.multi_reduction <add>, %6, %cst [0] : vector<64x16xf32> to vector<16xf32>
    %8 = vector.shape_cast %7 : vector<16xf32> to vector<1x16xf32>
    %cst_8 = arith.constant 1.000000e-24 : f32
    %9 = vector.broadcast %cst_8 : f32 to vector<1x16xf32>
    %10 = arith.maximumf %8, %9 : vector<1x16xf32>
    %11 = math.rsqrt %10 : vector<1x16xf32>
    %12 = arith.mulf %3, %3 : vector<64x16xf32>
    %cst_9 = arith.constant dense<0.000000e+00> : vector<16xf32>
    %13 = vector.multi_reduction <add>, %12, %cst_9 [0] : vector<64x16xf32> to vector<16xf32>
    %14 = vector.shape_cast %13 : vector<16xf32> to vector<1x16xf32>
    %cst_10 = arith.constant 1.000000e-24 : f32
    %15 = vector.broadcast %cst_10 : f32 to vector<1x16xf32>
    %16 = arith.maximumf %14, %15 : vector<1x16xf32>
    %17 = math.rsqrt %16 : vector<1x16xf32>
    %18 = vector.broadcast %11 : vector<1x16xf32> to vector<64x16xf32>
    %19 = arith.mulf %1, %18 : vector<64x16xf32>
    %20 = arith.truncf %19 : vector<64x16xf32> to vector<64x16xbf16>
    %21 = vector.broadcast %17 : vector<1x16xf32> to vector<64x16xf32>
    %22 = arith.mulf %3, %21 : vector<64x16xf32>
    %23 = arith.truncf %22 : vector<64x16xf32> to vector<64x16xbf16>
    %cst_11 = arith.constant dense<0.000000e+00> : vector<16x16xf32>
    %24 = tpu.matmul %20, %23, %cst_11 {dimension_numbers = #tpu.dot_dimension_numbers<[0], [0], [1], [1], [0, 1, 1, 1], [], []>} : vector<64x16xbf16>, vector<64x16xbf16>, vector<16x16xf32> -> vector<16x16xf32>
    %c0_12 = arith.constant 0 : index
    %c0_13 = arith.constant 0 : index
    %25 = vector.load %arg4[%c0_12, %c0_13] : memref<1x16xf32, #tpu.memory_space<vmem>>, vector<1x16xf32>
    %26 = vector.broadcast %25 : vector<1x16xf32> to vector<16x16xf32>
    %27 = arith.mulf %24, %26 : vector<16x16xf32>
    %c0_14 = arith.constant 0 : index
    %c0_15 = arith.constant 0 : index
    %28 = vector.load %arg5[%c0_14, %c0_15] : memref<16x16xf32, #tpu.memory_space<vmem>>, vector<16x16xf32>
    %29 = arith.addf %27, %28 : vector<16x16xf32>
    %cst_16 = arith.constant dense<0xFF800000> : vector<16xf32>
    %30 = vector.multi_reduction <maximumf>, %29, %cst_16 [1] : vector<16x16xf32> to vector<16xf32>
    %31 = vector.shape_cast %30 : vector<16xf32> to vector<16x1xf32>
    %32 = vector.broadcast %31 : vector<16x1xf32> to vector<16x16xf32>
    %33 = arith.subf %29, %32 : vector<16x16xf32>
    %34 = math.exp %33 : vector<16x16xf32>
    %cst_17 = arith.constant dense<0.000000e+00> : vector<16xf32>
    %35 = vector.multi_reduction <add>, %34, %cst_17 [1] : vector<16x16xf32> to vector<16xf32>
    %36 = vector.shape_cast %35 : vector<16xf32> to vector<16x1xf32>
    %37 = tpu.reciprocal %36 {approx = true} : vector<16x1xf32> -> vector<16x1xf32>
    %38 = vector.broadcast %37 : vector<16x1xf32> to vector<16x16xf32>
    %39 = arith.mulf %34, %38 : vector<16x16xf32>
    %40 = arith.truncf %5 : vector<64x16xf32> to vector<64x16xbf16>
    %41 = arith.truncf %39 : vector<16x16xf32> to vector<16x16xbf16>
    %cst_18 = arith.constant dense<0.000000e+00> : vector<64x16xf32>
    %42 = tpu.matmul %40, %41, %cst_18 {dimension_numbers = #tpu.dot_dimension_numbers<[1], [1], [0], [0], [0, 0, 1, 0], [], []>} : vector<64x16xbf16>, vector<16x16xbf16>, vector<64x16xf32> -> vector<64x16xf32>
    %43 = arith.truncf %42 : vector<64x16xf32> to vector<64x16xbf16>
    %c0_19 = arith.constant 0 : index
    %c0_20 = arith.constant 0 : index
    %44 = vector.load %arg6[%c0_19, %c0_20] : memref<16x16xbf16, #tpu.memory_space<vmem>>, vector<16x16xbf16>
    %cst_21 = arith.constant dense<0.000000e+00> : vector<64x16xf32>
    %45 = tpu.matmul %43, %44, %cst_21 {dimension_numbers = #tpu.dot_dimension_numbers<[1], [0], [0], [1], [0, 0, 1, 1], [], []>} : vector<64x16xbf16>, vector<16x16xbf16>, vector<64x16xf32> -> vector<64x16xf32>
    %c0_22 = arith.constant 0 : index
    %c0_23 = arith.constant 0 : index
    %46 = vector.load %arg7[%c0_22, %c0_23] : memref<1x16xf32, #tpu.memory_space<vmem>>, vector<1x16xf32>
    %47 = vector.broadcast %46 : vector<1x16xf32> to vector<64x16xf32>
    %48 = arith.addf %45, %47 : vector<64x16xf32>
    %c0_24 = arith.constant 0 : index
    %c0_25 = arith.constant 0 : index
    %c0_26 = arith.constant 0 : index
    %49 = vector.load %arg8[%c0_24, %c0_25, %c0_26] : memref<1x64x16xf32, #tpu.memory_space<vmem>>, vector<1x64x16xf32>
    %50 = vector.shape_cast %49 : vector<1x64x16xf32> to vector<64x16xf32>
    %51 = vector.shape_cast %48 : vector<64x16xf32> to vector<1x64x16xf32>
    tpu.vector_store %arg8[%c0_24, %c0_25, %c0_26], %51 {strides = array<i32>} : memref<1x64x16xf32, #tpu.memory_space<vmem>>, vector<1x64x16xf32>,
    return
  }
  func.func @transform_0(%arg0: i32) -> (i32, i32, i32) {
    %c0_i32 = arith.constant 0 : i32
    %c0_i32_0 = arith.constant 0 : i32
    %c0_i32_1 = arith.constant 0 : i32
    return %arg0, %c0_i32, %c0_i32_0 : i32, i32, i32
  }
  func.func @transform_1(%arg0: i32) -> (i32, i32, i32) {
    %c0_i32 = arith.constant 0 : i32
    %c0_i32_0 = arith.constant 0 : i32
    %c0_i32_1 = arith.constant 0 : i32
    return %arg0, %c0_i32, %c0_i32_0 : i32, i32, i32
  }
  func.func @transform_2(%arg0: i32) -> (i32, i32, i32) {
    %c0_i32 = arith.constant 0 : i32
    %c0_i32_0 = arith.constant 0 : i32
    %c0_i32_1 = arith.constant 0 : i32
    return %arg0, %c0_i32, %c0_i32_0 : i32, i32, i32
  }
  func.func @transform_3(%arg0: i32) -> (i32, i32) {
    %c0_i32 = arith.constant 0 : i32
    %c0_i32_0 = arith.constant 0 : i32
    %c0_i32_1 = arith.constant 0 : i32
    return %c0_i32, %c0_i32_0 : i32, i32
  }
  func.func @transform_4(%arg0: i32) -> (i32, i32) {
    %c0_i32 = arith.constant 0 : i32
    %c0_i32_0 = arith.constant 0 : i32
    %c0_i32_1 = arith.constant 0 : i32
    return %c0_i32, %c0_i32_0 : i32, i32
  }
  func.func @transform_5(%arg0: i32) -> (i32, i32) {
    %c0_i32 = arith.constant 0 : i32
    %c0_i32_0 = arith.constant 0 : i32
    %c0_i32_1 = arith.constant 0 : i32
    return %c0_i32, %c0_i32_0 : i32, i32
  }
  func.func @transform_6(%arg0: i32) -> (i32, i32) {
    %c0_i32 = arith.constant 0 : i32
    %c0_i32_0 = arith.constant 0 : i32
    %c0_i32_1 = arith.constant 0 : i32
    return %c0_i32, %c0_i32_0 : i32, i32
  }
  func.func @transform_7(%arg0: i32) -> (i32, i32, i32) {
    %c0_i32 = arith.constant 0 : i32
    %c0_i32_0 = arith.constant 0 : i32
    %c0_i32_1 = arith.constant 0 : i32
    return %arg0, %c0_i32, %c0_i32_0 : i32, i32, i32
  }
}

module attributes {stable_mosaic.version = 11 : i64} {
  func.func @kernel(%arg0: i32, %arg1: i32, %arg2: memref<1x8x8x16xf32, #tpu.memory_space<vmem>>, %arg3: memref<1x1x8x16xf32, #tpu.memory_space<vmem>>, %arg4: memref<1x1x8x16xf32, #tpu.memory_space<vmem>>, %arg5: memref<2x16x16xbf16, #tpu.memory_space<vmem>>, %arg6: memref<2x1x16xf32, #tpu.memory_space<vmem>>, %arg7: memref<2x3x3x16xf32, #tpu.memory_space<vmem>>, %arg8: memref<2x1x16xf32, #tpu.memory_space<vmem>>, %arg9: memref<1x8x8x16xf32, #tpu.memory_space<vmem>>, %arg10: memref<10x10x16xf32, #tpu.memory_space<vmem>>, %arg11: memref<10x10x16xf32, #tpu.memory_space<vmem>>) attributes {dimension_semantics = [#tpu.dimension_semantics<parallel>, #tpu.dimension_semantics<parallel>], iteration_bounds = array<i64: 2, 1>, scalar_prefetch = 0 : i64, scratch_operands = 2 : i64, tpu.core_type = #tpu.core_type<tc>, window_params = [{transform_indices = @transform_0, window_bounds = array<i64: 1, 8, 8, 16>}, {transform_indices = @transform_1, window_bounds = array<i64: 1, 1, 8, 16>}, {transform_indices = @transform_2, window_bounds = array<i64: 1, 1, 8, 16>}, {pipeline_mode = #tpu.pipeline_mode<synchronous>, transform_indices = @transform_3, window_bounds = array<i64: 2, 16, 16>}, {pipeline_mode = #tpu.pipeline_mode<synchronous>, transform_indices = @transform_4, window_bounds = array<i64: 2, 1, 16>}, {pipeline_mode = #tpu.pipeline_mode<synchronous>, transform_indices = @transform_5, window_bounds = array<i64: 2, 3, 3, 16>}, {pipeline_mode = #tpu.pipeline_mode<synchronous>, transform_indices = @transform_6, window_bounds = array<i64: 2, 1, 16>}, {transform_indices = @transform_7, window_bounds = array<i64: 1, 8, 8, 16>}]} {
    %c0_i32 = arith.constant 0 : i32
    %0 = arith.cmpi eq, %arg1, %c0_i32 : i32
    %c0_i32_0 = arith.constant 0 : i32
    %1 = arith.cmpi eq, %arg1, %c0_i32_0 : i32
    %c0 = arith.constant 0 : index
    %c0_1 = arith.constant 0 : index
    %c0_2 = arith.constant 0 : index
    %c0_3 = arith.constant 0 : index
    %2 = vector.load %arg2[%c0, %c0_1, %c0_2, %c0_3] : memref<1x8x8x16xf32, #tpu.memory_space<vmem>>, vector<1x8x8x16xf32>
    %3 = vector.shape_cast %2 : vector<1x8x8x16xf32> to vector<8x8x16xf32>
    %c0_4 = arith.constant 0 : index
    %c0_5 = arith.constant 0 : index
    %c0_6 = arith.constant 0 : index
    %c0_7 = arith.constant 0 : index
    %4 = vector.load %arg3[%c0_4, %c0_5, %c0_6, %c0_7] : memref<1x1x8x16xf32, #tpu.memory_space<vmem>>, vector<1x1x8x16xf32>
    %5 = vector.shape_cast %4 : vector<1x1x8x16xf32> to vector<1x8x16xf32>
    %c0_8 = arith.constant 0 : index
    %c0_9 = arith.constant 0 : index
    %c0_10 = arith.constant 0 : index
    %c0_11 = arith.constant 0 : index
    %6 = vector.load %arg4[%c0_8, %c0_9, %c0_10, %c0_11] : memref<1x1x8x16xf32, #tpu.memory_space<vmem>>, vector<1x1x8x16xf32>
    %7 = vector.shape_cast %6 : vector<1x1x8x16xf32> to vector<1x8x16xf32>
    %c0_12 = arith.constant 0 : index
    %c0_13 = arith.constant 0 : index
    %c0_14 = arith.constant 0 : index
    %8 = vector.load %arg5[%c0_12, %c0_13, %c0_14] : memref<2x16x16xbf16, #tpu.memory_space<vmem>>, vector<1x16x16xbf16>
    %9 = vector.shape_cast %8 : vector<1x16x16xbf16> to vector<16x16xbf16>
    %c0_15 = arith.constant 0 : index
    %c0_16 = arith.constant 0 : index
    %c0_17 = arith.constant 0 : index
    %10 = vector.load %arg6[%c0_15, %c0_16, %c0_17] : memref<2x1x16xf32, #tpu.memory_space<vmem>>, vector<1x1x16xf32>
    %11 = vector.shape_cast %10 : vector<1x1x16xf32> to vector<1x16xf32>
    %c1 = arith.constant 1 : index
    %c0_18 = arith.constant 0 : index
    %c0_19 = arith.constant 0 : index
    %12 = vector.load %arg5[%c1, %c0_18, %c0_19] : memref<2x16x16xbf16, #tpu.memory_space<vmem>>, vector<1x16x16xbf16>
    %13 = vector.shape_cast %12 : vector<1x16x16xbf16> to vector<16x16xbf16>
    %c1_20 = arith.constant 1 : index
    %c0_21 = arith.constant 0 : index
    %c0_22 = arith.constant 0 : index
    %14 = vector.load %arg6[%c1_20, %c0_21, %c0_22] : memref<2x1x16xf32, #tpu.memory_space<vmem>>, vector<1x1x16xf32>
    %15 = vector.shape_cast %14 : vector<1x1x16xf32> to vector<1x16xf32>
    %cst = arith.constant 0.000000e+00 : f32
    %16 = vector.broadcast %cst : f32 to vector<10x10x16xf32>
    %c0_23 = arith.constant 0 : index
    %c0_24 = arith.constant 0 : index
    %c0_25 = arith.constant 0 : index
    %17 = vector.load %arg10[%c0_23, %c0_24, %c0_25] : memref<10x10x16xf32, #tpu.memory_space<vmem>>, vector<10x10x16xf32>
    tpu.vector_store %arg10[%c0_23, %c0_24, %c0_25], %16 {strides = array<i32>} : memref<10x10x16xf32, #tpu.memory_space<vmem>>, vector<10x10x16xf32>,
    %18 = vector.shape_cast %3 : vector<8x8x16xf32> to vector<64x16xf32>
    %19 = arith.truncf %18 : vector<64x16xf32> to vector<64x16xbf16>
    %cst_26 = arith.constant dense<0.000000e+00> : vector<64x16xf32>
    %20 = tpu.matmul %19, %9, %cst_26 {dimension_numbers = #tpu.dot_dimension_numbers<[1], [0], [0], [1], [0, 0, 1, 1], [], []>} : vector<64x16xbf16>, vector<16x16xbf16>, vector<64x16xf32> -> vector<64x16xf32>
    %21 = vector.shape_cast %20 : vector<64x16xf32> to vector<8x8x16xf32>
    %22 = vector.shape_cast %11 : vector<1x16xf32> to vector<1x1x16xf32>
    %23 = vector.broadcast %22 : vector<1x1x16xf32> to vector<8x8x16xf32>
    %24 = arith.addf %21, %23 : vector<8x8x16xf32>
    %c1_27 = arith.constant 1 : index
    %c1_28 = arith.constant 1 : index
    %c0_29 = arith.constant 0 : index
    %25 = vector.load %arg10[%c1_27, %c1_28, %c0_29] : memref<10x10x16xf32, #tpu.memory_space<vmem>>, vector<8x8x16xf32>
    tpu.vector_store %arg10[%c1_27, %c1_28, %c0_29], %24 {strides = array<i32>} : memref<10x10x16xf32, #tpu.memory_space<vmem>>, vector<8x8x16xf32>,
    %26 = vector.shape_cast %5 : vector<1x8x16xf32> to vector<8x16xf32>
    %27 = arith.truncf %26 : vector<8x16xf32> to vector<8x16xbf16>
    %cst_30 = arith.constant dense<0.000000e+00> : vector<8x16xf32>
    %28 = tpu.matmul %27, %9, %cst_30 {dimension_numbers = #tpu.dot_dimension_numbers<[1], [0], [0], [1], [0, 0, 1, 1], [], []>} : vector<8x16xbf16>, vector<16x16xbf16>, vector<8x16xf32> -> vector<8x16xf32>
    %29 = vector.shape_cast %28 : vector<8x16xf32> to vector<1x8x16xf32>
    %30 = vector.shape_cast %11 : vector<1x16xf32> to vector<1x1x16xf32>
    %31 = vector.broadcast %30 : vector<1x1x16xf32> to vector<1x8x16xf32>
    %32 = arith.addf %29, %31 : vector<1x8x16xf32>
    %cst_31 = arith.constant 0.000000e+00 : f32
    %33 = vector.broadcast %cst_31 : f32 to vector<1x8x16xf32>
    %34 = arith.select %0, %33, %32 : vector<1x8x16xf32>
    %c0_32 = arith.constant 0 : index
    %c1_33 = arith.constant 1 : index
    %c0_34 = arith.constant 0 : index
    %35 = vector.load %arg10[%c0_32, %c1_33, %c0_34] : memref<10x10x16xf32, #tpu.memory_space<vmem>>, vector<1x8x16xf32>
    tpu.vector_store %arg10[%c0_32, %c1_33, %c0_34], %34 {strides = array<i32>} : memref<10x10x16xf32, #tpu.memory_space<vmem>>, vector<1x8x16xf32>,
    %36 = vector.shape_cast %7 : vector<1x8x16xf32> to vector<8x16xf32>
    %37 = arith.truncf %36 : vector<8x16xf32> to vector<8x16xbf16>
    %cst_35 = arith.constant dense<0.000000e+00> : vector<8x16xf32>
    %38 = tpu.matmul %37, %9, %cst_35 {dimension_numbers = #tpu.dot_dimension_numbers<[1], [0], [0], [1], [0, 0, 1, 1], [], []>} : vector<8x16xbf16>, vector<16x16xbf16>, vector<8x16xf32> -> vector<8x16xf32>
    %39 = vector.shape_cast %38 : vector<8x16xf32> to vector<1x8x16xf32>
    %40 = vector.shape_cast %11 : vector<1x16xf32> to vector<1x1x16xf32>
    %41 = vector.broadcast %40 : vector<1x1x16xf32> to vector<1x8x16xf32>
    %42 = arith.addf %39, %41 : vector<1x8x16xf32>
    %cst_36 = arith.constant 0.000000e+00 : f32
    %43 = vector.broadcast %cst_36 : f32 to vector<1x8x16xf32>
    %44 = arith.select %1, %43, %42 : vector<1x8x16xf32>
    %c9 = arith.constant 9 : index
    %c1_37 = arith.constant 1 : index
    %c0_38 = arith.constant 0 : index
    %45 = vector.load %arg10[%c9, %c1_37, %c0_38] : memref<10x10x16xf32, #tpu.memory_space<vmem>>, vector<1x8x16xf32>
    tpu.vector_store %arg10[%c9, %c1_37, %c0_38], %44 {strides = array<i32>} : memref<10x10x16xf32, #tpu.memory_space<vmem>>, vector<1x8x16xf32>,
    %cst_39 = arith.constant 0.000000e+00 : f32
    %46 = vector.broadcast %cst_39 : f32 to vector<10x10x16xf32>
    %c0_40 = arith.constant 0 : index
    %c0_41 = arith.constant 0 : index
    %c0_42 = arith.constant 0 : index
    %47 = vector.load %arg11[%c0_40, %c0_41, %c0_42] : memref<10x10x16xf32, #tpu.memory_space<vmem>>, vector<10x10x16xf32>
    tpu.vector_store %arg11[%c0_40, %c0_41, %c0_42], %46 {strides = array<i32>} : memref<10x10x16xf32, #tpu.memory_space<vmem>>, vector<10x10x16xf32>,
    %48 = vector.shape_cast %3 : vector<8x8x16xf32> to vector<64x16xf32>
    %49 = arith.truncf %48 : vector<64x16xf32> to vector<64x16xbf16>
    %cst_43 = arith.constant dense<0.000000e+00> : vector<64x16xf32>
    %50 = tpu.matmul %49, %13, %cst_43 {dimension_numbers = #tpu.dot_dimension_numbers<[1], [0], [0], [1], [0, 0, 1, 1], [], []>} : vector<64x16xbf16>, vector<16x16xbf16>, vector<64x16xf32> -> vector<64x16xf32>
    %51 = vector.shape_cast %50 : vector<64x16xf32> to vector<8x8x16xf32>
    %52 = vector.shape_cast %15 : vector<1x16xf32> to vector<1x1x16xf32>
    %53 = vector.broadcast %52 : vector<1x1x16xf32> to vector<8x8x16xf32>
    %54 = arith.addf %51, %53 : vector<8x8x16xf32>
    %c1_44 = arith.constant 1 : index
    %c1_45 = arith.constant 1 : index
    %c0_46 = arith.constant 0 : index
    %55 = vector.load %arg11[%c1_44, %c1_45, %c0_46] : memref<10x10x16xf32, #tpu.memory_space<vmem>>, vector<8x8x16xf32>
    tpu.vector_store %arg11[%c1_44, %c1_45, %c0_46], %54 {strides = array<i32>} : memref<10x10x16xf32, #tpu.memory_space<vmem>>, vector<8x8x16xf32>,
    %56 = vector.shape_cast %5 : vector<1x8x16xf32> to vector<8x16xf32>
    %57 = arith.truncf %56 : vector<8x16xf32> to vector<8x16xbf16>
    %cst_47 = arith.constant dense<0.000000e+00> : vector<8x16xf32>
    %58 = tpu.matmul %57, %13, %cst_47 {dimension_numbers = #tpu.dot_dimension_numbers<[1], [0], [0], [1], [0, 0, 1, 1], [], []>} : vector<8x16xbf16>, vector<16x16xbf16>, vector<8x16xf32> -> vector<8x16xf32>
    %59 = vector.shape_cast %58 : vector<8x16xf32> to vector<1x8x16xf32>
    %60 = vector.shape_cast %15 : vector<1x16xf32> to vector<1x1x16xf32>
    %61 = vector.broadcast %60 : vector<1x1x16xf32> to vector<1x8x16xf32>
    %62 = arith.addf %59, %61 : vector<1x8x16xf32>
    %cst_48 = arith.constant 0.000000e+00 : f32
    %63 = vector.broadcast %cst_48 : f32 to vector<1x8x16xf32>
    %64 = arith.select %0, %63, %62 : vector<1x8x16xf32>
    %c0_49 = arith.constant 0 : index
    %c1_50 = arith.constant 1 : index
    %c0_51 = arith.constant 0 : index
    %65 = vector.load %arg11[%c0_49, %c1_50, %c0_51] : memref<10x10x16xf32, #tpu.memory_space<vmem>>, vector<1x8x16xf32>
    tpu.vector_store %arg11[%c0_49, %c1_50, %c0_51], %64 {strides = array<i32>} : memref<10x10x16xf32, #tpu.memory_space<vmem>>, vector<1x8x16xf32>,
    %66 = vector.shape_cast %7 : vector<1x8x16xf32> to vector<8x16xf32>
    %67 = arith.truncf %66 : vector<8x16xf32> to vector<8x16xbf16>
    %cst_52 = arith.constant dense<0.000000e+00> : vector<8x16xf32>
    %68 = tpu.matmul %67, %13, %cst_52 {dimension_numbers = #tpu.dot_dimension_numbers<[1], [0], [0], [1], [0, 0, 1, 1], [], []>} : vector<8x16xbf16>, vector<16x16xbf16>, vector<8x16xf32> -> vector<8x16xf32>
    %69 = vector.shape_cast %68 : vector<8x16xf32> to vector<1x8x16xf32>
    %70 = vector.shape_cast %15 : vector<1x16xf32> to vector<1x1x16xf32>
    %71 = vector.broadcast %70 : vector<1x1x16xf32> to vector<1x8x16xf32>
    %72 = arith.addf %69, %71 : vector<1x8x16xf32>
    %cst_53 = arith.constant 0.000000e+00 : f32
    %73 = vector.broadcast %cst_53 : f32 to vector<1x8x16xf32>
    %74 = arith.select %1, %73, %72 : vector<1x8x16xf32>
    %c9_54 = arith.constant 9 : index
    %c1_55 = arith.constant 1 : index
    %c0_56 = arith.constant 0 : index
    %75 = vector.load %arg11[%c9_54, %c1_55, %c0_56] : memref<10x10x16xf32, #tpu.memory_space<vmem>>, vector<1x8x16xf32>
    tpu.vector_store %arg11[%c9_54, %c1_55, %c0_56], %74 {strides = array<i32>} : memref<10x10x16xf32, #tpu.memory_space<vmem>>, vector<1x8x16xf32>,
    %c0_57 = arith.constant 0 : index
    %c0_58 = arith.constant 0 : index
    %c0_59 = arith.constant 0 : index
    %c0_60 = arith.constant 0 : index
    %76 = vector.load %arg7[%c0_57, %c0_58, %c0_59, %c0_60] : memref<2x3x3x16xf32, #tpu.memory_space<vmem>>, vector<1x3x3x16xf32>
    %77 = vector.shape_cast %76 : vector<1x3x3x16xf32> to vector<3x3x16xf32>
    %c1_61 = arith.constant 1 : index
    %c0_62 = arith.constant 0 : index
    %c0_63 = arith.constant 0 : index
    %c0_64 = arith.constant 0 : index
    %78 = vector.load %arg7[%c1_61, %c0_62, %c0_63, %c0_64] : memref<2x3x3x16xf32, #tpu.memory_space<vmem>>, vector<1x3x3x16xf32>
    %79 = vector.shape_cast %78 : vector<1x3x3x16xf32> to vector<3x3x16xf32>
    %cst_65 = arith.constant 0.000000e+00 : f32
    %80 = vector.broadcast %cst_65 : f32 to vector<8x8x16xf32>
    %cst_66 = arith.constant 0.000000e+00 : f32
    %81 = vector.broadcast %cst_66 : f32 to vector<8x8x16xf32>
    %c0_67 = arith.constant 0 : index
    %c0_68 = arith.constant 0 : index
    %c0_69 = arith.constant 0 : index
    %82 = vector.load %arg10[%c0_67, %c0_68, %c0_69] : memref<10x10x16xf32, #tpu.memory_space<vmem>>, vector<8x8x16xf32>
    %83 = vector.extract_strided_slice %77 {offsets = [0, 0, 0], sizes = [1, 1, 16], strides = [1, 1, 1]} : vector<3x3x16xf32> to vector<1x1x16xf32>
    %84 = vector.shape_cast %83 : vector<1x1x16xf32> to vector<16xf32>
    %85 = vector.shape_cast %84 : vector<16xf32> to vector<1x1x16xf32>
    %86 = vector.broadcast %85 : vector<1x1x16xf32> to vector<8x8x16xf32>
    %87 = arith.mulf %82, %86 : vector<8x8x16xf32>
    %88 = arith.addf %80, %87 : vector<8x8x16xf32>
    %c0_70 = arith.constant 0 : index
    %c0_71 = arith.constant 0 : index
    %c0_72 = arith.constant 0 : index
    %89 = vector.load %arg11[%c0_70, %c0_71, %c0_72] : memref<10x10x16xf32, #tpu.memory_space<vmem>>, vector<8x8x16xf32>
    %90 = vector.extract_strided_slice %79 {offsets = [0, 0, 0], sizes = [1, 1, 16], strides = [1, 1, 1]} : vector<3x3x16xf32> to vector<1x1x16xf32>
    %91 = vector.shape_cast %90 : vector<1x1x16xf32> to vector<16xf32>
    %92 = vector.shape_cast %91 : vector<16xf32> to vector<1x1x16xf32>
    %93 = vector.broadcast %92 : vector<1x1x16xf32> to vector<8x8x16xf32>
    %94 = arith.mulf %89, %93 : vector<8x8x16xf32>
    %95 = arith.addf %81, %94 : vector<8x8x16xf32>
    %c0_73 = arith.constant 0 : index
    %c1_74 = arith.constant 1 : index
    %c0_75 = arith.constant 0 : index
    %96 = vector.load %arg10[%c0_73, %c1_74, %c0_75] : memref<10x10x16xf32, #tpu.memory_space<vmem>>, vector<8x8x16xf32>
    %97 = vector.extract_strided_slice %77 {offsets = [0, 1, 0], sizes = [1, 1, 16], strides = [1, 1, 1]} : vector<3x3x16xf32> to vector<1x1x16xf32>
    %98 = vector.shape_cast %97 : vector<1x1x16xf32> to vector<16xf32>
    %99 = vector.shape_cast %98 : vector<16xf32> to vector<1x1x16xf32>
    %100 = vector.broadcast %99 : vector<1x1x16xf32> to vector<8x8x16xf32>
    %101 = arith.mulf %96, %100 : vector<8x8x16xf32>
    %102 = arith.addf %88, %101 : vector<8x8x16xf32>
    %c0_76 = arith.constant 0 : index
    %c1_77 = arith.constant 1 : index
    %c0_78 = arith.constant 0 : index
    %103 = vector.load %arg11[%c0_76, %c1_77, %c0_78] : memref<10x10x16xf32, #tpu.memory_space<vmem>>, vector<8x8x16xf32>
    %104 = vector.extract_strided_slice %79 {offsets = [0, 1, 0], sizes = [1, 1, 16], strides = [1, 1, 1]} : vector<3x3x16xf32> to vector<1x1x16xf32>
    %105 = vector.shape_cast %104 : vector<1x1x16xf32> to vector<16xf32>
    %106 = vector.shape_cast %105 : vector<16xf32> to vector<1x1x16xf32>
    %107 = vector.broadcast %106 : vector<1x1x16xf32> to vector<8x8x16xf32>
    %108 = arith.mulf %103, %107 : vector<8x8x16xf32>
    %109 = arith.addf %95, %108 : vector<8x8x16xf32>
    %c0_79 = arith.constant 0 : index
    %c2 = arith.constant 2 : index
    %c0_80 = arith.constant 0 : index
    %110 = vector.load %arg10[%c0_79, %c2, %c0_80] : memref<10x10x16xf32, #tpu.memory_space<vmem>>, vector<8x8x16xf32>
    %111 = vector.extract_strided_slice %77 {offsets = [0, 2, 0], sizes = [1, 1, 16], strides = [1, 1, 1]} : vector<3x3x16xf32> to vector<1x1x16xf32>
    %112 = vector.shape_cast %111 : vector<1x1x16xf32> to vector<16xf32>
    %113 = vector.shape_cast %112 : vector<16xf32> to vector<1x1x16xf32>
    %114 = vector.broadcast %113 : vector<1x1x16xf32> to vector<8x8x16xf32>
    %115 = arith.mulf %110, %114 : vector<8x8x16xf32>
    %116 = arith.addf %102, %115 : vector<8x8x16xf32>
    %c0_81 = arith.constant 0 : index
    %c2_82 = arith.constant 2 : index
    %c0_83 = arith.constant 0 : index
    %117 = vector.load %arg11[%c0_81, %c2_82, %c0_83] : memref<10x10x16xf32, #tpu.memory_space<vmem>>, vector<8x8x16xf32>
    %118 = vector.extract_strided_slice %79 {offsets = [0, 2, 0], sizes = [1, 1, 16], strides = [1, 1, 1]} : vector<3x3x16xf32> to vector<1x1x16xf32>
    %119 = vector.shape_cast %118 : vector<1x1x16xf32> to vector<16xf32>
    %120 = vector.shape_cast %119 : vector<16xf32> to vector<1x1x16xf32>
    %121 = vector.broadcast %120 : vector<1x1x16xf32> to vector<8x8x16xf32>
    %122 = arith.mulf %117, %121 : vector<8x8x16xf32>
    %123 = arith.addf %109, %122 : vector<8x8x16xf32>
    %c1_84 = arith.constant 1 : index
    %c0_85 = arith.constant 0 : index
    %c0_86 = arith.constant 0 : index
    %124 = vector.load %arg10[%c1_84, %c0_85, %c0_86] : memref<10x10x16xf32, #tpu.memory_space<vmem>>, vector<8x8x16xf32>
    %125 = vector.extract_strided_slice %77 {offsets = [1, 0, 0], sizes = [1, 1, 16], strides = [1, 1, 1]} : vector<3x3x16xf32> to vector<1x1x16xf32>
    %126 = vector.shape_cast %125 : vector<1x1x16xf32> to vector<16xf32>
    %127 = vector.shape_cast %126 : vector<16xf32> to vector<1x1x16xf32>
    %128 = vector.broadcast %127 : vector<1x1x16xf32> to vector<8x8x16xf32>
    %129 = arith.mulf %124, %128 : vector<8x8x16xf32>
    %130 = arith.addf %116, %129 : vector<8x8x16xf32>
    %c1_87 = arith.constant 1 : index
    %c0_88 = arith.constant 0 : index
    %c0_89 = arith.constant 0 : index
    %131 = vector.load %arg11[%c1_87, %c0_88, %c0_89] : memref<10x10x16xf32, #tpu.memory_space<vmem>>, vector<8x8x16xf32>
    %132 = vector.extract_strided_slice %79 {offsets = [1, 0, 0], sizes = [1, 1, 16], strides = [1, 1, 1]} : vector<3x3x16xf32> to vector<1x1x16xf32>
    %133 = vector.shape_cast %132 : vector<1x1x16xf32> to vector<16xf32>
    %134 = vector.shape_cast %133 : vector<16xf32> to vector<1x1x16xf32>
    %135 = vector.broadcast %134 : vector<1x1x16xf32> to vector<8x8x16xf32>
    %136 = arith.mulf %131, %135 : vector<8x8x16xf32>
    %137 = arith.addf %123, %136 : vector<8x8x16xf32>
    %c1_90 = arith.constant 1 : index
    %c1_91 = arith.constant 1 : index
    %c0_92 = arith.constant 0 : index
    %138 = vector.load %arg10[%c1_90, %c1_91, %c0_92] : memref<10x10x16xf32, #tpu.memory_space<vmem>>, vector<8x8x16xf32>
    %139 = vector.extract_strided_slice %77 {offsets = [1, 1, 0], sizes = [1, 1, 16], strides = [1, 1, 1]} : vector<3x3x16xf32> to vector<1x1x16xf32>
    %140 = vector.shape_cast %139 : vector<1x1x16xf32> to vector<16xf32>
    %141 = vector.shape_cast %140 : vector<16xf32> to vector<1x1x16xf32>
    %142 = vector.broadcast %141 : vector<1x1x16xf32> to vector<8x8x16xf32>
    %143 = arith.mulf %138, %142 : vector<8x8x16xf32>
    %144 = arith.addf %130, %143 : vector<8x8x16xf32>
    %c1_93 = arith.constant 1 : index
    %c1_94 = arith.constant 1 : index
    %c0_95 = arith.constant 0 : index
    %145 = vector.load %arg11[%c1_93, %c1_94, %c0_95] : memref<10x10x16xf32, #tpu.memory_space<vmem>>, vector<8x8x16xf32>
    %146 = vector.extract_strided_slice %79 {offsets = [1, 1, 0], sizes = [1, 1, 16], strides = [1, 1, 1]} : vector<3x3x16xf32> to vector<1x1x16xf32>
    %147 = vector.shape_cast %146 : vector<1x1x16xf32> to vector<16xf32>
    %148 = vector.shape_cast %147 : vector<16xf32> to vector<1x1x16xf32>
    %149 = vector.broadcast %148 : vector<1x1x16xf32> to vector<8x8x16xf32>
    %150 = arith.mulf %145, %149 : vector<8x8x16xf32>
    %151 = arith.addf %137, %150 : vector<8x8x16xf32>
    %c1_96 = arith.constant 1 : index
    %c2_97 = arith.constant 2 : index
    %c0_98 = arith.constant 0 : index
    %152 = vector.load %arg10[%c1_96, %c2_97, %c0_98] : memref<10x10x16xf32, #tpu.memory_space<vmem>>, vector<8x8x16xf32>
    %153 = vector.extract_strided_slice %77 {offsets = [1, 2, 0], sizes = [1, 1, 16], strides = [1, 1, 1]} : vector<3x3x16xf32> to vector<1x1x16xf32>
    %154 = vector.shape_cast %153 : vector<1x1x16xf32> to vector<16xf32>
    %155 = vector.shape_cast %154 : vector<16xf32> to vector<1x1x16xf32>
    %156 = vector.broadcast %155 : vector<1x1x16xf32> to vector<8x8x16xf32>
    %157 = arith.mulf %152, %156 : vector<8x8x16xf32>
    %158 = arith.addf %144, %157 : vector<8x8x16xf32>
    %c1_99 = arith.constant 1 : index
    %c2_100 = arith.constant 2 : index
    %c0_101 = arith.constant 0 : index
    %159 = vector.load %arg11[%c1_99, %c2_100, %c0_101] : memref<10x10x16xf32, #tpu.memory_space<vmem>>, vector<8x8x16xf32>
    %160 = vector.extract_strided_slice %79 {offsets = [1, 2, 0], sizes = [1, 1, 16], strides = [1, 1, 1]} : vector<3x3x16xf32> to vector<1x1x16xf32>
    %161 = vector.shape_cast %160 : vector<1x1x16xf32> to vector<16xf32>
    %162 = vector.shape_cast %161 : vector<16xf32> to vector<1x1x16xf32>
    %163 = vector.broadcast %162 : vector<1x1x16xf32> to vector<8x8x16xf32>
    %164 = arith.mulf %159, %163 : vector<8x8x16xf32>
    %165 = arith.addf %151, %164 : vector<8x8x16xf32>
    %c2_102 = arith.constant 2 : index
    %c0_103 = arith.constant 0 : index
    %c0_104 = arith.constant 0 : index
    %166 = vector.load %arg10[%c2_102, %c0_103, %c0_104] : memref<10x10x16xf32, #tpu.memory_space<vmem>>, vector<8x8x16xf32>
    %167 = vector.extract_strided_slice %77 {offsets = [2, 0, 0], sizes = [1, 1, 16], strides = [1, 1, 1]} : vector<3x3x16xf32> to vector<1x1x16xf32>
    %168 = vector.shape_cast %167 : vector<1x1x16xf32> to vector<16xf32>
    %169 = vector.shape_cast %168 : vector<16xf32> to vector<1x1x16xf32>
    %170 = vector.broadcast %169 : vector<1x1x16xf32> to vector<8x8x16xf32>
    %171 = arith.mulf %166, %170 : vector<8x8x16xf32>
    %172 = arith.addf %158, %171 : vector<8x8x16xf32>
    %c2_105 = arith.constant 2 : index
    %c0_106 = arith.constant 0 : index
    %c0_107 = arith.constant 0 : index
    %173 = vector.load %arg11[%c2_105, %c0_106, %c0_107] : memref<10x10x16xf32, #tpu.memory_space<vmem>>, vector<8x8x16xf32>
    %174 = vector.extract_strided_slice %79 {offsets = [2, 0, 0], sizes = [1, 1, 16], strides = [1, 1, 1]} : vector<3x3x16xf32> to vector<1x1x16xf32>
    %175 = vector.shape_cast %174 : vector<1x1x16xf32> to vector<16xf32>
    %176 = vector.shape_cast %175 : vector<16xf32> to vector<1x1x16xf32>
    %177 = vector.broadcast %176 : vector<1x1x16xf32> to vector<8x8x16xf32>
    %178 = arith.mulf %173, %177 : vector<8x8x16xf32>
    %179 = arith.addf %165, %178 : vector<8x8x16xf32>
    %c2_108 = arith.constant 2 : index
    %c1_109 = arith.constant 1 : index
    %c0_110 = arith.constant 0 : index
    %180 = vector.load %arg10[%c2_108, %c1_109, %c0_110] : memref<10x10x16xf32, #tpu.memory_space<vmem>>, vector<8x8x16xf32>
    %181 = vector.extract_strided_slice %77 {offsets = [2, 1, 0], sizes = [1, 1, 16], strides = [1, 1, 1]} : vector<3x3x16xf32> to vector<1x1x16xf32>
    %182 = vector.shape_cast %181 : vector<1x1x16xf32> to vector<16xf32>
    %183 = vector.shape_cast %182 : vector<16xf32> to vector<1x1x16xf32>
    %184 = vector.broadcast %183 : vector<1x1x16xf32> to vector<8x8x16xf32>
    %185 = arith.mulf %180, %184 : vector<8x8x16xf32>
    %186 = arith.addf %172, %185 : vector<8x8x16xf32>
    %c2_111 = arith.constant 2 : index
    %c1_112 = arith.constant 1 : index
    %c0_113 = arith.constant 0 : index
    %187 = vector.load %arg11[%c2_111, %c1_112, %c0_113] : memref<10x10x16xf32, #tpu.memory_space<vmem>>, vector<8x8x16xf32>
    %188 = vector.extract_strided_slice %79 {offsets = [2, 1, 0], sizes = [1, 1, 16], strides = [1, 1, 1]} : vector<3x3x16xf32> to vector<1x1x16xf32>
    %189 = vector.shape_cast %188 : vector<1x1x16xf32> to vector<16xf32>
    %190 = vector.shape_cast %189 : vector<16xf32> to vector<1x1x16xf32>
    %191 = vector.broadcast %190 : vector<1x1x16xf32> to vector<8x8x16xf32>
    %192 = arith.mulf %187, %191 : vector<8x8x16xf32>
    %193 = arith.addf %179, %192 : vector<8x8x16xf32>
    %c2_114 = arith.constant 2 : index
    %c2_115 = arith.constant 2 : index
    %c0_116 = arith.constant 0 : index
    %194 = vector.load %arg10[%c2_114, %c2_115, %c0_116] : memref<10x10x16xf32, #tpu.memory_space<vmem>>, vector<8x8x16xf32>
    %195 = vector.extract_strided_slice %77 {offsets = [2, 2, 0], sizes = [1, 1, 16], strides = [1, 1, 1]} : vector<3x3x16xf32> to vector<1x1x16xf32>
    %196 = vector.shape_cast %195 : vector<1x1x16xf32> to vector<16xf32>
    %197 = vector.shape_cast %196 : vector<16xf32> to vector<1x1x16xf32>
    %198 = vector.broadcast %197 : vector<1x1x16xf32> to vector<8x8x16xf32>
    %199 = arith.mulf %194, %198 : vector<8x8x16xf32>
    %200 = arith.addf %186, %199 : vector<8x8x16xf32>
    %c2_117 = arith.constant 2 : index
    %c2_118 = arith.constant 2 : index
    %c0_119 = arith.constant 0 : index
    %201 = vector.load %arg11[%c2_117, %c2_118, %c0_119] : memref<10x10x16xf32, #tpu.memory_space<vmem>>, vector<8x8x16xf32>
    %202 = vector.extract_strided_slice %79 {offsets = [2, 2, 0], sizes = [1, 1, 16], strides = [1, 1, 1]} : vector<3x3x16xf32> to vector<1x1x16xf32>
    %203 = vector.shape_cast %202 : vector<1x1x16xf32> to vector<16xf32>
    %204 = vector.shape_cast %203 : vector<16xf32> to vector<1x1x16xf32>
    %205 = vector.broadcast %204 : vector<1x1x16xf32> to vector<8x8x16xf32>
    %206 = arith.mulf %201, %205 : vector<8x8x16xf32>
    %207 = arith.addf %193, %206 : vector<8x8x16xf32>
    %c0_120 = arith.constant 0 : index
    %c0_121 = arith.constant 0 : index
    %c0_122 = arith.constant 0 : index
    %208 = vector.load %arg8[%c0_120, %c0_121, %c0_122] : memref<2x1x16xf32, #tpu.memory_space<vmem>>, vector<1x1x16xf32>
    %209 = vector.shape_cast %208 : vector<1x1x16xf32> to vector<1x16xf32>
    %210 = vector.shape_cast %209 : vector<1x16xf32> to vector<1x1x16xf32>
    %211 = vector.broadcast %210 : vector<1x1x16xf32> to vector<8x8x16xf32>
    %212 = arith.addf %200, %211 : vector<8x8x16xf32>
    %c1_123 = arith.constant 1 : index
    %c0_124 = arith.constant 0 : index
    %c0_125 = arith.constant 0 : index
    %213 = vector.load %arg8[%c1_123, %c0_124, %c0_125] : memref<2x1x16xf32, #tpu.memory_space<vmem>>, vector<1x1x16xf32>
    %214 = vector.shape_cast %213 : vector<1x1x16xf32> to vector<1x16xf32>
    %215 = vector.shape_cast %214 : vector<1x16xf32> to vector<1x1x16xf32>
    %216 = vector.broadcast %215 : vector<1x1x16xf32> to vector<8x8x16xf32>
    %217 = arith.addf %207, %216 : vector<8x8x16xf32>
    %cst_126 = arith.constant 5.000000e-01 : f32
    %218 = vector.broadcast %cst_126 : f32 to vector<8x8x16xf32>
    %219 = arith.mulf %218, %212 : vector<8x8x16xf32>
    %cst_127 = arith.constant 0.707106769 : f32
    %220 = vector.broadcast %cst_127 : f32 to vector<8x8x16xf32>
    %221 = arith.mulf %212, %220 : vector<8x8x16xf32>
    %222 = math.absf %221 : vector<8x8x16xf32>
    %cst_128 = arith.constant 0.327591091 : f32
    %223 = vector.broadcast %cst_128 : f32 to vector<8x8x16xf32>
    %224 = arith.mulf %223, %222 : vector<8x8x16xf32>
    %cst_129 = arith.constant 1.000000e+00 : f32
    %225 = vector.broadcast %cst_129 : f32 to vector<8x8x16xf32>
    %226 = arith.addf %225, %224 : vector<8x8x16xf32>
    %cst_130 = arith.constant 1.000000e+00 : f32
    %227 = vector.broadcast %cst_130 : f32 to vector<8x8x16xf32>
    %228 = arith.divf %227, %226 : vector<8x8x16xf32>
    %cst_131 = arith.constant 1.06140542 : f32
    %229 = vector.broadcast %cst_131 : f32 to vector<8x8x16xf32>
    %230 = arith.mulf %229, %228 : vector<8x8x16xf32>
    %cst_132 = arith.constant -1.45315206 : f32
    %231 = vector.broadcast %cst_132 : f32 to vector<8x8x16xf32>
    %232 = arith.addf %230, %231 : vector<8x8x16xf32>
    %233 = arith.mulf %232, %228 : vector<8x8x16xf32>
    %cst_133 = arith.constant 1.42141378 : f32
    %234 = vector.broadcast %cst_133 : f32 to vector<8x8x16xf32>
    %235 = arith.addf %233, %234 : vector<8x8x16xf32>
    %236 = arith.mulf %235, %228 : vector<8x8x16xf32>
    %cst_134 = arith.constant -0.284496725 : f32
    %237 = vector.broadcast %cst_134 : f32 to vector<8x8x16xf32>
    %238 = arith.addf %236, %237 : vector<8x8x16xf32>
    %239 = arith.mulf %238, %228 : vector<8x8x16xf32>
    %cst_135 = arith.constant 0.254829586 : f32
    %240 = vector.broadcast %cst_135 : f32 to vector<8x8x16xf32>
    %241 = arith.addf %239, %240 : vector<8x8x16xf32>
    %242 = arith.mulf %241, %228 : vector<8x8x16xf32>
    %cst_136 = arith.constant 0.000000e+00 : f32
    %243 = vector.broadcast %cst_136 : f32 to vector<8x8x16xf32>
    %244 = arith.subf %243, %222 : vector<8x8x16xf32>
    %245 = arith.mulf %244, %222 : vector<8x8x16xf32>
    %246 = math.exp %245 : vector<8x8x16xf32>
    %247 = arith.mulf %242, %246 : vector<8x8x16xf32>
    %cst_137 = arith.constant 1.000000e+00 : f32
    %248 = vector.broadcast %cst_137 : f32 to vector<8x8x16xf32>
    %249 = arith.subf %248, %247 : vector<8x8x16xf32>
    %cst_138 = arith.constant 0.000000e+00 : f32
    %250 = vector.broadcast %cst_138 : f32 to vector<8x8x16xf32>
    %251 = arith.cmpf olt, %221, %250 : vector<8x8x16xf32>
    %cst_139 = arith.constant 0.000000e+00 : f32
    %252 = vector.broadcast %cst_139 : f32 to vector<8x8x16xf32>
    %253 = arith.subf %252, %249 : vector<8x8x16xf32>
    %254 = arith.select %251, %253, %249 : vector<8x8x16xi1>, vector<8x8x16xf32>
    %cst_140 = arith.constant 1.000000e+00 : f32
    %255 = vector.broadcast %cst_140 : f32 to vector<8x8x16xf32>
    %256 = arith.addf %255, %254 : vector<8x8x16xf32>
    %257 = arith.mulf %219, %256 : vector<8x8x16xf32>
    %258 = arith.mulf %257, %217 : vector<8x8x16xf32>
    %c0_141 = arith.constant 0 : index
    %c0_142 = arith.constant 0 : index
    %c0_143 = arith.constant 0 : index
    %c0_144 = arith.constant 0 : index
    %259 = vector.load %arg9[%c0_141, %c0_142, %c0_143, %c0_144] : memref<1x8x8x16xf32, #tpu.memory_space<vmem>>, vector<1x8x8x16xf32>
    %260 = vector.shape_cast %259 : vector<1x8x8x16xf32> to vector<8x8x16xf32>
    %261 = vector.shape_cast %258 : vector<8x8x16xf32> to vector<1x8x8x16xf32>
    tpu.vector_store %arg9[%c0_141, %c0_142, %c0_143, %c0_144], %261 {strides = array<i32>} : memref<1x8x8x16xf32, #tpu.memory_space<vmem>>, vector<1x8x8x16xf32>,
    return
  }
  func.func @transform_0(%arg0: i32, %arg1: i32) -> (i32, i32, i32, i32) {
    %c0_i32 = arith.constant 0 : i32
    %c0_i32_0 = arith.constant 0 : i32
    %c0_i32_1 = arith.constant 0 : i32
    return %arg0, %arg1, %c0_i32, %c0_i32_0 : i32, i32, i32, i32
  }
  func.func @transform_1(%arg0: i32, %arg1: i32) -> (i32, i32, i32, i32) {
    %c8_i32 = arith.constant 8 : i32
    %0 = arith.muli %arg1, %c8_i32 : i32
    %c1_i32 = arith.constant 1 : i32
    %1 = arith.subi %0, %c1_i32 : i32
    %c0_i32 = arith.constant 0 : i32
    %2 = arith.maxsi %1, %c0_i32 : i32
    %c0_i32_0 = arith.constant 0 : i32
    %c0_i32_1 = arith.constant 0 : i32
    %c0_i32_2 = arith.constant 0 : i32
    return %arg0, %2, %c0_i32_0, %c0_i32_1 : i32, i32, i32, i32
  }
  func.func @transform_2(%arg0: i32, %arg1: i32) -> (i32, i32, i32, i32) {
    %c8_i32 = arith.constant 8 : i32
    %0 = arith.muli %arg1, %c8_i32 : i32
    %c8_i32_0 = arith.constant 8 : i32
    %1 = arith.addi %0, %c8_i32_0 : i32
    %c7_i32 = arith.constant 7 : i32
    %2 = arith.minsi %1, %c7_i32 : i32
    %c0_i32 = arith.constant 0 : i32
    %c0_i32_1 = arith.constant 0 : i32
    %c0_i32_2 = arith.constant 0 : i32
    return %arg0, %2, %c0_i32, %c0_i32_1 : i32, i32, i32, i32
  }
  func.func @transform_3(%arg0: i32, %arg1: i32) -> (i32, i32, i32) {
    %c0_i32 = arith.constant 0 : i32
    %c0_i32_0 = arith.constant 0 : i32
    %c0_i32_1 = arith.constant 0 : i32
    %c0_i32_2 = arith.constant 0 : i32
    return %c0_i32, %c0_i32_0, %c0_i32_1 : i32, i32, i32
  }
  func.func @transform_4(%arg0: i32, %arg1: i32) -> (i32, i32, i32) {
    %c0_i32 = arith.constant 0 : i32
    %c0_i32_0 = arith.constant 0 : i32
    %c0_i32_1 = arith.constant 0 : i32
    %c0_i32_2 = arith.constant 0 : i32
    return %c0_i32, %c0_i32_0, %c0_i32_1 : i32, i32, i32
  }
  func.func @transform_5(%arg0: i32, %arg1: i32) -> (i32, i32, i32, i32) {
    %c0_i32 = arith.constant 0 : i32
    %c0_i32_0 = arith.constant 0 : i32
    %c0_i32_1 = arith.constant 0 : i32
    %c0_i32_2 = arith.constant 0 : i32
    %c0_i32_3 = arith.constant 0 : i32
    return %c0_i32, %c0_i32_0, %c0_i32_1, %c0_i32_2 : i32, i32, i32, i32
  }
  func.func @transform_6(%arg0: i32, %arg1: i32) -> (i32, i32, i32) {
    %c0_i32 = arith.constant 0 : i32
    %c0_i32_0 = arith.constant 0 : i32
    %c0_i32_1 = arith.constant 0 : i32
    %c0_i32_2 = arith.constant 0 : i32
    return %c0_i32, %c0_i32_0, %c0_i32_1 : i32, i32, i32
  }
  func.func @transform_7(%arg0: i32, %arg1: i32) -> (i32, i32, i32, i32) {
    %c0_i32 = arith.constant 0 : i32
    %c0_i32_0 = arith.constant 0 : i32
    %c0_i32_1 = arith.constant 0 : i32
    return %arg0, %arg1, %c0_i32, %c0_i32_0 : i32, i32, i32, i32
  }
}

module attributes {stable_mosaic.version = 11 : i64} {
  func.func @kernel(%arg0: i32, %arg1: i32, %arg2: memref<1x8x8x16xf32, #tpu.memory_space<vmem>>, %arg3: memref<1x1x8x16xf32, #tpu.memory_space<vmem>>, %arg4: memref<1x1x8x16xf32, #tpu.memory_space<vmem>>, %arg5: memref<2x16x16xbf16, #tpu.memory_space<vmem>>, %arg6: memref<2x1x16xf32, #tpu.memory_space<vmem>>, %arg7: memref<2x3x3x16xf32, #tpu.memory_space<vmem>>, %arg8: memref<2x1x16xf32, #tpu.memory_space<vmem>>, %arg9: memref<1x8x8x16xf32, #tpu.memory_space<vmem>>, %arg10: memref<1x8x8x16xf32, #tpu.memory_space<vmem>>, %arg11: memref<10x10x16xf32, #tpu.memory_space<vmem>>, %arg12: memref<10x10x16xf32, #tpu.memory_space<vmem>>) attributes {dimension_semantics = [#tpu.dimension_semantics<parallel>, #tpu.dimension_semantics<parallel>], iteration_bounds = array<i64: 2, 1>, scalar_prefetch = 0 : i64, scratch_operands = 2 : i64, tpu.core_type = #tpu.core_type<tc>, window_params = [{transform_indices = @transform_0, window_bounds = array<i64: 1, 8, 8, 16>}, {transform_indices = @transform_1, window_bounds = array<i64: 1, 1, 8, 16>}, {transform_indices = @transform_2, window_bounds = array<i64: 1, 1, 8, 16>}, {pipeline_mode = #tpu.pipeline_mode<synchronous>, transform_indices = @transform_3, window_bounds = array<i64: 2, 16, 16>}, {pipeline_mode = #tpu.pipeline_mode<synchronous>, transform_indices = @transform_4, window_bounds = array<i64: 2, 1, 16>}, {pipeline_mode = #tpu.pipeline_mode<synchronous>, transform_indices = @transform_5, window_bounds = array<i64: 2, 3, 3, 16>}, {pipeline_mode = #tpu.pipeline_mode<synchronous>, transform_indices = @transform_6, window_bounds = array<i64: 2, 1, 16>}, {transform_indices = @transform_7, window_bounds = array<i64: 1, 8, 8, 16>}, {transform_indices = @transform_8, window_bounds = array<i64: 1, 8, 8, 16>}]} {
    %c0_i32 = arith.constant 0 : i32
    %0 = arith.cmpi eq, %arg1, %c0_i32 : i32
    %c0_i32_0 = arith.constant 0 : i32
    %1 = arith.cmpi eq, %arg1, %c0_i32_0 : i32
    %c0 = arith.constant 0 : index
    %c0_1 = arith.constant 0 : index
    %c0_2 = arith.constant 0 : index
    %c0_3 = arith.constant 0 : index
    %2 = vector.load %arg2[%c0, %c0_1, %c0_2, %c0_3] : memref<1x8x8x16xf32, #tpu.memory_space<vmem>>, vector<1x8x8x16xf32>
    %3 = vector.shape_cast %2 : vector<1x8x8x16xf32> to vector<8x8x16xf32>
    %c0_4 = arith.constant 0 : index
    %c0_5 = arith.constant 0 : index
    %c0_6 = arith.constant 0 : index
    %c0_7 = arith.constant 0 : index
    %4 = vector.load %arg3[%c0_4, %c0_5, %c0_6, %c0_7] : memref<1x1x8x16xf32, #tpu.memory_space<vmem>>, vector<1x1x8x16xf32>
    %5 = vector.shape_cast %4 : vector<1x1x8x16xf32> to vector<1x8x16xf32>
    %c0_8 = arith.constant 0 : index
    %c0_9 = arith.constant 0 : index
    %c0_10 = arith.constant 0 : index
    %c0_11 = arith.constant 0 : index
    %6 = vector.load %arg4[%c0_8, %c0_9, %c0_10, %c0_11] : memref<1x1x8x16xf32, #tpu.memory_space<vmem>>, vector<1x1x8x16xf32>
    %7 = vector.shape_cast %6 : vector<1x1x8x16xf32> to vector<1x8x16xf32>
    %c0_12 = arith.constant 0 : index
    %c0_13 = arith.constant 0 : index
    %c0_14 = arith.constant 0 : index
    %8 = vector.load %arg5[%c0_12, %c0_13, %c0_14] : memref<2x16x16xbf16, #tpu.memory_space<vmem>>, vector<1x16x16xbf16>
    %9 = vector.shape_cast %8 : vector<1x16x16xbf16> to vector<16x16xbf16>
    %c0_15 = arith.constant 0 : index
    %c0_16 = arith.constant 0 : index
    %c0_17 = arith.constant 0 : index
    %10 = vector.load %arg6[%c0_15, %c0_16, %c0_17] : memref<2x1x16xf32, #tpu.memory_space<vmem>>, vector<1x1x16xf32>
    %11 = vector.shape_cast %10 : vector<1x1x16xf32> to vector<1x16xf32>
    %c1 = arith.constant 1 : index
    %c0_18 = arith.constant 0 : index
    %c0_19 = arith.constant 0 : index
    %12 = vector.load %arg5[%c1, %c0_18, %c0_19] : memref<2x16x16xbf16, #tpu.memory_space<vmem>>, vector<1x16x16xbf16>
    %13 = vector.shape_cast %12 : vector<1x16x16xbf16> to vector<16x16xbf16>
    %c1_20 = arith.constant 1 : index
    %c0_21 = arith.constant 0 : index
    %c0_22 = arith.constant 0 : index
    %14 = vector.load %arg6[%c1_20, %c0_21, %c0_22] : memref<2x1x16xf32, #tpu.memory_space<vmem>>, vector<1x1x16xf32>
    %15 = vector.shape_cast %14 : vector<1x1x16xf32> to vector<1x16xf32>
    %cst = arith.constant 0.000000e+00 : f32
    %16 = vector.broadcast %cst : f32 to vector<10x10x16xf32>
    %c0_23 = arith.constant 0 : index
    %c0_24 = arith.constant 0 : index
    %c0_25 = arith.constant 0 : index
    %17 = vector.load %arg11[%c0_23, %c0_24, %c0_25] : memref<10x10x16xf32, #tpu.memory_space<vmem>>, vector<10x10x16xf32>
    tpu.vector_store %arg11[%c0_23, %c0_24, %c0_25], %16 {strides = array<i32>} : memref<10x10x16xf32, #tpu.memory_space<vmem>>, vector<10x10x16xf32>,
    %18 = vector.shape_cast %3 : vector<8x8x16xf32> to vector<64x16xf32>
    %19 = arith.truncf %18 : vector<64x16xf32> to vector<64x16xbf16>
    %cst_26 = arith.constant dense<0.000000e+00> : vector<64x16xf32>
    %20 = tpu.matmul %19, %9, %cst_26 {dimension_numbers = #tpu.dot_dimension_numbers<[1], [0], [0], [1], [0, 0, 1, 1], [], []>} : vector<64x16xbf16>, vector<16x16xbf16>, vector<64x16xf32> -> vector<64x16xf32>
    %21 = vector.shape_cast %20 : vector<64x16xf32> to vector<8x8x16xf32>
    %22 = vector.shape_cast %11 : vector<1x16xf32> to vector<1x1x16xf32>
    %23 = vector.broadcast %22 : vector<1x1x16xf32> to vector<8x8x16xf32>
    %24 = arith.addf %21, %23 : vector<8x8x16xf32>
    %c1_27 = arith.constant 1 : index
    %c1_28 = arith.constant 1 : index
    %c0_29 = arith.constant 0 : index
    %25 = vector.load %arg11[%c1_27, %c1_28, %c0_29] : memref<10x10x16xf32, #tpu.memory_space<vmem>>, vector<8x8x16xf32>
    tpu.vector_store %arg11[%c1_27, %c1_28, %c0_29], %24 {strides = array<i32>} : memref<10x10x16xf32, #tpu.memory_space<vmem>>, vector<8x8x16xf32>,
    %26 = vector.shape_cast %5 : vector<1x8x16xf32> to vector<8x16xf32>
    %27 = arith.truncf %26 : vector<8x16xf32> to vector<8x16xbf16>
    %cst_30 = arith.constant dense<0.000000e+00> : vector<8x16xf32>
    %28 = tpu.matmul %27, %9, %cst_30 {dimension_numbers = #tpu.dot_dimension_numbers<[1], [0], [0], [1], [0, 0, 1, 1], [], []>} : vector<8x16xbf16>, vector<16x16xbf16>, vector<8x16xf32> -> vector<8x16xf32>
    %29 = vector.shape_cast %28 : vector<8x16xf32> to vector<1x8x16xf32>
    %30 = vector.shape_cast %11 : vector<1x16xf32> to vector<1x1x16xf32>
    %31 = vector.broadcast %30 : vector<1x1x16xf32> to vector<1x8x16xf32>
    %32 = arith.addf %29, %31 : vector<1x8x16xf32>
    %cst_31 = arith.constant 0.000000e+00 : f32
    %33 = vector.broadcast %cst_31 : f32 to vector<1x8x16xf32>
    %34 = arith.select %0, %33, %32 : vector<1x8x16xf32>
    %c0_32 = arith.constant 0 : index
    %c1_33 = arith.constant 1 : index
    %c0_34 = arith.constant 0 : index
    %35 = vector.load %arg11[%c0_32, %c1_33, %c0_34] : memref<10x10x16xf32, #tpu.memory_space<vmem>>, vector<1x8x16xf32>
    tpu.vector_store %arg11[%c0_32, %c1_33, %c0_34], %34 {strides = array<i32>} : memref<10x10x16xf32, #tpu.memory_space<vmem>>, vector<1x8x16xf32>,
    %36 = vector.shape_cast %7 : vector<1x8x16xf32> to vector<8x16xf32>
    %37 = arith.truncf %36 : vector<8x16xf32> to vector<8x16xbf16>
    %cst_35 = arith.constant dense<0.000000e+00> : vector<8x16xf32>
    %38 = tpu.matmul %37, %9, %cst_35 {dimension_numbers = #tpu.dot_dimension_numbers<[1], [0], [0], [1], [0, 0, 1, 1], [], []>} : vector<8x16xbf16>, vector<16x16xbf16>, vector<8x16xf32> -> vector<8x16xf32>
    %39 = vector.shape_cast %38 : vector<8x16xf32> to vector<1x8x16xf32>
    %40 = vector.shape_cast %11 : vector<1x16xf32> to vector<1x1x16xf32>
    %41 = vector.broadcast %40 : vector<1x1x16xf32> to vector<1x8x16xf32>
    %42 = arith.addf %39, %41 : vector<1x8x16xf32>
    %cst_36 = arith.constant 0.000000e+00 : f32
    %43 = vector.broadcast %cst_36 : f32 to vector<1x8x16xf32>
    %44 = arith.select %1, %43, %42 : vector<1x8x16xf32>
    %c9 = arith.constant 9 : index
    %c1_37 = arith.constant 1 : index
    %c0_38 = arith.constant 0 : index
    %45 = vector.load %arg11[%c9, %c1_37, %c0_38] : memref<10x10x16xf32, #tpu.memory_space<vmem>>, vector<1x8x16xf32>
    tpu.vector_store %arg11[%c9, %c1_37, %c0_38], %44 {strides = array<i32>} : memref<10x10x16xf32, #tpu.memory_space<vmem>>, vector<1x8x16xf32>,
    %cst_39 = arith.constant 0.000000e+00 : f32
    %46 = vector.broadcast %cst_39 : f32 to vector<10x10x16xf32>
    %c0_40 = arith.constant 0 : index
    %c0_41 = arith.constant 0 : index
    %c0_42 = arith.constant 0 : index
    %47 = vector.load %arg12[%c0_40, %c0_41, %c0_42] : memref<10x10x16xf32, #tpu.memory_space<vmem>>, vector<10x10x16xf32>
    tpu.vector_store %arg12[%c0_40, %c0_41, %c0_42], %46 {strides = array<i32>} : memref<10x10x16xf32, #tpu.memory_space<vmem>>, vector<10x10x16xf32>,
    %48 = vector.shape_cast %3 : vector<8x8x16xf32> to vector<64x16xf32>
    %49 = arith.truncf %48 : vector<64x16xf32> to vector<64x16xbf16>
    %cst_43 = arith.constant dense<0.000000e+00> : vector<64x16xf32>
    %50 = tpu.matmul %49, %13, %cst_43 {dimension_numbers = #tpu.dot_dimension_numbers<[1], [0], [0], [1], [0, 0, 1, 1], [], []>} : vector<64x16xbf16>, vector<16x16xbf16>, vector<64x16xf32> -> vector<64x16xf32>
    %51 = vector.shape_cast %50 : vector<64x16xf32> to vector<8x8x16xf32>
    %52 = vector.shape_cast %15 : vector<1x16xf32> to vector<1x1x16xf32>
    %53 = vector.broadcast %52 : vector<1x1x16xf32> to vector<8x8x16xf32>
    %54 = arith.addf %51, %53 : vector<8x8x16xf32>
    %c1_44 = arith.constant 1 : index
    %c1_45 = arith.constant 1 : index
    %c0_46 = arith.constant 0 : index
    %55 = vector.load %arg12[%c1_44, %c1_45, %c0_46] : memref<10x10x16xf32, #tpu.memory_space<vmem>>, vector<8x8x16xf32>
    tpu.vector_store %arg12[%c1_44, %c1_45, %c0_46], %54 {strides = array<i32>} : memref<10x10x16xf32, #tpu.memory_space<vmem>>, vector<8x8x16xf32>,
    %56 = vector.shape_cast %5 : vector<1x8x16xf32> to vector<8x16xf32>
    %57 = arith.truncf %56 : vector<8x16xf32> to vector<8x16xbf16>
    %cst_47 = arith.constant dense<0.000000e+00> : vector<8x16xf32>
    %58 = tpu.matmul %57, %13, %cst_47 {dimension_numbers = #tpu.dot_dimension_numbers<[1], [0], [0], [1], [0, 0, 1, 1], [], []>} : vector<8x16xbf16>, vector<16x16xbf16>, vector<8x16xf32> -> vector<8x16xf32>
    %59 = vector.shape_cast %58 : vector<8x16xf32> to vector<1x8x16xf32>
    %60 = vector.shape_cast %15 : vector<1x16xf32> to vector<1x1x16xf32>
    %61 = vector.broadcast %60 : vector<1x1x16xf32> to vector<1x8x16xf32>
    %62 = arith.addf %59, %61 : vector<1x8x16xf32>
    %cst_48 = arith.constant 0.000000e+00 : f32
    %63 = vector.broadcast %cst_48 : f32 to vector<1x8x16xf32>
    %64 = arith.select %0, %63, %62 : vector<1x8x16xf32>
    %c0_49 = arith.constant 0 : index
    %c1_50 = arith.constant 1 : index
    %c0_51 = arith.constant 0 : index
    %65 = vector.load %arg12[%c0_49, %c1_50, %c0_51] : memref<10x10x16xf32, #tpu.memory_space<vmem>>, vector<1x8x16xf32>
    tpu.vector_store %arg12[%c0_49, %c1_50, %c0_51], %64 {strides = array<i32>} : memref<10x10x16xf32, #tpu.memory_space<vmem>>, vector<1x8x16xf32>,
    %66 = vector.shape_cast %7 : vector<1x8x16xf32> to vector<8x16xf32>
    %67 = arith.truncf %66 : vector<8x16xf32> to vector<8x16xbf16>
    %cst_52 = arith.constant dense<0.000000e+00> : vector<8x16xf32>
    %68 = tpu.matmul %67, %13, %cst_52 {dimension_numbers = #tpu.dot_dimension_numbers<[1], [0], [0], [1], [0, 0, 1, 1], [], []>} : vector<8x16xbf16>, vector<16x16xbf16>, vector<8x16xf32> -> vector<8x16xf32>
    %69 = vector.shape_cast %68 : vector<8x16xf32> to vector<1x8x16xf32>
    %70 = vector.shape_cast %15 : vector<1x16xf32> to vector<1x1x16xf32>
    %71 = vector.broadcast %70 : vector<1x1x16xf32> to vector<1x8x16xf32>
    %72 = arith.addf %69, %71 : vector<1x8x16xf32>
    %cst_53 = arith.constant 0.000000e+00 : f32
    %73 = vector.broadcast %cst_53 : f32 to vector<1x8x16xf32>
    %74 = arith.select %1, %73, %72 : vector<1x8x16xf32>
    %c9_54 = arith.constant 9 : index
    %c1_55 = arith.constant 1 : index
    %c0_56 = arith.constant 0 : index
    %75 = vector.load %arg12[%c9_54, %c1_55, %c0_56] : memref<10x10x16xf32, #tpu.memory_space<vmem>>, vector<1x8x16xf32>
    tpu.vector_store %arg12[%c9_54, %c1_55, %c0_56], %74 {strides = array<i32>} : memref<10x10x16xf32, #tpu.memory_space<vmem>>, vector<1x8x16xf32>,
    %c0_57 = arith.constant 0 : index
    %c0_58 = arith.constant 0 : index
    %c0_59 = arith.constant 0 : index
    %c0_60 = arith.constant 0 : index
    %76 = vector.load %arg7[%c0_57, %c0_58, %c0_59, %c0_60] : memref<2x3x3x16xf32, #tpu.memory_space<vmem>>, vector<1x3x3x16xf32>
    %77 = vector.shape_cast %76 : vector<1x3x3x16xf32> to vector<3x3x16xf32>
    %c1_61 = arith.constant 1 : index
    %c0_62 = arith.constant 0 : index
    %c0_63 = arith.constant 0 : index
    %c0_64 = arith.constant 0 : index
    %78 = vector.load %arg7[%c1_61, %c0_62, %c0_63, %c0_64] : memref<2x3x3x16xf32, #tpu.memory_space<vmem>>, vector<1x3x3x16xf32>
    %79 = vector.shape_cast %78 : vector<1x3x3x16xf32> to vector<3x3x16xf32>
    %cst_65 = arith.constant 0.000000e+00 : f32
    %80 = vector.broadcast %cst_65 : f32 to vector<8x8x16xf32>
    %cst_66 = arith.constant 0.000000e+00 : f32
    %81 = vector.broadcast %cst_66 : f32 to vector<8x8x16xf32>
    %c0_67 = arith.constant 0 : index
    %c0_68 = arith.constant 0 : index
    %c0_69 = arith.constant 0 : index
    %82 = vector.load %arg11[%c0_67, %c0_68, %c0_69] : memref<10x10x16xf32, #tpu.memory_space<vmem>>, vector<8x8x16xf32>
    %83 = vector.extract_strided_slice %77 {offsets = [0, 0, 0], sizes = [1, 1, 16], strides = [1, 1, 1]} : vector<3x3x16xf32> to vector<1x1x16xf32>
    %84 = vector.shape_cast %83 : vector<1x1x16xf32> to vector<16xf32>
    %85 = vector.shape_cast %84 : vector<16xf32> to vector<1x1x16xf32>
    %86 = vector.broadcast %85 : vector<1x1x16xf32> to vector<8x8x16xf32>
    %87 = arith.mulf %82, %86 : vector<8x8x16xf32>
    %88 = arith.addf %80, %87 : vector<8x8x16xf32>
    %c0_70 = arith.constant 0 : index
    %c0_71 = arith.constant 0 : index
    %c0_72 = arith.constant 0 : index
    %89 = vector.load %arg12[%c0_70, %c0_71, %c0_72] : memref<10x10x16xf32, #tpu.memory_space<vmem>>, vector<8x8x16xf32>
    %90 = vector.extract_strided_slice %79 {offsets = [0, 0, 0], sizes = [1, 1, 16], strides = [1, 1, 1]} : vector<3x3x16xf32> to vector<1x1x16xf32>
    %91 = vector.shape_cast %90 : vector<1x1x16xf32> to vector<16xf32>
    %92 = vector.shape_cast %91 : vector<16xf32> to vector<1x1x16xf32>
    %93 = vector.broadcast %92 : vector<1x1x16xf32> to vector<8x8x16xf32>
    %94 = arith.mulf %89, %93 : vector<8x8x16xf32>
    %95 = arith.addf %81, %94 : vector<8x8x16xf32>
    %c0_73 = arith.constant 0 : index
    %c1_74 = arith.constant 1 : index
    %c0_75 = arith.constant 0 : index
    %96 = vector.load %arg11[%c0_73, %c1_74, %c0_75] : memref<10x10x16xf32, #tpu.memory_space<vmem>>, vector<8x8x16xf32>
    %97 = vector.extract_strided_slice %77 {offsets = [0, 1, 0], sizes = [1, 1, 16], strides = [1, 1, 1]} : vector<3x3x16xf32> to vector<1x1x16xf32>
    %98 = vector.shape_cast %97 : vector<1x1x16xf32> to vector<16xf32>
    %99 = vector.shape_cast %98 : vector<16xf32> to vector<1x1x16xf32>
    %100 = vector.broadcast %99 : vector<1x1x16xf32> to vector<8x8x16xf32>
    %101 = arith.mulf %96, %100 : vector<8x8x16xf32>
    %102 = arith.addf %88, %101 : vector<8x8x16xf32>
    %c0_76 = arith.constant 0 : index
    %c1_77 = arith.constant 1 : index
    %c0_78 = arith.constant 0 : index
    %103 = vector.load %arg12[%c0_76, %c1_77, %c0_78] : memref<10x10x16xf32, #tpu.memory_space<vmem>>, vector<8x8x16xf32>
    %104 = vector.extract_strided_slice %79 {offsets = [0, 1, 0], sizes = [1, 1, 16], strides = [1, 1, 1]} : vector<3x3x16xf32> to vector<1x1x16xf32>
    %105 = vector.shape_cast %104 : vector<1x1x16xf32> to vector<16xf32>
    %106 = vector.shape_cast %105 : vector<16xf32> to vector<1x1x16xf32>
    %107 = vector.broadcast %106 : vector<1x1x16xf32> to vector<8x8x16xf32>
    %108 = arith.mulf %103, %107 : vector<8x8x16xf32>
    %109 = arith.addf %95, %108 : vector<8x8x16xf32>
    %c0_79 = arith.constant 0 : index
    %c2 = arith.constant 2 : index
    %c0_80 = arith.constant 0 : index
    %110 = vector.load %arg11[%c0_79, %c2, %c0_80] : memref<10x10x16xf32, #tpu.memory_space<vmem>>, vector<8x8x16xf32>
    %111 = vector.extract_strided_slice %77 {offsets = [0, 2, 0], sizes = [1, 1, 16], strides = [1, 1, 1]} : vector<3x3x16xf32> to vector<1x1x16xf32>
    %112 = vector.shape_cast %111 : vector<1x1x16xf32> to vector<16xf32>
    %113 = vector.shape_cast %112 : vector<16xf32> to vector<1x1x16xf32>
    %114 = vector.broadcast %113 : vector<1x1x16xf32> to vector<8x8x16xf32>
    %115 = arith.mulf %110, %114 : vector<8x8x16xf32>
    %116 = arith.addf %102, %115 : vector<8x8x16xf32>
    %c0_81 = arith.constant 0 : index
    %c2_82 = arith.constant 2 : index
    %c0_83 = arith.constant 0 : index
    %117 = vector.load %arg12[%c0_81, %c2_82, %c0_83] : memref<10x10x16xf32, #tpu.memory_space<vmem>>, vector<8x8x16xf32>
    %118 = vector.extract_strided_slice %79 {offsets = [0, 2, 0], sizes = [1, 1, 16], strides = [1, 1, 1]} : vector<3x3x16xf32> to vector<1x1x16xf32>
    %119 = vector.shape_cast %118 : vector<1x1x16xf32> to vector<16xf32>
    %120 = vector.shape_cast %119 : vector<16xf32> to vector<1x1x16xf32>
    %121 = vector.broadcast %120 : vector<1x1x16xf32> to vector<8x8x16xf32>
    %122 = arith.mulf %117, %121 : vector<8x8x16xf32>
    %123 = arith.addf %109, %122 : vector<8x8x16xf32>
    %c1_84 = arith.constant 1 : index
    %c0_85 = arith.constant 0 : index
    %c0_86 = arith.constant 0 : index
    %124 = vector.load %arg11[%c1_84, %c0_85, %c0_86] : memref<10x10x16xf32, #tpu.memory_space<vmem>>, vector<8x8x16xf32>
    %125 = vector.extract_strided_slice %77 {offsets = [1, 0, 0], sizes = [1, 1, 16], strides = [1, 1, 1]} : vector<3x3x16xf32> to vector<1x1x16xf32>
    %126 = vector.shape_cast %125 : vector<1x1x16xf32> to vector<16xf32>
    %127 = vector.shape_cast %126 : vector<16xf32> to vector<1x1x16xf32>
    %128 = vector.broadcast %127 : vector<1x1x16xf32> to vector<8x8x16xf32>
    %129 = arith.mulf %124, %128 : vector<8x8x16xf32>
    %130 = arith.addf %116, %129 : vector<8x8x16xf32>
    %c1_87 = arith.constant 1 : index
    %c0_88 = arith.constant 0 : index
    %c0_89 = arith.constant 0 : index
    %131 = vector.load %arg12[%c1_87, %c0_88, %c0_89] : memref<10x10x16xf32, #tpu.memory_space<vmem>>, vector<8x8x16xf32>
    %132 = vector.extract_strided_slice %79 {offsets = [1, 0, 0], sizes = [1, 1, 16], strides = [1, 1, 1]} : vector<3x3x16xf32> to vector<1x1x16xf32>
    %133 = vector.shape_cast %132 : vector<1x1x16xf32> to vector<16xf32>
    %134 = vector.shape_cast %133 : vector<16xf32> to vector<1x1x16xf32>
    %135 = vector.broadcast %134 : vector<1x1x16xf32> to vector<8x8x16xf32>
    %136 = arith.mulf %131, %135 : vector<8x8x16xf32>
    %137 = arith.addf %123, %136 : vector<8x8x16xf32>
    %c1_90 = arith.constant 1 : index
    %c1_91 = arith.constant 1 : index
    %c0_92 = arith.constant 0 : index
    %138 = vector.load %arg11[%c1_90, %c1_91, %c0_92] : memref<10x10x16xf32, #tpu.memory_space<vmem>>, vector<8x8x16xf32>
    %139 = vector.extract_strided_slice %77 {offsets = [1, 1, 0], sizes = [1, 1, 16], strides = [1, 1, 1]} : vector<3x3x16xf32> to vector<1x1x16xf32>
    %140 = vector.shape_cast %139 : vector<1x1x16xf32> to vector<16xf32>
    %141 = vector.shape_cast %140 : vector<16xf32> to vector<1x1x16xf32>
    %142 = vector.broadcast %141 : vector<1x1x16xf32> to vector<8x8x16xf32>
    %143 = arith.mulf %138, %142 : vector<8x8x16xf32>
    %144 = arith.addf %130, %143 : vector<8x8x16xf32>
    %c1_93 = arith.constant 1 : index
    %c1_94 = arith.constant 1 : index
    %c0_95 = arith.constant 0 : index
    %145 = vector.load %arg12[%c1_93, %c1_94, %c0_95] : memref<10x10x16xf32, #tpu.memory_space<vmem>>, vector<8x8x16xf32>
    %146 = vector.extract_strided_slice %79 {offsets = [1, 1, 0], sizes = [1, 1, 16], strides = [1, 1, 1]} : vector<3x3x16xf32> to vector<1x1x16xf32>
    %147 = vector.shape_cast %146 : vector<1x1x16xf32> to vector<16xf32>
    %148 = vector.shape_cast %147 : vector<16xf32> to vector<1x1x16xf32>
    %149 = vector.broadcast %148 : vector<1x1x16xf32> to vector<8x8x16xf32>
    %150 = arith.mulf %145, %149 : vector<8x8x16xf32>
    %151 = arith.addf %137, %150 : vector<8x8x16xf32>
    %c1_96 = arith.constant 1 : index
    %c2_97 = arith.constant 2 : index
    %c0_98 = arith.constant 0 : index
    %152 = vector.load %arg11[%c1_96, %c2_97, %c0_98] : memref<10x10x16xf32, #tpu.memory_space<vmem>>, vector<8x8x16xf32>
    %153 = vector.extract_strided_slice %77 {offsets = [1, 2, 0], sizes = [1, 1, 16], strides = [1, 1, 1]} : vector<3x3x16xf32> to vector<1x1x16xf32>
    %154 = vector.shape_cast %153 : vector<1x1x16xf32> to vector<16xf32>
    %155 = vector.shape_cast %154 : vector<16xf32> to vector<1x1x16xf32>
    %156 = vector.broadcast %155 : vector<1x1x16xf32> to vector<8x8x16xf32>
    %157 = arith.mulf %152, %156 : vector<8x8x16xf32>
    %158 = arith.addf %144, %157 : vector<8x8x16xf32>
    %c1_99 = arith.constant 1 : index
    %c2_100 = arith.constant 2 : index
    %c0_101 = arith.constant 0 : index
    %159 = vector.load %arg12[%c1_99, %c2_100, %c0_101] : memref<10x10x16xf32, #tpu.memory_space<vmem>>, vector<8x8x16xf32>
    %160 = vector.extract_strided_slice %79 {offsets = [1, 2, 0], sizes = [1, 1, 16], strides = [1, 1, 1]} : vector<3x3x16xf32> to vector<1x1x16xf32>
    %161 = vector.shape_cast %160 : vector<1x1x16xf32> to vector<16xf32>
    %162 = vector.shape_cast %161 : vector<16xf32> to vector<1x1x16xf32>
    %163 = vector.broadcast %162 : vector<1x1x16xf32> to vector<8x8x16xf32>
    %164 = arith.mulf %159, %163 : vector<8x8x16xf32>
    %165 = arith.addf %151, %164 : vector<8x8x16xf32>
    %c2_102 = arith.constant 2 : index
    %c0_103 = arith.constant 0 : index
    %c0_104 = arith.constant 0 : index
    %166 = vector.load %arg11[%c2_102, %c0_103, %c0_104] : memref<10x10x16xf32, #tpu.memory_space<vmem>>, vector<8x8x16xf32>
    %167 = vector.extract_strided_slice %77 {offsets = [2, 0, 0], sizes = [1, 1, 16], strides = [1, 1, 1]} : vector<3x3x16xf32> to vector<1x1x16xf32>
    %168 = vector.shape_cast %167 : vector<1x1x16xf32> to vector<16xf32>
    %169 = vector.shape_cast %168 : vector<16xf32> to vector<1x1x16xf32>
    %170 = vector.broadcast %169 : vector<1x1x16xf32> to vector<8x8x16xf32>
    %171 = arith.mulf %166, %170 : vector<8x8x16xf32>
    %172 = arith.addf %158, %171 : vector<8x8x16xf32>
    %c2_105 = arith.constant 2 : index
    %c0_106 = arith.constant 0 : index
    %c0_107 = arith.constant 0 : index
    %173 = vector.load %arg12[%c2_105, %c0_106, %c0_107] : memref<10x10x16xf32, #tpu.memory_space<vmem>>, vector<8x8x16xf32>
    %174 = vector.extract_strided_slice %79 {offsets = [2, 0, 0], sizes = [1, 1, 16], strides = [1, 1, 1]} : vector<3x3x16xf32> to vector<1x1x16xf32>
    %175 = vector.shape_cast %174 : vector<1x1x16xf32> to vector<16xf32>
    %176 = vector.shape_cast %175 : vector<16xf32> to vector<1x1x16xf32>
    %177 = vector.broadcast %176 : vector<1x1x16xf32> to vector<8x8x16xf32>
    %178 = arith.mulf %173, %177 : vector<8x8x16xf32>
    %179 = arith.addf %165, %178 : vector<8x8x16xf32>
    %c2_108 = arith.constant 2 : index
    %c1_109 = arith.constant 1 : index
    %c0_110 = arith.constant 0 : index
    %180 = vector.load %arg11[%c2_108, %c1_109, %c0_110] : memref<10x10x16xf32, #tpu.memory_space<vmem>>, vector<8x8x16xf32>
    %181 = vector.extract_strided_slice %77 {offsets = [2, 1, 0], sizes = [1, 1, 16], strides = [1, 1, 1]} : vector<3x3x16xf32> to vector<1x1x16xf32>
    %182 = vector.shape_cast %181 : vector<1x1x16xf32> to vector<16xf32>
    %183 = vector.shape_cast %182 : vector<16xf32> to vector<1x1x16xf32>
    %184 = vector.broadcast %183 : vector<1x1x16xf32> to vector<8x8x16xf32>
    %185 = arith.mulf %180, %184 : vector<8x8x16xf32>
    %186 = arith.addf %172, %185 : vector<8x8x16xf32>
    %c2_111 = arith.constant 2 : index
    %c1_112 = arith.constant 1 : index
    %c0_113 = arith.constant 0 : index
    %187 = vector.load %arg12[%c2_111, %c1_112, %c0_113] : memref<10x10x16xf32, #tpu.memory_space<vmem>>, vector<8x8x16xf32>
    %188 = vector.extract_strided_slice %79 {offsets = [2, 1, 0], sizes = [1, 1, 16], strides = [1, 1, 1]} : vector<3x3x16xf32> to vector<1x1x16xf32>
    %189 = vector.shape_cast %188 : vector<1x1x16xf32> to vector<16xf32>
    %190 = vector.shape_cast %189 : vector<16xf32> to vector<1x1x16xf32>
    %191 = vector.broadcast %190 : vector<1x1x16xf32> to vector<8x8x16xf32>
    %192 = arith.mulf %187, %191 : vector<8x8x16xf32>
    %193 = arith.addf %179, %192 : vector<8x8x16xf32>
    %c2_114 = arith.constant 2 : index
    %c2_115 = arith.constant 2 : index
    %c0_116 = arith.constant 0 : index
    %194 = vector.load %arg11[%c2_114, %c2_115, %c0_116] : memref<10x10x16xf32, #tpu.memory_space<vmem>>, vector<8x8x16xf32>
    %195 = vector.extract_strided_slice %77 {offsets = [2, 2, 0], sizes = [1, 1, 16], strides = [1, 1, 1]} : vector<3x3x16xf32> to vector<1x1x16xf32>
    %196 = vector.shape_cast %195 : vector<1x1x16xf32> to vector<16xf32>
    %197 = vector.shape_cast %196 : vector<16xf32> to vector<1x1x16xf32>
    %198 = vector.broadcast %197 : vector<1x1x16xf32> to vector<8x8x16xf32>
    %199 = arith.mulf %194, %198 : vector<8x8x16xf32>
    %200 = arith.addf %186, %199 : vector<8x8x16xf32>
    %c2_117 = arith.constant 2 : index
    %c2_118 = arith.constant 2 : index
    %c0_119 = arith.constant 0 : index
    %201 = vector.load %arg12[%c2_117, %c2_118, %c0_119] : memref<10x10x16xf32, #tpu.memory_space<vmem>>, vector<8x8x16xf32>
    %202 = vector.extract_strided_slice %79 {offsets = [2, 2, 0], sizes = [1, 1, 16], strides = [1, 1, 1]} : vector<3x3x16xf32> to vector<1x1x16xf32>
    %203 = vector.shape_cast %202 : vector<1x1x16xf32> to vector<16xf32>
    %204 = vector.shape_cast %203 : vector<16xf32> to vector<1x1x16xf32>
    %205 = vector.broadcast %204 : vector<1x1x16xf32> to vector<8x8x16xf32>
    %206 = arith.mulf %201, %205 : vector<8x8x16xf32>
    %207 = arith.addf %193, %206 : vector<8x8x16xf32>
    %c0_120 = arith.constant 0 : index
    %c0_121 = arith.constant 0 : index
    %c0_122 = arith.constant 0 : index
    %208 = vector.load %arg8[%c0_120, %c0_121, %c0_122] : memref<2x1x16xf32, #tpu.memory_space<vmem>>, vector<1x1x16xf32>
    %209 = vector.shape_cast %208 : vector<1x1x16xf32> to vector<1x16xf32>
    %210 = vector.shape_cast %209 : vector<1x16xf32> to vector<1x1x16xf32>
    %211 = vector.broadcast %210 : vector<1x1x16xf32> to vector<8x8x16xf32>
    %212 = arith.addf %200, %211 : vector<8x8x16xf32>
    %c1_123 = arith.constant 1 : index
    %c0_124 = arith.constant 0 : index
    %c0_125 = arith.constant 0 : index
    %213 = vector.load %arg8[%c1_123, %c0_124, %c0_125] : memref<2x1x16xf32, #tpu.memory_space<vmem>>, vector<1x1x16xf32>
    %214 = vector.shape_cast %213 : vector<1x1x16xf32> to vector<1x16xf32>
    %215 = vector.shape_cast %214 : vector<1x16xf32> to vector<1x1x16xf32>
    %216 = vector.broadcast %215 : vector<1x1x16xf32> to vector<8x8x16xf32>
    %217 = arith.addf %207, %216 : vector<8x8x16xf32>
    %c0_126 = arith.constant 0 : index
    %c0_127 = arith.constant 0 : index
    %c0_128 = arith.constant 0 : index
    %c0_129 = arith.constant 0 : index
    %218 = vector.load %arg9[%c0_126, %c0_127, %c0_128, %c0_129] : memref<1x8x8x16xf32, #tpu.memory_space<vmem>>, vector<1x8x8x16xf32>
    %219 = vector.shape_cast %218 : vector<1x8x8x16xf32> to vector<8x8x16xf32>
    %220 = vector.shape_cast %212 : vector<8x8x16xf32> to vector<1x8x8x16xf32>
    tpu.vector_store %arg9[%c0_126, %c0_127, %c0_128, %c0_129], %220 {strides = array<i32>} : memref<1x8x8x16xf32, #tpu.memory_space<vmem>>, vector<1x8x8x16xf32>,
    %c0_130 = arith.constant 0 : index
    %c0_131 = arith.constant 0 : index
    %c0_132 = arith.constant 0 : index
    %c0_133 = arith.constant 0 : index
    %221 = vector.load %arg10[%c0_130, %c0_131, %c0_132, %c0_133] : memref<1x8x8x16xf32, #tpu.memory_space<vmem>>, vector<1x8x8x16xf32>
    %222 = vector.shape_cast %221 : vector<1x8x8x16xf32> to vector<8x8x16xf32>
    %223 = vector.shape_cast %217 : vector<8x8x16xf32> to vector<1x8x8x16xf32>
    tpu.vector_store %arg10[%c0_130, %c0_131, %c0_132, %c0_133], %223 {strides = array<i32>} : memref<1x8x8x16xf32, #tpu.memory_space<vmem>>, vector<1x8x8x16xf32>,
    return
  }
  func.func @transform_0(%arg0: i32, %arg1: i32) -> (i32, i32, i32, i32) {
    %c0_i32 = arith.constant 0 : i32
    %c0_i32_0 = arith.constant 0 : i32
    %c0_i32_1 = arith.constant 0 : i32
    return %arg0, %arg1, %c0_i32, %c0_i32_0 : i32, i32, i32, i32
  }
  func.func @transform_1(%arg0: i32, %arg1: i32) -> (i32, i32, i32, i32) {
    %c8_i32 = arith.constant 8 : i32
    %0 = arith.muli %arg1, %c8_i32 : i32
    %c1_i32 = arith.constant 1 : i32
    %1 = arith.subi %0, %c1_i32 : i32
    %c0_i32 = arith.constant 0 : i32
    %2 = arith.maxsi %1, %c0_i32 : i32
    %c0_i32_0 = arith.constant 0 : i32
    %c0_i32_1 = arith.constant 0 : i32
    %c0_i32_2 = arith.constant 0 : i32
    return %arg0, %2, %c0_i32_0, %c0_i32_1 : i32, i32, i32, i32
  }
  func.func @transform_2(%arg0: i32, %arg1: i32) -> (i32, i32, i32, i32) {
    %c8_i32 = arith.constant 8 : i32
    %0 = arith.muli %arg1, %c8_i32 : i32
    %c8_i32_0 = arith.constant 8 : i32
    %1 = arith.addi %0, %c8_i32_0 : i32
    %c7_i32 = arith.constant 7 : i32
    %2 = arith.minsi %1, %c7_i32 : i32
    %c0_i32 = arith.constant 0 : i32
    %c0_i32_1 = arith.constant 0 : i32
    %c0_i32_2 = arith.constant 0 : i32
    return %arg0, %2, %c0_i32, %c0_i32_1 : i32, i32, i32, i32
  }
  func.func @transform_3(%arg0: i32, %arg1: i32) -> (i32, i32, i32) {
    %c0_i32 = arith.constant 0 : i32
    %c0_i32_0 = arith.constant 0 : i32
    %c0_i32_1 = arith.constant 0 : i32
    %c0_i32_2 = arith.constant 0 : i32
    return %c0_i32, %c0_i32_0, %c0_i32_1 : i32, i32, i32
  }
  func.func @transform_4(%arg0: i32, %arg1: i32) -> (i32, i32, i32) {
    %c0_i32 = arith.constant 0 : i32
    %c0_i32_0 = arith.constant 0 : i32
    %c0_i32_1 = arith.constant 0 : i32
    %c0_i32_2 = arith.constant 0 : i32
    return %c0_i32, %c0_i32_0, %c0_i32_1 : i32, i32, i32
  }
  func.func @transform_5(%arg0: i32, %arg1: i32) -> (i32, i32, i32, i32) {
    %c0_i32 = arith.constant 0 : i32
    %c0_i32_0 = arith.constant 0 : i32
    %c0_i32_1 = arith.constant 0 : i32
    %c0_i32_2 = arith.constant 0 : i32
    %c0_i32_3 = arith.constant 0 : i32
    return %c0_i32, %c0_i32_0, %c0_i32_1, %c0_i32_2 : i32, i32, i32, i32
  }
  func.func @transform_6(%arg0: i32, %arg1: i32) -> (i32, i32, i32) {
    %c0_i32 = arith.constant 0 : i32
    %c0_i32_0 = arith.constant 0 : i32
    %c0_i32_1 = arith.constant 0 : i32
    %c0_i32_2 = arith.constant 0 : i32
    return %c0_i32, %c0_i32_0, %c0_i32_1 : i32, i32, i32
  }
  func.func @transform_7(%arg0: i32, %arg1: i32) -> (i32, i32, i32, i32) {
    %c0_i32 = arith.constant 0 : i32
    %c0_i32_0 = arith.constant 0 : i32
    %c0_i32_1 = arith.constant 0 : i32
    return %arg0, %arg1, %c0_i32, %c0_i32_0 : i32, i32, i32, i32
  }
  func.func @transform_8(%arg0: i32, %arg1: i32) -> (i32, i32, i32, i32) {
    %c0_i32 = arith.constant 0 : i32
    %c0_i32_0 = arith.constant 0 : i32
    %c0_i32_1 = arith.constant 0 : i32
    return %arg0, %arg1, %c0_i32, %c0_i32_0 : i32, i32, i32, i32
  }
}

</mosaic_0001>

<llo_original>
// kernel: gated_attention_forward.5
$region0: #{gated_attention_forward.5}
  #allocation0 [shape = 'u32[]', space=smem, size = 0x4, offset = 0x4, fixed_abs, tag = 'smem constant byte address 0x4 - core index']
  #allocation1 [shape = 'u32[144,128]{1,0:T(1,128)}', space=vmem, size = 0x12000, scoped, tag = 'internal scratch']
  %s0 = inlined_call_operand.vmem [shape: f32[2,64,16], index: 0, kind: input, shape index: {}]
  %s1 = inlined_call_operand.vmem [shape: f32[2,64,16], index: 1, kind: input, shape index: {}]
  %s2 = inlined_call_operand.vmem [shape: f32[2,64,16], index: 2, kind: input, shape index: {}]
  %s3 = inlined_call_operand.vmem [shape: f32[1,16], index: 3, kind: input, shape index: {}]
  %s4 = inlined_call_operand.vmem [shape: f32[16,16], index: 4, kind: input, shape index: {}]
  %s5 = inlined_call_operand.vmem [shape: bf16[16,16], index: 5, kind: input, shape index: {}]
  %s6 = inlined_call_operand.vmem [shape: f32[1,16], index: 6, kind: input, shape index: {}]
  %s7 = inlined_call_operand.hbm [shape: f32[2,64,16], index: 7, kind: output, shape index: {}]
  %s8 = sld [smem:[#allocation0]]
  $region61: #{gated_attention_forward.5} parent=0
    _
  %s10 = ssub.s32 1, %s8
  %s11 = scalar_select 0, %s10, %s8
  $region1: #{gated_attention_forward.5} parent=0
    #allocation2 [shape = 'u8[65536]{0}', space=vmem, size = 0x10000, scoped, tag = 'output window, operand 0']
    #allocation3 [shape = 's32[2]{0}', space=sflag, size = 0x8, scoped, tag = 'scoped memory for gated_attention_forward.5']
    %12 = vsyncpa [#allocation3], 0
    %s13 = scalar_lea.sflag [#allocation3], 1
    %14 = vsyncpa %s13, 0
    loop: start=0, step=1, limit=4
    $region2: #{gated_attention_forward.5} parent=1 // loop_pre_header
      _
    $region3: #{gated_attention_forward.5} parent=1 // loop_header
      %s16 = sphi 0, %s20
      %p17 = scmp.ge.s32.totalorder %s16, 4
      %s26 = sphi 0, %s28
      %s29 = sphi 0, %s26
      %s30 = sphi 0, %s29
      %s46 = sphi 0, %s30
      %s52 = sphi 0, %s54
      %s55 = sphi 0, %s52
      %s56 = sphi 0, %s55
      %s72 = sphi 0, %s56
      %s78 = sphi 0, %s80
      %s81 = sphi 0, %s78
      %s82 = sphi 0, %s81
      %s98 = sphi 0, %s82
      %s102 = sphi 0, %s102
      %s104 = sphi 0, %s102
      %s105 = sphi 0, %s104
      %s119 = sphi 0, %s105
      %s123 = sphi 0, %s123
      %s125 = sphi 0, %s123
      %s126 = sphi 0, %s125
      %s140 = sphi 0, %s126
      %s144 = sphi 0, %s144
      %s146 = sphi 0, %s144
      %s147 = sphi 0, %s146
      %s161 = sphi 0, %s147
      %s165 = sphi 0, %s165
      %s167 = sphi 0, %s165
      %s168 = sphi 0, %s167
      %s182 = sphi 0, %s168
      %s188 = sphi 0, %s190
      %s191 = sphi 0, %s188
      %s192 = sphi 0, %s191
      %s208 = sphi 0, %s192
    $region4: #{gated_attention_forward.5} parent=1 // loop_header_branch
      %19 = sbr.rel (%p17) target = $region8
    $region5: #{gated_attention_forward.5} parent=1 // loop_body
      %s21 = ssub.s32 %s16, 1
      %s22 = ssub.s32 %s16, 2
      %s23 = sadd.s32 %s16, 1
      %s24 = ssub.s32 %s16, %s23
      %p25 = scmp.eq.s32.totalorder %s24, 0
      %s27 = sadd.s32 %s26, 1
      %s28 = scalar_select %p25, %s26, %s27
      %p31 = pneg %p25
      %p32 = scmp.eq.s32.totalorder %s16, 1
      %p33 = por %p31, %p32
      %p34 = scmp.ne.s32.totalorder %s26, %s29
      %p35 = scmp.eq.s32.totalorder %s16, 0
      %p36 = por %p34, %p35
      %p37 = scmp.ne.s32.totalorder %s26, %s29
      %p38 = scmp.eq.s32.totalorder %s21, 1
      %p39 = por %p37, %p38
      %p40 = scmp.ne.s32.totalorder %s29, %s30
      %p41 = scmp.eq.s32.totalorder %s21, 0
      %p42 = por %p40, %p41
      %p43 = scmp.ne.s32.totalorder %s29, %s30
      %p44 = scmp.eq.s32.totalorder %s22, 1
      %p45 = por %p43, %p44
      %p47 = scmp.ne.s32.totalorder %s30, %s46
      %p48 = scmp.eq.s32.totalorder %s22, 0
      %p49 = por %p47, %p48
      %s50 = ssub.s32 %s16, %s23
      %p51 = scmp.eq.s32.totalorder %s50, 0
      %s53 = sadd.s32 %s52, 1
      %s54 = scalar_select %p51, %s52, %s53
      %p57 = pneg %p51
      %p58 = scmp.eq.s32.totalorder %s16, 1
      %p59 = por %p57, %p58
      %p60 = scmp.ne.s32.totalorder %s52, %s55
      %p61 = scmp.eq.s32.totalorder %s16, 0
      %p62 = por %p60, %p61
      %p63 = scmp.ne.s32.totalorder %s52, %s55
      %p64 = scmp.eq.s32.totalorder %s21, 1
      %p65 = por %p63, %p64
      %p66 = scmp.ne.s32.totalorder %s55, %s56
      %p67 = scmp.eq.s32.totalorder %s21, 0
      %p68 = por %p66, %p67
      %p69 = scmp.ne.s32.totalorder %s55, %s56
      %p70 = scmp.eq.s32.totalorder %s22, 1
      %p71 = por %p69, %p70
      %p73 = scmp.ne.s32.totalorder %s56, %s72
      %p74 = scmp.eq.s32.totalorder %s22, 0
      %p75 = por %p73, %p74
      %s76 = ssub.s32 %s16, %s23
      %p77 = scmp.eq.s32.totalorder %s76, 0
      %s79 = sadd.s32 %s78, 1
      %s80 = scalar_select %p77, %s78, %s79
      %p83 = pneg %p77
      %p84 = scmp.eq.s32.totalorder %s16, 1
      %p85 = por %p83, %p84
      %p86 = scmp.ne.s32.totalorder %s78, %s81
      %p87 = scmp.eq.s32.totalorder %s16, 0
      %p88 = por %p86, %p87
      %p89 = scmp.ne.s32.totalorder %s78, %s81
      %p90 = scmp.eq.s32.totalorder %s21, 1
      %p91 = por %p89, %p90
      %p92 = scmp.ne.s32.totalorder %s81, %s82
      %p93 = scmp.eq.s32.totalorder %s21, 0
      %p94 = por %p92, %p93
      %p95 = scmp.ne.s32.totalorder %s81, %s82
      %p96 = scmp.eq.s32.totalorder %s22, 1
      %p97 = por %p95, %p96
      %p99 = scmp.ne.s32.totalorder %s82, %s98
      %p100 = scmp.eq.s32.totalorder %s22, 0
      %p101 = por %p99, %p100
      %s103 = sadd.s32 %s102, 1
      %p106 = scmp.eq.s32.totalorder %s16, 1
      %p107 = scmp.ne.s32.totalorder %s102, %s104
      %p108 = scmp.eq.s32.totalorder %s16, 0
      %p109 = por %p107, %p108
      %p110 = scmp.ne.s32.totalorder %s102, %s104
      %p111 = scmp.eq.s32.totalorder %s21, 1
      %p112 = por %p110, %p111
      %p113 = scmp.ne.s32.totalorder %s104, %s105
      %p114 = scmp.eq.s32.totalorder %s21, 0
      %p115 = por %p113, %p114
      %p116 = scmp.ne.s32.totalorder %s104, %s105
      %p117 = scmp.eq.s32.totalorder %s22, 1
      %p118 = por %p116, %p117
      %p120 = scmp.ne.s32.totalorder %s105, %s119
      %p121 = scmp.eq.s32.totalorder %s22, 0
      %p122 = por %p120, %p121
      %s124 = sadd.s32 %s123, 1
      %p127 = scmp.eq.s32.totalorder %s16, 1
      %p128 = scmp.ne.s32.totalorder %s123, %s125
      %p129 = scmp.eq.s32.totalorder %s16, 0
      %p130 = por %p128, %p129
      %p131 = scmp.ne.s32.totalorder %s123, %s125
      %p132 = scmp.eq.s32.totalorder %s21, 1
      %p133 = por %p131, %p132
      %p134 = scmp.ne.s32.totalorder %s125, %s126
      %p135 = scmp.eq.s32.totalorder %s21, 0
      %p136 = por %p134, %p135
      %p137 = scmp.ne.s32.totalorder %s125, %s126
      %p138 = scmp.eq.s32.totalorder %s22, 1
      %p139 = por %p137, %p138
      %p141 = scmp.ne.s32.totalorder %s126, %s140
      %p142 = scmp.eq.s32.totalorder %s22, 0
      %p143 = por %p141, %p142
      %s145 = sadd.s32 %s144, 1
      %p148 = scmp.eq.s32.totalorder %s16, 1
      %p149 = scmp.ne.s32.totalorder %s144, %s146
      %p150 = scmp.eq.s32.totalorder %s16, 0
      %p151 = por %p149, %p150
      %p152 = scmp.ne.s32.totalorder %s144, %s146
      %p153 = scmp.eq.s32.totalorder %s21, 1
      %p154 = por %p152, %p153
      %p155 = scmp.ne.s32.totalorder %s146, %s147
      %p156 = scmp.eq.s32.totalorder %s21, 0
      %p157 = por %p155, %p156
      %p158 = scmp.ne.s32.totalorder %s146, %s147
      %p159 = scmp.eq.s32.totalorder %s22, 1
      %p160 = por %p158, %p159
      %p162 = scmp.ne.s32.totalorder %s147, %s161
      %p163 = scmp.eq.s32.totalorder %s22, 0
      %p164 = por %p162, %p163
      %s166 = sadd.s32 %s165, 1
      %p169 = scmp.eq.s32.totalorder %s16, 1
      %p170 = scmp.ne.s32.totalorder %s165, %s167
      %p171 = scmp.eq.s32.totalorder %s16, 0
      %p172 = por %p170, %p171
      %p173 = scmp.ne.s32.totalorder %s165, %s167
      %p174 = scmp.eq.s32.totalorder %s21, 1
      %p175 = por %p173, %p174
      %p176 = scmp.ne.s32.totalorder %s167, %s168
      %p177 = scmp.eq.s32.totalorder %s21, 0
      %p178 = por %p176, %p177
      %p179 = scmp.ne.s32.totalorder %s167, %s168
      %p180 = scmp.eq.s32.totalorder %s22, 1
      %p181 = por %p179, %p180
      %p183 = scmp.ne.s32.totalorder %s168, %s182
      %p184 = scmp.eq.s32.totalorder %s22, 0
      %p185 = por %p183, %p184
      %s186 = ssub.s32 %s16, %s23
      %p187 = scmp.eq.s32.totalorder %s186, 0
      %s189 = sadd.s32 %s188, 1
      %s190 = scalar_select %p187, %s188, %s189
      %p193 = pneg %p187
      %p194 = scmp.eq.s32.totalorder %s16, 1
      %p195 = por %p193, %p194
      %p196 = scmp.ne.s32.totalorder %s188, %s191
      %p197 = scmp.eq.s32.totalorder %s16, 0
      %p198 = por %p196, %p197
      %p199 = scmp.ne.s32.totalorder %s188, %s191
      %p200 = scmp.eq.s32.totalorder %s21, 1
      %p201 = por %p199, %p200
      %p202 = scmp.ne.s32.totalorder %s191, %s192
      %p203 = scmp.eq.s32.totalorder %s21, 0
      %p204 = por %p202, %p203
      %p205 = scmp.ne.s32.totalorder %s191, %s192
      %p206 = scmp.eq.s32.totalorder %s22, 1
      %p207 = por %p205, %p206
      %p209 = scmp.ne.s32.totalorder %s192, %s208
      %p210 = scmp.eq.s32.totalorder %s22, 0
      %p211 = por %p209, %p210
      %p212 = scmp.le.s32.totalorder 1, %s16
      %p213 = scmp.lt.s32.totalorder %s16, 3
      %p214 = pnand %p212, %p213
      %p215 = pneg %p214
      // Predicated region
      $region9: #{gated_attention_forward.5} parent=5 // pred_check
        _
      $region10: #{gated_attention_forward.5} parent=5 // pred_check_branch
        %217 = sbr.rel (%p214) target = $region12
      $region11: #{gated_attention_forward.5} parent=5 // pred_region
        %s218 = ssub.s32 %s16, 1
        // Predicated region
        $region13: #{gated_attention_forward.5} parent=11 // pred_check
          %p219 = pneg %p115
        $region14: #{gated_attention_forward.5} parent=11 // pred_check_branch
          %221 = sbr.rel (%p219) target = $region16
        $region15: #{gated_attention_forward.5} parent=11 // pred_region
          _
        $region16: #{gated_attention_forward.5} parent=11 // pred_fallthru
          _
        // Predicated region
        $region17: #{gated_attention_forward.5} parent=11 // pred_check
          %p222 = pneg %p136
        $region18: #{gated_attention_forward.5} parent=11 // pred_check_branch
          %224 = sbr.rel (%p222) target = $region20
        $region19: #{gated_attention_forward.5} parent=11 // pred_region
          _
        $region20: #{gated_attention_forward.5} parent=11 // pred_fallthru
          _
        // Predicated region
        $region21: #{gated_attention_forward.5} parent=11 // pred_check
          %p225 = pneg %p157
        $region22: #{gated_attention_forward.5} parent=11 // pred_check_branch
          %227 = sbr.rel (%p225) target = $region24
        $region23: #{gated_attention_forward.5} parent=11 // pred_region
          _
        $region24: #{gated_attention_forward.5} parent=11 // pred_fallthru
          _
        // Predicated region
        $region25: #{gated_attention_forward.5} parent=11 // pred_check
          %p228 = pneg %p178
        $region26: #{gated_attention_forward.5} parent=11 // pred_check_branch
          %230 = sbr.rel (%p228) target = $region28
        $region27: #{gated_attention_forward.5} parent=11 // pred_region
          _
        $region28: #{gated_attention_forward.5} parent=11 // pred_fallthru
          _
      $region12: #{gated_attention_forward.5} parent=5 // pred_fallthru
        _
      %p231 = scmp.lt.s32.totalorder %s16, 2
      // Predicated region
      $region29: #{gated_attention_forward.5} parent=5 // pred_check
        %p232 = pneg %p231
      $region30: #{gated_attention_forward.5} parent=5 // pred_check_branch
        %234 = sbr.rel (%p232) target = $region32
      $region31: #{gated_attention_forward.5} parent=5 // pred_region
        // Predicated region
        $region33: #{gated_attention_forward.5} parent=31 // pred_check
          %p235 = pneg %p36
        $region34: #{gated_attention_forward.5} parent=31 // pred_check_branch
          %237 = sbr.rel (%p235) target = $region36
        $region35: #{gated_attention_forward.5} parent=31 // pred_region
          %p238 = scmp.lt.s32.totalorder %s16, 1
          %s239 = scalar_select %p238, %s16, 1
          %s240 = smul.addr %s239, 8
          %s241 = smul.addr %s240, 8
          %s242 = scalar_lea.vmem %s0, %s241
        $region36: #{gated_attention_forward.5} parent=31 // pred_fallthru
          _
        // Predicated region
        $region37: #{gated_attention_forward.5} parent=31 // pred_check
          %p243 = pneg %p62
        $region38: #{gated_attention_forward.5} parent=31 // pred_check_branch
          %245 = sbr.rel (%p243) target = $region40
        $region39: #{gated_attention_forward.5} parent=31 // pred_region
          %p246 = scmp.lt.s32.totalorder %s16, 1
          %s247 = scalar_select %p246, %s16, 1
          %s248 = smul.addr %s247, 8
          %s249 = smul.addr %s248, 8
          %s250 = scalar_lea.vmem %s1, %s249
        $region40: #{gated_attention_forward.5} parent=31 // pred_fallthru
          _
        // Predicated region
        $region41: #{gated_attention_forward.5} parent=31 // pred_check
          %p251 = pneg %p88
        $region42: #{gated_attention_forward.5} parent=31 // pred_check_branch
          %253 = sbr.rel (%p251) target = $region44
        $region43: #{gated_attention_forward.5} parent=31 // pred_region
          %p254 = scmp.lt.s32.totalorder %s16, 1
          %s255 = scalar_select %p254, %s16, 1
          %s256 = smul.addr %s255, 8
          %s257 = smul.addr %s256, 8
          %s258 = scalar_lea.vmem %s2, %s257
        $region44: #{gated_attention_forward.5} parent=31 // pred_fallthru
          _
      $region32: #{gated_attention_forward.5} parent=5 // pred_fallthru
        _
      %p259 = scmp.le.s32.totalorder 1, %s16
      %p260 = scmp.lt.s32.totalorder %s16, 3
      %p261 = pnand %p259, %p260
      %p262 = pneg %p261
      // Predicated region
      $region45: #{gated_attention_forward.5} parent=5 // pred_check
        _
      $region46: #{gated_attention_forward.5} parent=5 // pred_check_branch
        %264 = sbr.rel (%p261) target = $region48
      $region47: #{gated_attention_forward.5} parent=5 // pred_region
        %s265 = ssub.s32 %s16, 1
        %p266 = scmp.lt.s32.totalorder %s21, 1
        %s267 = scalar_select %p266, %s21, 1
        %s268 = smul.addr %s267, 8
        %s269 = smul.addr %s268, 8
        %s270 = scalar_lea.vmem %s0, %s269
        %p271 = pneg %p42
        %p272 = pneg %p39
        %p273 = scmp.lt.s32.totalorder %s21, 1
        %s274 = scalar_select %p273, %s21, 1
        %s275 = smul.addr %s274, 8
        %s276 = smul.addr %s275, 8
        %s277 = scalar_lea.vmem %s1, %s276
        %p278 = pneg %p68
        %p279 = pneg %p65
        %p280 = scmp.lt.s32.totalorder %s21, 1
        %s281 = scalar_select %p280, %s21, 1
        %s282 = smul.addr %s281, 8
        %s283 = smul.addr %s282, 8
        %s284 = scalar_lea.vmem %s2, %s283
        %p285 = pneg %p94
        %p286 = pneg %p91
        %p287 = pneg %p115
        %p288 = pneg %p112
        %p289 = pneg %p136
        %p290 = pneg %p133
        %p291 = pneg %p157
        %p292 = pneg %p154
        %p293 = pneg %p178
        %p294 = pneg %p175
        %p295 = pneg %p204
        %p296 = pneg %p201
        %s297 = sand.u32 %s191, 1
        %s298 = scalar_lea.sflag [#allocation3], %s297
        %s299 = sand.u32 %s191, 1
        %s300 = smul.addr %s299, 64
        %s301 = scalar_lea.vmem [#allocation2], %s300
        %p302 = scmp.lt.s32.totalorder %s21, 1
        %s303 = scalar_select %p302, %s21, 1
        %s304 = smul.addr %s303, 8
        %s305 = smul.addr %s304, 8
        %s306 = scalar_lea.vmem %s0, %s305
        %p307 = scmp.lt.s32.totalorder %s21, 1
        %s308 = scalar_select %p307, %s21, 1
        %s309 = smul.addr %s308, 8
        %s310 = smul.addr %s309, 8
        %s311 = scalar_lea.vmem %s1, %s310
        %p312 = scmp.lt.s32.totalorder %s21, 1
        %s313 = scalar_select %p312, %s21, 1
        %s314 = smul.addr %s313, 8
        %s315 = smul.addr %s314, 8
        %s316 = scalar_lea.vmem %s2, %s315
        %v318 = vld [vmem:[%s306] sm:$0xff]
        %v319 = vld [vmem:[%s306 + $0x8] sm:$0xff]
        %v320 = vld [vmem:[%s306 + $0x10] sm:$0xff]
        %v321 = vld [vmem:[%s306 + $0x18] sm:$0xff]
        %v322 = vld [vmem:[%s306 + $0x20] sm:$0xff]
        %v323 = vld [vmem:[%s306 + $0x28] sm:$0xff]
        %v324 = vld [vmem:[%s306 + $0x30] sm:$0xff]
        %v325 = vld [vmem:[%s306 + $0x38] sm:$0xff]
        %v326 = vld [vmem:[%s311] sm:$0xff]
        %v327 = vld [vmem:[%s311 + $0x8] sm:$0xff]
        %v328 = vld [vmem:[%s311 + $0x10] sm:$0xff]
        %v329 = vld [vmem:[%s311 + $0x18] sm:$0xff]
        %v330 = vld [vmem:[%s311 + $0x20] sm:$0xff]
        %v331 = vld [vmem:[%s311 + $0x28] sm:$0xff]
        %v332 = vld [vmem:[%s311 + $0x30] sm:$0xff]
        %v333 = vld [vmem:[%s311 + $0x38] sm:$0xff]
        %v334 = vld [vmem:[%s316] sm:$0xff]
        %v335 = vld [vmem:[%s316 + $0x8] sm:$0xff]
        %v336 = vld [vmem:[%s316 + $0x10] sm:$0xff]
        %v337 = vld [vmem:[%s316 + $0x18] sm:$0xff]
        %v338 = vld [vmem:[%s316 + $0x20] sm:$0xff]
        %v339 = vld [vmem:[%s316 + $0x28] sm:$0xff]
        %v340 = vld [vmem:[%s316 + $0x30] sm:$0xff]
        %v341 = vld [vmem:[%s316 + $0x38] sm:$0xff]
        %v342 = vmul.f32 %v318, %v318
        %v343 = vmul.f32 %v319, %v319
        %v344 = vmul.f32 %v320, %v320
        %v345 = vmul.f32 %v321, %v321
        %v346 = vmul.f32 %v322, %v322
        %v347 = vmul.f32 %v323, %v323
        %v348 = vmul.f32 %v324, %v324
        %v349 = vmul.f32 %v325, %v325
        %vm350 = vcmask 130048
        %v351 = vsel %vm350, %v342, 0.0
        %v352 = vsel %vm350, %v343, 0.0
        %v353 = vadd.f32 %v351, %v352
        %v354 = vsel %vm350, %v344, 0.0
        %v355 = vadd.f32 %v353, %v354
        %v356 = vsel %vm350, %v345, 0.0
        %v357 = vadd.f32 %v355, %v356
        %v358 = vsel %vm350, %v346, 0.0
        %v359 = vadd.f32 %v357, %v358
        %v360 = vsel %vm350, %v347, 0.0
        %v361 = vadd.f32 %v359, %v360
        %v362 = vsel %vm350, %v348, 0.0
        %v363 = vadd.f32 %v361, %v362
        %v364 = vsel %vm350, %v349, 0.0
        %v365 = vadd.f32 %v363, %v364
        %v366 = vrot.slane %v365, 4
        %v367 = vadd.f32 %v365, %v366
        %v368 = vrot.slane %v367, 2
        %v369 = vadd.f32 %v367, %v368
        %v370 = vrot.slane %v369, 1
        %v371 = vadd.f32 %v369, %v370
        %v372 = vmax.f32 %v371, 1e-24
        %v373 = vrsqrt.pop %v372
        %v374 = vmul.f32 %v326, %v326
        %v375 = vmul.f32 %v327, %v327
        %v376 = vmul.f32 %v328, %v328
        %v377 = vmul.f32 %v329, %v329
        %v378 = vmul.f32 %v330, %v330
        %v379 = vmul.f32 %v331, %v331
        %v380 = vmul.f32 %v332, %v332
        %v381 = vmul.f32 %v333, %v333
        %v382 = vsel %vm350, %v374, 0.0
        %v383 = vsel %vm350, %v375, 0.0
        %v384 = vadd.f32 %v382, %v383
        %v385 = vsel %vm350, %v376, 0.0
        %v386 = vadd.f32 %v384, %v385
        %v387 = vsel %vm350, %v377, 0.0
        %v388 = vadd.f32 %v386, %v387
        %v389 = vsel %vm350, %v378, 0.0
        %v390 = vadd.f32 %v388, %v389
        %v391 = vsel %vm350, %v379, 0.0
        %v392 = vadd.f32 %v390, %v391
        %v393 = vsel %vm350, %v380, 0.0
        %v394 = vadd.f32 %v392, %v393
        %v395 = vsel %vm350, %v381, 0.0
        %v396 = vadd.f32 %v394, %v395
        %v397 = vrot.slane %v396, 4
        %v398 = vadd.f32 %v396, %v397
        %v399 = vrot.slane %v398, 2
        %v400 = vadd.f32 %v398, %v399
        %v401 = vrot.slane %v400, 1
        %v402 = vadd.f32 %v400, %v401
        %v403 = vmax.f32 %v402, 1e-24
        %v404 = vrsqrt.pop %v403
        %v405 = vmul.f32 %v318, %v373
        %v406 = vmul.f32 %v319, %v373
        %v407 = vmul.f32 %v320, %v373
        %v408 = vmul.f32 %v321, %v373
        %v409 = vmul.f32 %v322, %v373
        %v410 = vmul.f32 %v323, %v373
        %v411 = vmul.f32 %v324, %v373
        %v412 = vmul.f32 %v325, %v373
        %v413 = vpack.c.bf16 %v406, %v405
        %v414 = vpack.c.bf16 %v408, %v407
        %v415 = vpack.c.bf16 %v410, %v409
        %v416 = vpack.c.bf16 %v412, %v411
        %v417 = vmul.f32 %v326, %v404
        %v418 = vmul.f32 %v327, %v404
        %v419 = vmul.f32 %v328, %v404
        %v420 = vmul.f32 %v329, %v404
        %v421 = vmul.f32 %v330, %v404
        %v422 = vmul.f32 %v331, %v404
        %v423 = vmul.f32 %v332, %v404
        %v424 = vmul.f32 %v333, %v404
        %v425 = vpack.c.bf16 %v418, %v417
        %v426 = vpack.c.bf16 %v420, %v419
        %v427 = vpack.c.bf16 %v422, %v421
        %v428 = vpack.c.bf16 %v424, %v423
        %429 = vxpose.xlu0.c.b16.start [1/8] %v413, 128
        %430 = vxpose.xlu0.c.b16.cont [2/8] %v414, 128
        %431 = vxpose.xlu0.c.b16.cont [3/8] %v415, 128
        %432 = vxpose.xlu0.c.b16.cont [4/8] %v416, 128
        %433 = vxpose.xlu0.c.b16.cont [5/8] 0, 128
        %434 = vxpose.xlu0.c.b16.cont [6/8] 0, 128
        %435 = vxpose.xlu0.c.b16.cont [7/8] 0, 128
        %436 = vxpose.xlu0.c.b16.end [8/8] 0, 128
        %v437 = vpop.trf.xlu0
        %v438 = vpop.trf.xlu0
        %v439 = vpop.trf.xlu0
        %v440 = vpop.trf.xlu0
        %v441 = vpop.trf.xlu0
        %v442 = vpop.trf.xlu0
        %v443 = vpop.trf.xlu0
        %v444 = vpop.trf.xlu0
        %vm445 = vcmask 523264
        %v447 = vsel %vm445, %v437, 0
        %449 = vmatprep.subr.bf16.mxu0 0
        %450 = vmatpush1.bf16.msra.mxu0 %v425
        %451 = vmatprep.subr.bf16.mxu0 0
        %452 = vmatpush1.bf16.msra.mxu0 %v426
        %453 = vmatprep.subr.bf16.mxu0 0
        %454 = vmatpush1.bf16.msra.mxu0 %v427
        %455 = vmatprep.subr.bf16.mxu0 0
        %456 = vmatpush1.bf16.msra.mxu0 %v428
        %457 = vmatprep.subr.bf16.mxu0 0
        %458 = vmatpush1.bf16.msra.mxu0 0
        %459 = vmatprep.subr.bf16.mxu0 0
        %460 = vmatpush1.bf16.msra.mxu0 0
        %461 = vmatprep.subr.bf16.mxu0 0
        %462 = vmatpush1.bf16.msra.mxu0 0
        %463 = vmatprep.subr.bf16.mxu0 0
        %464 = vmatpush1.bf16.msra.mxu0 0
        %465 = vmatprep.subr.bf16.mxu0 0
        %466 = vmatpush1.bf16.msra.mxu0 0
        %467 = vmatprep.subr.bf16.mxu0 0
        %468 = vmatpush1.bf16.msra.mxu0 0
        %469 = vmatprep.subr.bf16.mxu0 0
        %470 = vmatpush1.bf16.msra.mxu0 0
        %471 = vmatprep.subr.bf16.mxu0 0
        %472 = vmatpush1.bf16.msra.mxu0 0
        %473 = vmatprep.subr.bf16.mxu0 0
        %474 = vmatpush1.bf16.msra.mxu0 0
        %475 = vmatprep.subr.bf16.mxu0 0
        %476 = vmatpush1.bf16.msra.mxu0 0
        %477 = vmatprep.subr.bf16.mxu0 0
        %478 = vmatpush1.bf16.msra.mxu0 0
        %479 = vmatprep.subr.bf16.mxu0 0
        %480 = vmatpush1.bf16.msra.mxu0 0
        %481 = vmatprep.mubr.bf16.mxu0 0
        %482 = vmatmul.mubr.bf16.gmra.mrb[0].mxu0 %v447
        %v483 = vpop.f32.mrb[0].mxu0
        %v484 = vadd.f32 0.0, %v483
        %v485 = vpop.f32.mrb[0].mxu0
        %v486 = vpop.f32.mrb[0].mxu0
        %v487 = vadd.f32 0.0, %v486
        %v488 = vpop.f32.mrb[0].mxu0
        %489 = vdwg.mxu0
        %v490 = vld [vmem:[%s3] sm:$0x1]
        %v492 = vlaneseq
        %v493 = vshrl.u32 %v492, 7
        %v494 = vsub.s32 0, %v493
        %v495 = vrot.slane %v490, %v494
        %v497 = vmul.f32 %v484, %v495
        %v498 = vmul.f32 %v487, %v495
        %v499 = vld [vmem:[%s4] sm:$0xff]
        %v500 = vld [vmem:[%s4 + $0x8] sm:$0xff]
        %v501 = vadd.f32 %v497, %v499
        %v502 = vadd.f32 %v498, %v500
        %v503 = vsel %vm350, %v501, -inf
        %504 = vmax.xlane.f32.xlu0 %v503
        %v505 = vpop.xlane.xlu0 %504
        %v506 = vsel %vm350, %v502, -inf
        %507 = vmax.xlane.f32.xlu0 %v506
        %v508 = vpop.xlane.xlu0 %507
        %v509 = vsub.f32 %v501, %v505
        %v510 = vsub.f32 %v502, %v508
        %v511 = vmul.f32 %v509, 1.442695
        %v512 = vpow.pop %v511
        %v513 = vmul.f32 %v510, 1.442695
        %v514 = vpow.pop %v513
        %v515 = vsel %vm350, %v512, 0.0
        %516 = vadd.xlane.f32.xlu0 %v515
        %v517 = vpop.xlane.xlu0 %516
        %v518 = vsel %vm350, %v514, 0.0
        %519 = vadd.xlane.f32.xlu0 %v518
        %v520 = vpop.xlane.xlu0 %519
        %v521 = vrcp.pop %v517
        %v522 = vrcp.pop %v520
        %v523 = vmul.f32 %v512, %v521
        %v524 = vmul.f32 %v514, %v522
        %v525 = vpack.c.bf16 %v335, %v334
        %v526 = vpack.c.bf16 %v337, %v336
        %v527 = vpack.c.bf16 %v339, %v338
        %v528 = vpack.c.bf16 %v341, %v340
        %v529 = vpack.c.bf16 %v524, %v523
        %v531 = vsel %vm350, %v525, 0
        %v534 = vsel %vm350, %v526, 0
        %v537 = vsel %vm350, %v527, 0
        %v540 = vsel %vm350, %v528, 0
        %v543 = vsel %vm350, %v529, 0
        %545 = vmatprep.subr.bf16.mxu0 0
        %546 = vmatpush1.bf16.xpose.msra.mxu0 %v543
        %547 = vmatprep.subr.bf16.mxu0 0
        %548 = vmatpush1.bf16.xpose.msra.mxu0 0
        %549 = vmatprep.subr.bf16.mxu0 0
        %550 = vmatpush1.bf16.xpose.msra.mxu0 0
        %551 = vmatprep.subr.bf16.mxu0 0
        %552 = vmatpush1.bf16.xpose.msra.mxu0 0
        %553 = vmatprep.subr.bf16.mxu0 0
        %554 = vmatpush1.bf16.xpose.msra.mxu0 0
        %555 = vmatprep.subr.bf16.mxu0 0
        %556 = vmatpush1.bf16.xpose.msra.mxu0 0
        %557 = vmatprep.subr.bf16.mxu0 0
        %558 = vmatpush1.bf16.xpose.msra.mxu0 0
        %559 = vmatprep.subr.bf16.mxu0 0
        %560 = vmatpush1.bf16.xpose.msra.mxu0 0
        %561 = vmatprep.subr.bf16.mxu0 0
        %562 = vmatpush1.bf16.xpose.msra.mxu0 0
        %563 = vmatprep.subr.bf16.mxu0 0
        %564 = vmatpush1.bf16.xpose.msra.mxu0 0
        %565 = vmatprep.subr.bf16.mxu0 0
        %566 = vmatpush1.bf16.xpose.msra.mxu0 0
        %567 = vmatprep.subr.bf16.mxu0 0
        %568 = vmatpush1.bf16.xpose.msra.mxu0 0
        %569 = vmatprep.subr.bf16.mxu0 0
        %570 = vmatpush1.bf16.xpose.msra.mxu0 0
        %571 = vmatprep.subr.bf16.mxu0 0
        %572 = vmatpush1.bf16.xpose.msra.mxu0 0
        %573 = vmatprep.subr.bf16.mxu0 0
        %574 = vmatpush1.bf16.xpose.msra.mxu0 0
        %575 = vmatprep.subr.bf16.mxu0 0
        %576 = vmatpush1.bf16.xpose.msra.mxu0 0
        %577 = vmatprep.mubr.bf16.mxu0 0
        %578 = vmatmul.mubr.bf16.gmra.mrb[0].mxu0 %v531
        %v579 = vpop.f32.mrb[0].mxu0
        %v580 = vadd.f32 0.0, %v579
        %v581 = vpop.f32.mrb[0].mxu0
        %v582 = vpop.f32.mrb[0].mxu0
        %v583 = vadd.f32 0.0, %v582
        %v584 = vpop.f32.mrb[0].mxu0
        %585 = vmatprep.mubr.bf16.mxu0 0
        %586 = vmatmul.mubr.bf16.gmra.mrb[0].mxu0 %v534
        %v587 = vpop.f32.mrb[0].mxu0
        %v588 = vadd.f32 0.0, %v587
        %v589 = vpop.f32.mrb[0].mxu0
        %v590 = vpop.f32.mrb[0].mxu0
        %v591 = vadd.f32 0.0, %v590
        %v592 = vpop.f32.mrb[0].mxu0
        %593 = vmatprep.mubr.bf16.mxu0 0
        %594 = vmatmul.mubr.bf16.gmra.mrb[0].mxu0 %v537
        %v595 = vpop.f32.mrb[0].mxu0
        %v596 = vadd.f32 0.0, %v595
        %v597 = vpop.f32.mrb[0].mxu0
        %v598 = vpop.f32.mrb[0].mxu0
        %v599 = vadd.f32 0.0, %v598
        %v600 = vpop.f32.mrb[0].mxu0
        %601 = vmatprep.mubr.bf16.mxu0 0
        %602 = vmatmul.mubr.bf16.gmra.mrb[0].mxu0 %v540
        %v603 = vpop.f32.mrb[0].mxu0
        %v604 = vadd.f32 0.0, %v603
        %v605 = vpop.f32.mrb[0].mxu0
        %v606 = vpop.f32.mrb[0].mxu0
        %v607 = vadd.f32 0.0, %v606
        %v608 = vpop.f32.mrb[0].mxu0
        %609 = vdwg.mxu0
        %v610 = vpack.c.bf16 %v583, %v580
        %v611 = vpack.c.bf16 %v591, %v588
        %v612 = vpack.c.bf16 %v599, %v596
        %v613 = vpack.c.bf16 %v607, %v604
        %v614 = vld [vmem:[%s5] sm:$0xf]
        %v615 = vld [vmem:[%s5 + $0x4] sm:$0xf]
        %v616 = vld [vmem:[%s6] sm:$0x1]
        %v618 = vlaneseq
        %v619 = vshrl.u32 %v618, 7
        %v620 = vsub.s32 0, %v619
        %v621 = vrot.slane %v616, %v620
        %v625 = vunpack.c.l.b16 %v614
        %v626 = vunpack.c.l.b16 %v615
        %v627 = vpack.c.b16 %v626, %v625
        %v630 = vsel %vm350, %v610, 0
        %v633 = vsel %vm350, %v611, 0
        %v636 = vsel %vm350, %v612, 0
        %v639 = vsel %vm350, %v613, 0
        %641 = vmatprep.subr.bf16.mxu0 0
        %642 = vmatpush1.bf16.msra.mxu0 %v627
        %643 = vmatprep.subr.bf16.mxu0 0
        %644 = vmatpush1.bf16.msra.mxu0 0
        %645 = vmatprep.subr.bf16.mxu0 0
        %646 = vmatpush1.bf16.msra.mxu0 0
        %647 = vmatprep.subr.bf16.mxu0 0
        %648 = vmatpush1.bf16.msra.mxu0 0
        %649 = vmatprep.subr.bf16.mxu0 0
        %650 = vmatpush1.bf16.msra.mxu0 0
        %651 = vmatprep.subr.bf16.mxu0 0
        %652 = vmatpush1.bf16.msra.mxu0 0
        %653 = vmatprep.subr.bf16.mxu0 0
        %654 = vmatpush1.bf16.msra.mxu0 0
        %655 = vmatprep.subr.bf16.mxu0 0
        %656 = vmatpush1.bf16.msra.mxu0 0
        %657 = vmatprep.subr.bf16.mxu0 0
        %658 = vmatpush1.bf16.msra.mxu0 0
        %659 = vmatprep.subr.bf16.mxu0 0
        %660 = vmatpush1.bf16.msra.mxu0 0
        %661 = vmatprep.subr.bf16.mxu0 0
        %662 = vmatpush1.bf16.msra.mxu0 0
        %663 = vmatprep.subr.bf16.mxu0 0
        %664 = vmatpush1.bf16.msra.mxu0 0
        %665 = vmatprep.subr.bf16.mxu0 0
        %666 = vmatpush1.bf16.msra.mxu0 0
        %667 = vmatprep.subr.bf16.mxu0 0
        %668 = vmatpush1.bf16.msra.mxu0 0
        %669 = vmatprep.subr.bf16.mxu0 0
        %670 = vmatpush1.bf16.msra.mxu0 0
        %671 = vmatprep.subr.bf16.mxu0 0
        %672 = vmatpush1.bf16.msra.mxu0 0
        %673 = vmatprep.mubr.bf16.mxu0 0
        %674 = vmatmul.mubr.bf16.gmra.mrb[0].mxu0 %v630
        %v675 = vpop.f32.mrb[0].mxu0
        %v676 = vadd.f32 %v621, %v675
        %v677 = vpop.f32.mrb[0].mxu0
        %v678 = vpop.f32.mrb[0].mxu0
        %v679 = vadd.f32 %v621, %v678
        %v680 = vpop.f32.mrb[0].mxu0
        %681 = vmatprep.mubr.bf16.mxu0 0
        %682 = vmatmul.mubr.bf16.gmra.mrb[0].mxu0 %v633
        %v683 = vpop.f32.mrb[0].mxu0
        %v684 = vadd.f32 %v621, %v683
        %v685 = vpop.f32.mrb[0].mxu0
        %v686 = vpop.f32.mrb[0].mxu0
        %v687 = vadd.f32 %v621, %v686
        %v688 = vpop.f32.mrb[0].mxu0
        %689 = vmatprep.mubr.bf16.mxu0 0
        %690 = vmatmul.mubr.bf16.gmra.mrb[0].mxu0 %v636
        %v691 = vpop.f32.mrb[0].mxu0
        %v692 = vadd.f32 %v621, %v691
        %v693 = vpop.f32.mrb[0].mxu0
        %v694 = vpop.f32.mrb[0].mxu0
        %v695 = vadd.f32 %v621, %v694
        %v696 = vpop.f32.mrb[0].mxu0
        %697 = vmatprep.mubr.bf16.mxu0 0
        %698 = vmatmul.mubr.bf16.gmra.mrb[0].mxu0 %v639
        %v699 = vpop.f32.mrb[0].mxu0
        %v700 = vadd.f32 %v621, %v699
        %v701 = vpop.f32.mrb[0].mxu0
        %v702 = vpop.f32.mrb[0].mxu0
        %v703 = vadd.f32 %v621, %v702
        %v704 = vpop.f32.mrb[0].mxu0
        %705 = vdwg.mxu0
        %706 = vst.msk [vmem:[%s301] sm:$0xff] %vm350, %v676
        %707 = vst.msk [vmem:[%s301 + $0x8] sm:$0xff] %vm350, %v679
        %708 = vst.msk [vmem:[%s301 + $0x10] sm:$0xff] %vm350, %v684
        %709 = vst.msk [vmem:[%s301 + $0x18] sm:$0xff] %vm350, %v687
        %710 = vst.msk [vmem:[%s301 + $0x20] sm:$0xff] %vm350, %v692
        %711 = vst.msk [vmem:[%s301 + $0x28] sm:$0xff] %vm350, %v695
        %712 = vst.msk [vmem:[%s301 + $0x30] sm:$0xff] %vm350, %v700
        %713 = vst.msk [vmem:[%s301 + $0x38] sm:$0xff] %vm350, %v703
        %s714 = sand.u32 %s191, 1
        %s715 = scalar_lea.sflag [#allocation3], %s714
        %s716 = sand.u32 %s191, 1
        %s717 = smul.addr %s716, 64
        %s718 = scalar_lea.vmem [#allocation2], %s717
        // Predicated region
        $region49: #{gated_attention_forward.5} parent=47 // pred_check
          %p719 = pneg %p201
        $region50: #{gated_attention_forward.5} parent=47 // pred_check_branch
          %721 = sbr.rel (%p719) target = $region52
        $region51: #{gated_attention_forward.5} parent=47 // pred_region
          %s723 = ssub.s32 1024, 1024
          %724 = vsyncadd %s715, %s723
          %s725 = smul.addr %s21, 8
          %s726 = smul.addr %s725, 128
          %s727 = scalar_lea.hbm %s7, %s726
          %s728 = sshll.u32 %s718, 4
          %s729 = int_to_ptr.vmem [resolvable:$true] %s728
          %734 = dma.vmem_to_hbm [thread:$0]  %s729, 1024, %s727, %s715, 128, 128, 8
        $region52: #{gated_attention_forward.5} parent=47 // pred_fallthru
          _
      $region48: #{gated_attention_forward.5} parent=5 // pred_fallthru
        _
      %p735 = scmp.le.s32.totalorder 2, %s16
      // Predicated region
      $region53: #{gated_attention_forward.5} parent=5 // pred_check
        %p736 = pneg %p735
      $region54: #{gated_attention_forward.5} parent=5 // pred_check_branch
        %738 = sbr.rel (%p736) target = $region56
      $region55: #{gated_attention_forward.5} parent=5 // pred_region
        %s739 = ssub.s32 %s16, 2
        // Predicated region
        $region57: #{gated_attention_forward.5} parent=55 // pred_check
          %p740 = pneg %p207
        $region58: #{gated_attention_forward.5} parent=55 // pred_check_branch
          %742 = sbr.rel (%p740) target = $region60
        $region59: #{gated_attention_forward.5} parent=55 // pred_region
          %s743 = sand.u32 %s192, 1
          %s744 = scalar_lea.sflag [#allocation3], %s743
          %s745 = sand.u32 %s192, 1
          %s746 = smul.addr %s745, 64
          %s747 = scalar_lea.vmem [#allocation2], %s746
          %748 = dma.done %s744, 1024
        $region60: #{gated_attention_forward.5} parent=55 // pred_fallthru
          _
      $region56: #{gated_attention_forward.5} parent=5 // pred_fallthru
        _
    $region6: #{gated_attention_forward.5} parent=1 // loop_footer
      %s20 = sadd.s32 1, %s16
    $region7: #{gated_attention_forward.5} parent=1 // loop_footer_branch
      %15 = sbr.rel target = $region3
    $region8: #{gated_attention_forward.5} parent=1 // loop_exit
      _
    %749 = vsyncpa [#allocation3], 1
    %s750 = scalar_lea.sflag [#allocation3], 1
    %751 = vsyncpa %s750, 1

// kernel: gated_attention_forward.4
$region0: #{gated_attention_forward.4}
  #allocation0 [shape = 'u32[]', space=smem, size = 0x4, offset = 0x4, fixed_abs, tag = 'smem constant byte address 0x4 - core index']
  #allocation1 [shape = 'u32[144,128]{1,0:T(1,128)}', space=vmem, size = 0x12000, scoped, tag = 'internal scratch']
  #allocation2 [shape = 'f32[10,10,16]{2,1,0:T(8,128)}', space=vmem, size = 0x14000, scoped, tag = 'scratch operand']
  #allocation3 [shape = 'f32[10,10,16]{2,1,0:T(8,128)}', space=vmem, size = 0x14000, scoped, tag = 'scratch operand']
  %s0 = inlined_call_operand.vmem [shape: f32[2,8,8,16], index: 0, kind: input, shape index: {}, may-alias: {0,1,2}]
  %s1 = inlined_call_operand.vmem [shape: f32[2,8,8,16], index: 1, kind: input, shape index: {}, may-alias: {0,1,2}]
  %s2 = inlined_call_operand.vmem [shape: f32[2,8,8,16], index: 2, kind: input, shape index: {}, may-alias: {0,1,2}]
  %s3 = inlined_call_operand.vmem [shape: bf16[2,16,16], index: 3, kind: input, shape index: {}]
  %s4 = inlined_call_operand.vmem [shape: f32[2,1,16], index: 4, kind: input, shape index: {}]
  %s5 = inlined_call_operand.vmem [shape: f32[2,3,3,16], index: 5, kind: input, shape index: {}]
  %s6 = inlined_call_operand.vmem [shape: f32[2,1,16], index: 6, kind: input, shape index: {}]
  %s7 = inlined_call_operand.vmem [shape: f32[2,8,8,16], index: 7, kind: output, shape index: {0}]
  %s8 = inlined_call_operand.vmem [shape: f32[2,8,8,16], index: 8, kind: output, shape index: {1}]
  %9 = xla_tuple %s7, %s8
  %s10 = sld [smem:[#allocation0]]
  $region69: #{gated_attention_forward.4} parent=0
    _
  %s12 = ssub.s32 1, %s10
  %s13 = scalar_select 0, %s12, %s10
  loop: start=0, step=1, limit=4
  $region2: #{gated_attention_forward.4} parent=0 // loop_pre_header
    _
  $region3: #{gated_attention_forward.4} parent=0 // loop_header
    %s15 = sphi 0, %s19
    %p16 = scmp.ge.s32.totalorder %s15, 4
    %s22 = sphi 0, %s34
    %s23 = sphi 0, %s30
    %s24 = sphi 0, %s22
    %s25 = sphi 0, %s23
    %s26 = sphi 0, %s24
    %s27 = sphi 0, %s25
    %s39 = sphi 0, %s41
    %s42 = sphi 0, %s39
    %s43 = sphi 0, %s42
    %s59 = sphi 0, %s43
    %s75 = sphi 0, %s77
    %s78 = sphi 0, %s75
    %s79 = sphi 0, %s78
    %s95 = sphi 0, %s79
    %s111 = sphi 0, %s113
    %s114 = sphi 0, %s111
    %s115 = sphi 0, %s114
    %s131 = sphi 0, %s115
    %s135 = sphi 0, %s135
    %s137 = sphi 0, %s135
    %s138 = sphi 0, %s137
    %s152 = sphi 0, %s138
    %s156 = sphi 0, %s156
    %s158 = sphi 0, %s156
    %s159 = sphi 0, %s158
    %s173 = sphi 0, %s159
    %s177 = sphi 0, %s177
    %s179 = sphi 0, %s177
    %s180 = sphi 0, %s179
    %s194 = sphi 0, %s180
    %s198 = sphi 0, %s198
    %s200 = sphi 0, %s198
    %s201 = sphi 0, %s200
    %s215 = sphi 0, %s201
    %s223 = sphi 0, %s225
    %s226 = sphi 0, %s223
    %s227 = sphi 0, %s226
    %s243 = sphi 0, %s227
    %s251 = sphi 0, %s253
    %s254 = sphi 0, %s251
    %s255 = sphi 0, %s254
    %s271 = sphi 0, %s255
  $region4: #{gated_attention_forward.4} parent=0 // loop_header_branch
    %18 = sbr.rel (%p16) target = $region8
  $region5: #{gated_attention_forward.4} parent=0 // loop_body
    %s20 = ssub.s32 %s15, 1
    %s21 = ssub.s32 %s15, 2
    %s28 = sadd.s32 1, %s23
    %p29 = scmp.ge.s32.totalorder %s28, 1
    %s30 = scalar_select %p29, 0, %s28
    %s31 = sadd.s32 1, %s22
    %s32 = scalar_select %p29, %s31, %s22
    %p33 = scmp.ge.s32.totalorder %s32, 2
    %s34 = scalar_select %p33, 0, %s32
    %s35 = ssub.s32 %s22, %s34
    %s36 = ssub.s32 %s23, %s30
    %s37 = sor.u32 %s35, %s36
    %p38 = scmp.eq.s32.totalorder %s37, 0
    %s40 = sadd.s32 %s39, 1
    %s41 = scalar_select %p38, %s39, %s40
    %p44 = pneg %p38
    %p45 = scmp.eq.s32.totalorder %s15, 1
    %p46 = por %p44, %p45
    %p47 = scmp.ne.s32.totalorder %s39, %s42
    %p48 = scmp.eq.s32.totalorder %s15, 0
    %p49 = por %p47, %p48
    %p50 = scmp.ne.s32.totalorder %s39, %s42
    %p51 = scmp.eq.s32.totalorder %s20, 1
    %p52 = por %p50, %p51
    %p53 = scmp.ne.s32.totalorder %s42, %s43
    %p54 = scmp.eq.s32.totalorder %s20, 0
    %p55 = por %p53, %p54
    %p56 = scmp.ne.s32.totalorder %s42, %s43
    %p57 = scmp.eq.s32.totalorder %s21, 1
    %p58 = por %p56, %p57
    %p60 = scmp.ne.s32.totalorder %s43, %s59
    %p61 = scmp.eq.s32.totalorder %s21, 0
    %p62 = por %p60, %p61
    %s63 = smul.u32 %s23, 8
    %s64 = ssub.s32 %s63, 1
    %p65 = scmp.gt.s32.totalorder %s64, 0
    %s66 = scalar_select %p65, %s64, 0
    %s67 = smul.u32 %s30, 8
    %s68 = ssub.s32 %s67, 1
    %p69 = scmp.gt.s32.totalorder %s68, 0
    %s70 = scalar_select %p69, %s68, 0
    %s71 = ssub.s32 %s22, %s34
    %s72 = ssub.s32 %s66, %s70
    %s73 = sor.u32 %s71, %s72
    %p74 = scmp.eq.s32.totalorder %s73, 0
    %s76 = sadd.s32 %s75, 1
    %s77 = scalar_select %p74, %s75, %s76
    %p80 = pneg %p74
    %p81 = scmp.eq.s32.totalorder %s15, 1
    %p82 = por %p80, %p81
    %p83 = scmp.ne.s32.totalorder %s75, %s78
    %p84 = scmp.eq.s32.totalorder %s15, 0
    %p85 = por %p83, %p84
    %p86 = scmp.ne.s32.totalorder %s75, %s78
    %p87 = scmp.eq.s32.totalorder %s20, 1
    %p88 = por %p86, %p87
    %p89 = scmp.ne.s32.totalorder %s78, %s79
    %p90 = scmp.eq.s32.totalorder %s20, 0
    %p91 = por %p89, %p90
    %p92 = scmp.ne.s32.totalorder %s78, %s79
    %p93 = scmp.eq.s32.totalorder %s21, 1
    %p94 = por %p92, %p93
    %p96 = scmp.ne.s32.totalorder %s79, %s95
    %p97 = scmp.eq.s32.totalorder %s21, 0
    %p98 = por %p96, %p97
    %s99 = smul.u32 %s23, 8
    %s100 = sadd.s32 %s99, 8
    %p101 = scmp.lt.s32.totalorder %s100, 7
    %s102 = scalar_select %p101, %s100, 7
    %s103 = smul.u32 %s30, 8
    %s104 = sadd.s32 %s103, 8
    %p105 = scmp.lt.s32.totalorder %s104, 7
    %s106 = scalar_select %p105, %s104, 7
    %s107 = ssub.s32 %s22, %s34
    %s108 = ssub.s32 %s102, %s106
    %s109 = sor.u32 %s107, %s108
    %p110 = scmp.eq.s32.totalorder %s109, 0
    %s112 = sadd.s32 %s111, 1
    %s113 = scalar_select %p110, %s111, %s112
    %p116 = pneg %p110
    %p117 = scmp.eq.s32.totalorder %s15, 1
    %p118 = por %p116, %p117
    %p119 = scmp.ne.s32.totalorder %s111, %s114
    %p120 = scmp.eq.s32.totalorder %s15, 0
    %p121 = por %p119, %p120
    %p122 = scmp.ne.s32.totalorder %s111, %s114
    %p123 = scmp.eq.s32.totalorder %s20, 1
    %p124 = por %p122, %p123
    %p125 = scmp.ne.s32.totalorder %s114, %s115
    %p126 = scmp.eq.s32.totalorder %s20, 0
    %p127 = por %p125, %p126
    %p128 = scmp.ne.s32.totalorder %s114, %s115
    %p129 = scmp.eq.s32.totalorder %s21, 1
    %p130 = por %p128, %p129
    %p132 = scmp.ne.s32.totalorder %s115, %s131
    %p133 = scmp.eq.s32.totalorder %s21, 0
    %p134 = por %p132, %p133
    %s136 = sadd.s32 %s135, 1
    %p139 = scmp.eq.s32.totalorder %s15, 1
    %p140 = scmp.ne.s32.totalorder %s135, %s137
    %p141 = scmp.eq.s32.totalorder %s15, 0
    %p142 = por %p140, %p141
    %p143 = scmp.ne.s32.totalorder %s135, %s137
    %p144 = scmp.eq.s32.totalorder %s20, 1
    %p145 = por %p143, %p144
    %p146 = scmp.ne.s32.totalorder %s137, %s138
    %p147 = scmp.eq.s32.totalorder %s20, 0
    %p148 = por %p146, %p147
    %p149 = scmp.ne.s32.totalorder %s137, %s138
    %p150 = scmp.eq.s32.totalorder %s21, 1
    %p151 = por %p149, %p150
    %p153 = scmp.ne.s32.totalorder %s138, %s152
    %p154 = scmp.eq.s32.totalorder %s21, 0
    %p155 = por %p153, %p154
    %s157 = sadd.s32 %s156, 1
    %p160 = scmp.eq.s32.totalorder %s15, 1
    %p161 = scmp.ne.s32.totalorder %s156, %s158
    %p162 = scmp.eq.s32.totalorder %s15, 0
    %p163 = por %p161, %p162
    %p164 = scmp.ne.s32.totalorder %s156, %s158
    %p165 = scmp.eq.s32.totalorder %s20, 1
    %p166 = por %p164, %p165
    %p167 = scmp.ne.s32.totalorder %s158, %s159
    %p168 = scmp.eq.s32.totalorder %s20, 0
    %p169 = por %p167, %p168
    %p170 = scmp.ne.s32.totalorder %s158, %s159
    %p171 = scmp.eq.s32.totalorder %s21, 1
    %p172 = por %p170, %p171
    %p174 = scmp.ne.s32.totalorder %s159, %s173
    %p175 = scmp.eq.s32.totalorder %s21, 0
    %p176 = por %p174, %p175
    %s178 = sadd.s32 %s177, 1
    %p181 = scmp.eq.s32.totalorder %s15, 1
    %p182 = scmp.ne.s32.totalorder %s177, %s179
    %p183 = scmp.eq.s32.totalorder %s15, 0
    %p184 = por %p182, %p183
    %p185 = scmp.ne.s32.totalorder %s177, %s179
    %p186 = scmp.eq.s32.totalorder %s20, 1
    %p187 = por %p185, %p186
    %p188 = scmp.ne.s32.totalorder %s179, %s180
    %p189 = scmp.eq.s32.totalorder %s20, 0
    %p190 = por %p188, %p189
    %p191 = scmp.ne.s32.totalorder %s179, %s180
    %p192 = scmp.eq.s32.totalorder %s21, 1
    %p193 = por %p191, %p192
    %p195 = scmp.ne.s32.totalorder %s180, %s194
    %p196 = scmp.eq.s32.totalorder %s21, 0
    %p197 = por %p195, %p196
    %s199 = sadd.s32 %s198, 1
    %p202 = scmp.eq.s32.totalorder %s15, 1
    %p203 = scmp.ne.s32.totalorder %s198, %s200
    %p204 = scmp.eq.s32.totalorder %s15, 0
    %p205 = por %p203, %p204
    %p206 = scmp.ne.s32.totalorder %s198, %s200
    %p207 = scmp.eq.s32.totalorder %s20, 1
    %p208 = por %p206, %p207
    %p209 = scmp.ne.s32.totalorder %s200, %s201
    %p210 = scmp.eq.s32.totalorder %s20, 0
    %p211 = por %p209, %p210
    %p212 = scmp.ne.s32.totalorder %s200, %s201
    %p213 = scmp.eq.s32.totalorder %s21, 1
    %p214 = por %p212, %p213
    %p216 = scmp.ne.s32.totalorder %s201, %s215
    %p217 = scmp.eq.s32.totalorder %s21, 0
    %p218 = por %p216, %p217
    %s219 = ssub.s32 %s22, %s34
    %s220 = ssub.s32 %s23, %s30
    %s221 = sor.u32 %s219, %s220
    %p222 = scmp.eq.s32.totalorder %s221, 0
    %s224 = sadd.s32 %s223, 1
    %s225 = scalar_select %p222, %s223, %s224
    %p228 = pneg %p222
    %p229 = scmp.eq.s32.totalorder %s15, 1
    %p230 = por %p228, %p229
    %p231 = scmp.ne.s32.totalorder %s223, %s226
    %p232 = scmp.eq.s32.totalorder %s15, 0
    %p233 = por %p231, %p232
    %p234 = scmp.ne.s32.totalorder %s223, %s226
    %p235 = scmp.eq.s32.totalorder %s20, 1
    %p236 = por %p234, %p235
    %p237 = scmp.ne.s32.totalorder %s226, %s227
    %p238 = scmp.eq.s32.totalorder %s20, 0
    %p239 = por %p237, %p238
    %p240 = scmp.ne.s32.totalorder %s226, %s227
    %p241 = scmp.eq.s32.totalorder %s21, 1
    %p242 = por %p240, %p241
    %p244 = scmp.ne.s32.totalorder %s227, %s243
    %p245 = scmp.eq.s32.totalorder %s21, 0
    %p246 = por %p244, %p245
    %s247 = ssub.s32 %s22, %s34
    %s248 = ssub.s32 %s23, %s30
    %s249 = sor.u32 %s247, %s248
    %p250 = scmp.eq.s32.totalorder %s249, 0
    %s252 = sadd.s32 %s251, 1
    %s253 = scalar_select %p250, %s251, %s252
    %p256 = pneg %p250
    %p257 = scmp.eq.s32.totalorder %s15, 1
    %p258 = por %p256, %p257
    %p259 = scmp.ne.s32.totalorder %s251, %s254
    %p260 = scmp.eq.s32.totalorder %s15, 0
    %p261 = por %p259, %p260
    %p262 = scmp.ne.s32.totalorder %s251, %s254
    %p263 = scmp.eq.s32.totalorder %s20, 1
    %p264 = por %p262, %p263
    %p265 = scmp.ne.s32.totalorder %s254, %s255
    %p266 = scmp.eq.s32.totalorder %s20, 0
    %p267 = por %p265, %p266
    %p268 = scmp.ne.s32.totalorder %s254, %s255
    %p269 = scmp.eq.s32.totalorder %s21, 1
    %p270 = por %p268, %p269
    %p272 = scmp.ne.s32.totalorder %s255, %s271
    %p273 = scmp.eq.s32.totalorder %s21, 0
    %p274 = por %p272, %p273
    %p275 = scmp.le.s32.totalorder 1, %s15
    %p276 = scmp.lt.s32.totalorder %s15, 3
    %p277 = pnand %p275, %p276
    %p278 = pneg %p277
    // Predicated region
    $region9: #{gated_attention_forward.4} parent=5 // pred_check
      _
    $region10: #{gated_attention_forward.4} parent=5 // pred_check_branch
      %280 = sbr.rel (%p277) target = $region12
    $region11: #{gated_attention_forward.4} parent=5 // pred_region
      %s281 = ssub.s32 %s15, 1
      // Predicated region
      $region13: #{gated_attention_forward.4} parent=11 // pred_check
        %p282 = pneg %p148
      $region14: #{gated_attention_forward.4} parent=11 // pred_check_branch
        %284 = sbr.rel (%p282) target = $region16
      $region15: #{gated_attention_forward.4} parent=11 // pred_region
        _
      $region16: #{gated_attention_forward.4} parent=11 // pred_fallthru
        _
      // Predicated region
      $region17: #{gated_attention_forward.4} parent=11 // pred_check
        %p285 = pneg %p169
      $region18: #{gated_attention_forward.4} parent=11 // pred_check_branch
        %287 = sbr.rel (%p285) target = $region20
      $region19: #{gated_attention_forward.4} parent=11 // pred_region
        _
      $region20: #{gated_attention_forward.4} parent=11 // pred_fallthru
        _
      // Predicated region
      $region21: #{gated_attention_forward.4} parent=11 // pred_check
        %p288 = pneg %p190
      $region22: #{gated_attention_forward.4} parent=11 // pred_check_branch
        %290 = sbr.rel (%p288) target = $region24
      $region23: #{gated_attention_forward.4} parent=11 // pred_region
        _
      $region24: #{gated_attention_forward.4} parent=11 // pred_fallthru
        _
      // Predicated region
      $region25: #{gated_attention_forward.4} parent=11 // pred_check
        %p291 = pneg %p211
      $region26: #{gated_attention_forward.4} parent=11 // pred_check_branch
        %293 = sbr.rel (%p291) target = $region28
      $region27: #{gated_attention_forward.4} parent=11 // pred_region
        _
      $region28: #{gated_attention_forward.4} parent=11 // pred_fallthru
        _
    $region12: #{gated_attention_forward.4} parent=5 // pred_fallthru
      _
    %p294 = scmp.lt.s32.totalorder %s15, 2
    // Predicated region
    $region29: #{gated_attention_forward.4} parent=5 // pred_check
      %p295 = pneg %p294
    $region30: #{gated_attention_forward.4} parent=5 // pred_check_branch
      %297 = sbr.rel (%p295) target = $region32
    $region31: #{gated_attention_forward.4} parent=5 // pred_region
      // Predicated region
      $region33: #{gated_attention_forward.4} parent=31 // pred_check
        %p298 = pneg %p49
      $region34: #{gated_attention_forward.4} parent=31 // pred_check_branch
        %300 = sbr.rel (%p298) target = $region36
      $region35: #{gated_attention_forward.4} parent=31 // pred_region
        %s301 = smul.u32 8, %s23
        %p302 = scmp.lt.s32.totalorder %s22, 1
        %s303 = scalar_select %p302, %s22, 1
        %p304 = scmp.lt.s32.totalorder %s301, 7
        %s305 = scalar_select %p304, %s301, 7
        %s306 = smul.addr %s303, 8
        %s307 = sadd.s32 %s305, %s306
        %s308 = smul.addr %s307, 8
        %s309 = scalar_lea.vmem %s0, %s308
        %s310 = smul.u32 8, %s23
      $region36: #{gated_attention_forward.4} parent=31 // pred_fallthru
        _
      // Predicated region
      $region37: #{gated_attention_forward.4} parent=31 // pred_check
        %p311 = pneg %p85
      $region38: #{gated_attention_forward.4} parent=31 // pred_check_branch
        %313 = sbr.rel (%p311) target = $region40
      $region39: #{gated_attention_forward.4} parent=31 // pred_region
        %s314 = smul.u32 %s23, 8
        %s315 = ssub.s32 %s314, 1
        %p316 = scmp.gt.s32.totalorder %s315, 0
        %s317 = scalar_select %p316, %s315, 0
        %p318 = scmp.lt.s32.totalorder %s22, 1
        %s319 = scalar_select %p318, %s22, 1
        %p320 = scmp.lt.s32.totalorder %s317, 7
        %s321 = scalar_select %p320, %s317, 7
        %s322 = smul.addr %s319, 8
        %s323 = sadd.s32 %s321, %s322
        %s324 = smul.addr %s323, 8
        %s325 = scalar_lea.vmem %s1, %s324
        %s326 = smul.u32 %s23, 8
        %s327 = ssub.s32 %s326, 1
        %p328 = scmp.gt.s32.totalorder %s327, 0
        %s329 = scalar_select %p328, %s327, 0
      $region40: #{gated_attention_forward.4} parent=31 // pred_fallthru
        _
      // Predicated region
      $region41: #{gated_attention_forward.4} parent=31 // pred_check
        %p330 = pneg %p121
      $region42: #{gated_attention_forward.4} parent=31 // pred_check_branch
        %332 = sbr.rel (%p330) target = $region44
      $region43: #{gated_attention_forward.4} parent=31 // pred_region
        %s333 = smul.u32 %s23, 8
        %s334 = sadd.s32 %s333, 8
        %p335 = scmp.lt.s32.totalorder %s334, 7
        %s336 = scalar_select %p335, %s334, 7
        %p337 = scmp.lt.s32.totalorder %s22, 1
        %s338 = scalar_select %p337, %s22, 1
        %p339 = scmp.lt.s32.totalorder %s336, 7
        %s340 = scalar_select %p339, %s336, 7
        %s341 = smul.addr %s338, 8
        %s342 = sadd.s32 %s340, %s341
        %s343 = smul.addr %s342, 8
        %s344 = scalar_lea.vmem %s2, %s343
        %s345 = smul.u32 %s23, 8
        %s346 = sadd.s32 %s345, 8
        %p347 = scmp.lt.s32.totalorder %s346, 7
        %s348 = scalar_select %p347, %s346, 7
      $region44: #{gated_attention_forward.4} parent=31 // pred_fallthru
        _
    $region32: #{gated_attention_forward.4} parent=5 // pred_fallthru
      _
    %p349 = scmp.le.s32.totalorder 1, %s15
    %p350 = scmp.lt.s32.totalorder %s15, 3
    %p351 = pnand %p349, %p350
    %p352 = pneg %p351
    // Predicated region
    $region45: #{gated_attention_forward.4} parent=5 // pred_check
      _
    $region46: #{gated_attention_forward.4} parent=5 // pred_check_branch
      %354 = sbr.rel (%p351) target = $region48
    $region47: #{gated_attention_forward.4} parent=5 // pred_region
      %s355 = ssub.s32 %s15, 1
      %s356 = smul.u32 8, %s25
      %p357 = scmp.lt.s32.totalorder %s24, 1
      %s358 = scalar_select %p357, %s24, 1
      %p359 = scmp.lt.s32.totalorder %s356, 7
      %s360 = scalar_select %p359, %s356, 7
      %s361 = smul.addr %s358, 8
      %s362 = sadd.s32 %s360, %s361
      %s363 = smul.addr %s362, 8
      %s364 = scalar_lea.vmem %s0, %s363
      %p365 = pneg %p55
      %p366 = pneg %p52
      %s367 = smul.u32 %s25, 8
      %s368 = ssub.s32 %s367, 1
      %p369 = scmp.gt.s32.totalorder %s368, 0
      %s370 = scalar_select %p369, %s368, 0
      %p371 = scmp.lt.s32.totalorder %s24, 1
      %s372 = scalar_select %p371, %s24, 1
      %p373 = scmp.lt.s32.totalorder %s370, 7
      %s374 = scalar_select %p373, %s370, 7
      %s375 = smul.addr %s372, 8
      %s376 = sadd.s32 %s374, %s375
      %s377 = smul.addr %s376, 8
      %s378 = scalar_lea.vmem %s1, %s377
      %p379 = pneg %p91
      %p380 = pneg %p88
      %s381 = smul.u32 %s25, 8
      %s382 = sadd.s32 %s381, 8
      %p383 = scmp.lt.s32.totalorder %s382, 7
      %s384 = scalar_select %p383, %s382, 7
      %p385 = scmp.lt.s32.totalorder %s24, 1
      %s386 = scalar_select %p385, %s24, 1
      %p387 = scmp.lt.s32.totalorder %s384, 7
      %s388 = scalar_select %p387, %s384, 7
      %s389 = smul.addr %s386, 8
      %s390 = sadd.s32 %s388, %s389
      %s391 = smul.addr %s390, 8
      %s392 = scalar_lea.vmem %s2, %s391
      %p393 = pneg %p127
      %p394 = pneg %p124
      %p395 = pneg %p148
      %p396 = pneg %p145
      %p397 = pneg %p169
      %p398 = pneg %p166
      %p399 = pneg %p190
      %p400 = pneg %p187
      %p401 = pneg %p211
      %p402 = pneg %p208
      %p403 = pneg %p239
      %p404 = pneg %p236
      %s405 = smul.u32 8, %s25
      %p406 = scmp.lt.s32.totalorder %s24, 1
      %s407 = scalar_select %p406, %s24, 1
      %p408 = scmp.lt.s32.totalorder %s405, 7
      %s409 = scalar_select %p408, %s405, 7
      %s410 = smul.addr %s407, 8
      %s411 = sadd.s32 %s409, %s410
      %s412 = smul.addr %s411, 8
      %s413 = scalar_lea.vmem %s7, %s412
      %p414 = pneg %p267
      %p415 = pneg %p264
      %s416 = smul.u32 8, %s25
      %p417 = scmp.lt.s32.totalorder %s24, 1
      %s418 = scalar_select %p417, %s24, 1
      %p419 = scmp.lt.s32.totalorder %s416, 7
      %s420 = scalar_select %p419, %s416, 7
      %s421 = smul.addr %s418, 8
      %s422 = sadd.s32 %s420, %s421
      %s423 = smul.addr %s422, 8
      %s424 = scalar_lea.vmem %s8, %s423
      %s425 = smul.u32 8, %s25
      %p426 = scmp.lt.s32.totalorder %s24, 1
      %s427 = scalar_select %p426, %s24, 1
      %p428 = scmp.lt.s32.totalorder %s425, 7
      %s429 = scalar_select %p428, %s425, 7
      %s430 = smul.addr %s427, 8
      %s431 = sadd.s32 %s429, %s430
      %s432 = smul.addr %s431, 8
      %s433 = scalar_lea.vmem %s0, %s432
      %s434 = smul.u32 8, %s25
      %s435 = smul.u32 %s25, 8
      %s436 = ssub.s32 %s435, 1
      %p437 = scmp.gt.s32.totalorder %s436, 0
      %s438 = scalar_select %p437, %s436, 0
      %p439 = scmp.lt.s32.totalorder %s24, 1
      %s440 = scalar_select %p439, %s24, 1
      %p441 = scmp.lt.s32.totalorder %s438, 7
      %s442 = scalar_select %p441, %s438, 7
      %s443 = smul.addr %s440, 8
      %s444 = sadd.s32 %s442, %s443
      %s445 = smul.addr %s444, 8
      %s446 = scalar_lea.vmem %s1, %s445
      %s447 = smul.u32 %s25, 8
      %s448 = ssub.s32 %s447, 1
      %p449 = scmp.gt.s32.totalorder %s448, 0
      %s450 = scalar_select %p449, %s448, 0
      %s451 = smul.u32 %s25, 8
      %s452 = sadd.s32 %s451, 8
      %p453 = scmp.lt.s32.totalorder %s452, 7
      %s454 = scalar_select %p453, %s452, 7
      %p455 = scmp.lt.s32.totalorder %s24, 1
      %s456 = scalar_select %p455, %s24, 1
      %p457 = scmp.lt.s32.totalorder %s454, 7
      %s458 = scalar_select %p457, %s454, 7
      %s459 = smul.addr %s456, 8
      %s460 = sadd.s32 %s458, %s459
      %s461 = smul.addr %s460, 8
      %s462 = scalar_lea.vmem %s2, %s461
      %s463 = smul.u32 %s25, 8
      %s464 = sadd.s32 %s463, 8
      %p465 = scmp.lt.s32.totalorder %s464, 7
      %s466 = scalar_select %p465, %s464, 7
      %s467 = smul.u32 8, %s25
      %p468 = scmp.lt.s32.totalorder %s24, 1
      %s469 = scalar_select %p468, %s24, 1
      %p470 = scmp.lt.s32.totalorder %s467, 7
      %s471 = scalar_select %p470, %s467, 7
      %s472 = smul.addr %s469, 8
      %s473 = sadd.s32 %s471, %s472
      %s474 = smul.addr %s473, 8
      %s475 = scalar_lea.vmem %s7, %s474
      %s476 = smul.u32 8, %s25
      %s477 = smul.u32 8, %s25
      %p478 = scmp.lt.s32.totalorder %s24, 1
      %s479 = scalar_select %p478, %s24, 1
      %p480 = scmp.lt.s32.totalorder %s477, 7
      %s481 = scalar_select %p480, %s477, 7
      %s482 = smul.addr %s479, 8
      %s483 = sadd.s32 %s481, %s482
      %s484 = smul.addr %s483, 8
      %s485 = scalar_lea.vmem %s8, %s484
      %s486 = smul.u32 8, %s25
      %p488 = scmp.eq.s32.totalorder %s25, 0
      %v489 = vld [vmem:[%s433] sm:$0xff]
      %v490 = vld [vmem:[%s433 + $0x8] sm:$0xff]
      %v491 = vld [vmem:[%s433 + $0x10] sm:$0xff]
      %v492 = vld [vmem:[%s433 + $0x18] sm:$0xff]
      %v493 = vld [vmem:[%s433 + $0x20] sm:$0xff]
      %v494 = vld [vmem:[%s433 + $0x28] sm:$0xff]
      %v495 = vld [vmem:[%s433 + $0x30] sm:$0xff]
      %v496 = vld [vmem:[%s433 + $0x38] sm:$0xff]
      %v497 = vld [vmem:[%s446] sm:$0xff]
      %v498 = vld [vmem:[%s462] sm:$0xff]
      %v499 = vld [vmem:[%s3] sm:$0xf]
      %v500 = vld [vmem:[%s3 + $0x4] sm:$0xf]
      %v501 = vld [vmem:[%s4] sm:$0x1]
      %s502 = scalar_lea.vmem %s3, 8
      %v503 = vld [vmem:[%s502] sm:$0xf]
      %v504 = vld [vmem:[%s502 + $0x4] sm:$0xf]
      %s505 = scalar_lea.vmem %s4, 1
      %v506 = vld [vmem:[%s505] sm:$0x1]
      %vm507 = vcmask 130048
      %508 = vst.msk [vmem:[#allocation2] sm:$0xff] %vm507, 0.0
      %vm509 = vcmask 123904
      %510 = vst.msk [vmem:[#allocation2 + $0x8] sm:$0x3] %vm509, 0.0
      %511 = vst.msk [vmem:[#allocation2 + $0x10] sm:$0xff] %vm507, 0.0
      %512 = vst.msk [vmem:[#allocation2 + $0x18] sm:$0x3] %vm509, 0.0
      %513 = vst.msk [vmem:[#allocation2 + $0x20] sm:$0xff] %vm507, 0.0
      %514 = vst.msk [vmem:[#allocation2 + $0x28] sm:$0x3] %vm509, 0.0
      %515 = vst.msk [vmem:[#allocation2 + $0x30] sm:$0xff] %vm507, 0.0
      %516 = vst.msk [vmem:[#allocation2 + $0x38] sm:$0x3] %vm509, 0.0
      %517 = vst.msk [vmem:[#allocation2 + $0x40] sm:$0xff] %vm507, 0.0
      %518 = vst.msk [vmem:[#allocation2 + $0x48] sm:$0x3] %vm509, 0.0
      %519 = vst.msk [vmem:[#allocation2 + $0x50] sm:$0xff] %vm507, 0.0
      %520 = vst.msk [vmem:[#allocation2 + $0x58] sm:$0x3] %vm509, 0.0
      %521 = vst.msk [vmem:[#allocation2 + $0x60] sm:$0xff] %vm507, 0.0
      %522 = vst.msk [vmem:[#allocation2 + $0x68] sm:$0x3] %vm509, 0.0
      %523 = vst.msk [vmem:[#allocation2 + $0x70] sm:$0xff] %vm507, 0.0
      %524 = vst.msk [vmem:[#allocation2 + $0x78] sm:$0x3] %vm509, 0.0
      %525 = vst.msk [vmem:[#allocation2 + $0x80] sm:$0xff] %vm507, 0.0
      %526 = vst.msk [vmem:[#allocation2 + $0x88] sm:$0x3] %vm509, 0.0
      %527 = vst.msk [vmem:[#allocation2 + $0x90] sm:$0xff] %vm507, 0.0
      %528 = vst.msk [vmem:[#allocation2 + $0x98] sm:$0x3] %vm509, 0.0
      %v529 = vpack.c.bf16 %v490, %v489
      %v530 = vpack.c.bf16 %v492, %v491
      %v531 = vpack.c.bf16 %v494, %v493
      %v532 = vpack.c.bf16 %v496, %v495
      %v535 = vunpack.c.l.b16 %v499
      %v536 = vunpack.c.l.b16 %v500
      %v537 = vpack.c.b16 %v536, %v535
      %v540 = vsel %vm507, %v529, 0
      %v543 = vsel %vm507, %v530, 0
      %v546 = vsel %vm507, %v531, 0
      %v549 = vsel %vm507, %v532, 0
      %551 = vmatprep.subr.bf16.mxu0 0
      %552 = vmatpush1.bf16.msra.mxu0 %v537
      %553 = vmatprep.subr.bf16.mxu0 0
      %554 = vmatpush1.bf16.msra.mxu0 0
      %555 = vmatprep.subr.bf16.mxu0 0
      %556 = vmatpush1.bf16.msra.mxu0 0
      %557 = vmatprep.subr.bf16.mxu0 0
      %558 = vmatpush1.bf16.msra.mxu0 0
      %559 = vmatprep.subr.bf16.mxu0 0
      %560 = vmatpush1.bf16.msra.mxu0 0
      %561 = vmatprep.subr.bf16.mxu0 0
      %562 = vmatpush1.bf16.msra.mxu0 0
      %563 = vmatprep.subr.bf16.mxu0 0
      %564 = vmatpush1.bf16.msra.mxu0 0
      %565 = vmatprep.subr.bf16.mxu0 0
      %566 = vmatpush1.bf16.msra.mxu0 0
      %567 = vmatprep.subr.bf16.mxu0 0
      %568 = vmatpush1.bf16.msra.mxu0 0
      %569 = vmatprep.subr.bf16.mxu0 0
      %570 = vmatpush1.bf16.msra.mxu0 0
      %571 = vmatprep.subr.bf16.mxu0 0
      %572 = vmatpush1.bf16.msra.mxu0 0
      %573 = vmatprep.subr.bf16.mxu0 0
      %574 = vmatpush1.bf16.msra.mxu0 0
      %575 = vmatprep.subr.bf16.mxu0 0
      %576 = vmatpush1.bf16.msra.mxu0 0
      %577 = vmatprep.subr.bf16.mxu0 0
      %578 = vmatpush1.bf16.msra.mxu0 0
      %579 = vmatprep.subr.bf16.mxu0 0
      %580 = vmatpush1.bf16.msra.mxu0 0
      %581 = vmatprep.subr.bf16.mxu0 0
      %582 = vmatpush1.bf16.msra.mxu0 0
      %583 = vmatprep.mubr.bf16.mxu0 0
      %584 = vmatmul.mubr.bf16.gmra.mrb[0].mxu0 %v540
      %v585 = vpop.f32.mrb[0].mxu0
      %v586 = vadd.f32 0.0, %v585
      %v587 = vpop.f32.mrb[0].mxu0
      %v588 = vpop.f32.mrb[0].mxu0
      %v589 = vadd.f32 0.0, %v588
      %v590 = vpop.f32.mrb[0].mxu0
      %591 = vmatprep.mubr.bf16.mxu0 0
      %592 = vmatmul.mubr.bf16.gmra.mrb[0].mxu0 %v543
      %v593 = vpop.f32.mrb[0].mxu0
      %v594 = vadd.f32 0.0, %v593
      %v595 = vpop.f32.mrb[0].mxu0
      %v596 = vpop.f32.mrb[0].mxu0
      %v597 = vadd.f32 0.0, %v596
      %v598 = vpop.f32.mrb[0].mxu0
      %599 = vmatprep.mubr.bf16.mxu0 0
      %600 = vmatmul.mubr.bf16.gmra.mrb[0].mxu0 %v546
      %v601 = vpop.f32.mrb[0].mxu0
      %v602 = vadd.f32 0.0, %v601
      %v603 = vpop.f32.mrb[0].mxu0
      %v604 = vpop.f32.mrb[0].mxu0
      %v605 = vadd.f32 0.0, %v604
      %v606 = vpop.f32.mrb[0].mxu0
      %607 = vmatprep.mubr.bf16.mxu0 0
      %608 = vmatmul.mubr.bf16.gmra.mrb[0].mxu0 %v549
      %v609 = vpop.f32.mrb[0].mxu0
      %v610 = vadd.f32 0.0, %v609
      %v611 = vpop.f32.mrb[0].mxu0
      %v612 = vpop.f32.mrb[0].mxu0
      %v613 = vadd.f32 0.0, %v612
      %v614 = vpop.f32.mrb[0].mxu0
      %615 = vdwg.mxu0
      %v617 = vlaneseq
      %v618 = vshrl.u32 %v617, 7
      %v619 = vsub.s32 0, %v618
      %v620 = vrot.slane %v501, %v619
      %v622 = vadd.f32 %v586, %v620
      %v623 = vadd.f32 %v589, %v620
      %v624 = vadd.f32 %v594, %v620
      %v625 = vadd.f32 %v597, %v620
      %v626 = vadd.f32 %v602, %v620
      %v627 = vadd.f32 %v605, %v620
      %v628 = vadd.f32 %v610, %v620
      %v629 = vadd.f32 %v613, %v620
      %s630 = scalar_lea.vmem [#allocation2], 16
      %631 = vst.msk [vmem:[%s630 + $0x1] sm:$0xff] %vm507, %v622
      %632 = vst.msk [vmem:[%s630 + $0x11] sm:$0xff] %vm507, %v623
      %633 = vst.msk [vmem:[%s630 + $0x21] sm:$0xff] %vm507, %v624
      %634 = vst.msk [vmem:[%s630 + $0x31] sm:$0xff] %vm507, %v625
      %635 = vst.msk [vmem:[%s630 + $0x41] sm:$0xff] %vm507, %v626
      %636 = vst.msk [vmem:[%s630 + $0x51] sm:$0xff] %vm507, %v627
      %637 = vst.msk [vmem:[%s630 + $0x61] sm:$0xff] %vm507, %v628
      %638 = vst.msk [vmem:[%s630 + $0x71] sm:$0xff] %vm507, %v629
      %v639 = vpack.c.bf16 %v497, %v497
      %v641 = vsel %vm507, %v639, 0
      %643 = vmatprep.subr.bf16.mxu0 0
      %644 = vmatpush1.bf16.msra.mxu0 %v537
      %645 = vmatprep.subr.bf16.mxu0 0
      %646 = vmatpush1.bf16.msra.mxu0 0
      %647 = vmatprep.subr.bf16.mxu0 0
      %648 = vmatpush1.bf16.msra.mxu0 0
      %649 = vmatprep.subr.bf16.mxu0 0
      %650 = vmatpush1.bf16.msra.mxu0 0
      %651 = vmatprep.subr.bf16.mxu0 0
      %652 = vmatpush1.bf16.msra.mxu0 0
      %653 = vmatprep.subr.bf16.mxu0 0
      %654 = vmatpush1.bf16.msra.mxu0 0
      %655 = vmatprep.subr.bf16.mxu0 0
      %656 = vmatpush1.bf16.msra.mxu0 0
      %657 = vmatprep.subr.bf16.mxu0 0
      %658 = vmatpush1.bf16.msra.mxu0 0
      %659 = vmatprep.subr.bf16.mxu0 0
      %660 = vmatpush1.bf16.msra.mxu0 0
      %661 = vmatprep.subr.bf16.mxu0 0
      %662 = vmatpush1.bf16.msra.mxu0 0
      %663 = vmatprep.subr.bf16.mxu0 0
      %664 = vmatpush1.bf16.msra.mxu0 0
      %665 = vmatprep.subr.bf16.mxu0 0
      %666 = vmatpush1.bf16.msra.mxu0 0
      %667 = vmatprep.subr.bf16.mxu0 0
      %668 = vmatpush1.bf16.msra.mxu0 0
      %669 = vmatprep.subr.bf16.mxu0 0
      %670 = vmatpush1.bf16.msra.mxu0 0
      %671 = vmatprep.subr.bf16.mxu0 0
      %672 = vmatpush1.bf16.msra.mxu0 0
      %673 = vmatprep.subr.bf16.mxu0 0
      %674 = vmatpush1.bf16.msra.mxu0 0
      %675 = vmatprep.mubr.bf16.mxu0 0
      %676 = vmatmul.mubr.bf16.gmra.mrb[0].mxu0 %v641
      %v677 = vpop.f32.mrb[0].mxu0
      %v678 = vadd.f32 0.0, %v677
      %v679 = vpop.f32.mrb[0].mxu0
      %v680 = vpop.f32.mrb[0].mxu0
      %v681 = vpop.f32.mrb[0].mxu0
      %682 = vdwg.mxu0
      %v683 = vadd.f32 %v678, %v620
      %s684 = scalar_select %p488, 1, 0
      %v685 = vstv %s684
      %vm686 = vcmp.eq.s32.totalorder %v685, 1
      %v687 = vsel %vm686, 0.0, %v683
      %688 = vst.msk [vmem:[#allocation2 + $0x1] sm:$0xff] %vm507, %v687
      %v689 = vpack.c.bf16 %v498, %v498
      %v691 = vsel %vm507, %v689, 0
      %693 = vmatprep.subr.bf16.mxu0 0
      %694 = vmatpush1.bf16.msra.mxu0 %v537
      %695 = vmatprep.subr.bf16.mxu0 0
      %696 = vmatpush1.bf16.msra.mxu0 0
      %697 = vmatprep.subr.bf16.mxu0 0
      %698 = vmatpush1.bf16.msra.mxu0 0
      %699 = vmatprep.subr.bf16.mxu0 0
      %700 = vmatpush1.bf16.msra.mxu0 0
      %701 = vmatprep.subr.bf16.mxu0 0
      %702 = vmatpush1.bf16.msra.mxu0 0
      %703 = vmatprep.subr.bf16.mxu0 0
      %704 = vmatpush1.bf16.msra.mxu0 0
      %705 = vmatprep.subr.bf16.mxu0 0
      %706 = vmatpush1.bf16.msra.mxu0 0
      %707 = vmatprep.subr.bf16.mxu0 0
      %708 = vmatpush1.bf16.msra.mxu0 0
      %709 = vmatprep.subr.bf16.mxu0 0
      %710 = vmatpush1.bf16.msra.mxu0 0
      %711 = vmatprep.subr.bf16.mxu0 0
      %712 = vmatpush1.bf16.msra.mxu0 0
      %713 = vmatprep.subr.bf16.mxu0 0
      %714 = vmatpush1.bf16.msra.mxu0 0
      %715 = vmatprep.subr.bf16.mxu0 0
      %716 = vmatpush1.bf16.msra.mxu0 0
      %717 = vmatprep.subr.bf16.mxu0 0
      %718 = vmatpush1.bf16.msra.mxu0 0
      %719 = vmatprep.subr.bf16.mxu0 0
      %720 = vmatpush1.bf16.msra.mxu0 0
      %721 = vmatprep.subr.bf16.mxu0 0
      %722 = vmatpush1.bf16.msra.mxu0 0
      %723 = vmatprep.subr.bf16.mxu0 0
      %724 = vmatpush1.bf16.msra.mxu0 0
      %725 = vmatprep.mubr.bf16.mxu0 0
      %726 = vmatmul.mubr.bf16.gmra.mrb[0].mxu0 %v691
      %v727 = vpop.f32.mrb[0].mxu0
      %v728 = vadd.f32 0.0, %v727
      %v729 = vpop.f32.mrb[0].mxu0
      %v730 = vpop.f32.mrb[0].mxu0
      %v731 = vpop.f32.mrb[0].mxu0
      %732 = vdwg.mxu0
      %v733 = vadd.f32 %v728, %v620
      %v734 = vsel %vm686, 0.0, %v733
      %s735 = scalar_lea.vmem [#allocation2], 144
      %736 = vst.msk [vmem:[%s735 + $0x1] sm:$0xff] %vm507, %v734
      %737 = vst.msk [vmem:[#allocation3] sm:$0xff] %vm507, 0.0
      %738 = vst.msk [vmem:[#allocation3 + $0x8] sm:$0x3] %vm509, 0.0
      %739 = vst.msk [vmem:[#allocation3 + $0x10] sm:$0xff] %vm507, 0.0
      %740 = vst.msk [vmem:[#allocation3 + $0x18] sm:$0x3] %vm509, 0.0
      %741 = vst.msk [vmem:[#allocation3 + $0x20] sm:$0xff] %vm507, 0.0
      %742 = vst.msk [vmem:[#allocation3 + $0x28] sm:$0x3] %vm509, 0.0
      %743 = vst.msk [vmem:[#allocation3 + $0x30] sm:$0xff] %vm507, 0.0
      %744 = vst.msk [vmem:[#allocation3 + $0x38] sm:$0x3] %vm509, 0.0
      %745 = vst.msk [vmem:[#allocation3 + $0x40] sm:$0xff] %vm507, 0.0
      %746 = vst.msk [vmem:[#allocation3 + $0x48] sm:$0x3] %vm509, 0.0
      %747 = vst.msk [vmem:[#allocation3 + $0x50] sm:$0xff] %vm507, 0.0
      %748 = vst.msk [vmem:[#allocation3 + $0x58] sm:$0x3] %vm509, 0.0
      %749 = vst.msk [vmem:[#allocation3 + $0x60] sm:$0xff] %vm507, 0.0
      %750 = vst.msk [vmem:[#allocation3 + $0x68] sm:$0x3] %vm509, 0.0
      %751 = vst.msk [vmem:[#allocation3 + $0x70] sm:$0xff] %vm507, 0.0
      %752 = vst.msk [vmem:[#allocation3 + $0x78] sm:$0x3] %vm509, 0.0
      %753 = vst.msk [vmem:[#allocation3 + $0x80] sm:$0xff] %vm507, 0.0
      %754 = vst.msk [vmem:[#allocation3 + $0x88] sm:$0x3] %vm509, 0.0
      %755 = vst.msk [vmem:[#allocation3 + $0x90] sm:$0xff] %vm507, 0.0
      %756 = vst.msk [vmem:[#allocation3 + $0x98] sm:$0x3] %vm509, 0.0
      %v759 = vunpack.c.l.b16 %v503
      %v760 = vunpack.c.l.b16 %v504
      %v761 = vpack.c.b16 %v760, %v759
      %763 = vmatprep.subr.bf16.mxu0 0
      %764 = vmatpush1.bf16.msra.mxu0 %v761
      %765 = vmatprep.subr.bf16.mxu0 0
      %766 = vmatpush1.bf16.msra.mxu0 0
      %767 = vmatprep.subr.bf16.mxu0 0
      %768 = vmatpush1.bf16.msra.mxu0 0
      %769 = vmatprep.subr.bf16.mxu0 0
      %770 = vmatpush1.bf16.msra.mxu0 0
      %771 = vmatprep.subr.bf16.mxu0 0
      %772 = vmatpush1.bf16.msra.mxu0 0
      %773 = vmatprep.subr.bf16.mxu0 0
      %774 = vmatpush1.bf16.msra.mxu0 0
      %775 = vmatprep.subr.bf16.mxu0 0
      %776 = vmatpush1.bf16.msra.mxu0 0
      %777 = vmatprep.subr.bf16.mxu0 0
      %778 = vmatpush1.bf16.msra.mxu0 0
      %779 = vmatprep.subr.bf16.mxu0 0
      %780 = vmatpush1.bf16.msra.mxu0 0
      %781 = vmatprep.subr.bf16.mxu0 0
      %782 = vmatpush1.bf16.msra.mxu0 0
      %783 = vmatprep.subr.bf16.mxu0 0
      %784 = vmatpush1.bf16.msra.mxu0 0
      %785 = vmatprep.subr.bf16.mxu0 0
      %786 = vmatpush1.bf16.msra.mxu0 0
      %787 = vmatprep.subr.bf16.mxu0 0
      %788 = vmatpush1.bf16.msra.mxu0 0
      %789 = vmatprep.subr.bf16.mxu0 0
      %790 = vmatpush1.bf16.msra.mxu0 0
      %791 = vmatprep.subr.bf16.mxu0 0
      %792 = vmatpush1.bf16.msra.mxu0 0
      %793 = vmatprep.subr.bf16.mxu0 0
      %794 = vmatpush1.bf16.msra.mxu0 0
      %795 = vmatprep.mubr.bf16.mxu0 0
      %796 = vmatmul.mubr.bf16.gmra.mrb[0].mxu0 %v540
      %v797 = vpop.f32.mrb[0].mxu0
      %v798 = vadd.f32 0.0, %v797
      %v799 = vpop.f32.mrb[0].mxu0
      %v800 = vpop.f32.mrb[0].mxu0
      %v801 = vadd.f32 0.0, %v800
      %v802 = vpop.f32.mrb[0].mxu0
      %803 = vmatprep.mubr.bf16.mxu0 0
      %804 = vmatmul.mubr.bf16.gmra.mrb[0].mxu0 %v543
      %v805 = vpop.f32.mrb[0].mxu0
      %v806 = vadd.f32 0.0, %v805
      %v807 = vpop.f32.mrb[0].mxu0
      %v808 = vpop.f32.mrb[0].mxu0
      %v809 = vadd.f32 0.0, %v808
      %v810 = vpop.f32.mrb[0].mxu0
      %811 = vmatprep.mubr.bf16.mxu0 0
      %812 = vmatmul.mubr.bf16.gmra.mrb[0].mxu0 %v546
      %v813 = vpop.f32.mrb[0].mxu0
      %v814 = vadd.f32 0.0, %v813
      %v815 = vpop.f32.mrb[0].mxu0
      %v816 = vpop.f32.mrb[0].mxu0
      %v817 = vadd.f32 0.0, %v816
      %v818 = vpop.f32.mrb[0].mxu0
      %819 = vmatprep.mubr.bf16.mxu0 0
      %820 = vmatmul.mubr.bf16.gmra.mrb[0].mxu0 %v549
      %v821 = vpop.f32.mrb[0].mxu0
      %v822 = vadd.f32 0.0, %v821
      %v823 = vpop.f32.mrb[0].mxu0
      %v824 = vpop.f32.mrb[0].mxu0
      %v825 = vadd.f32 0.0, %v824
      %v826 = vpop.f32.mrb[0].mxu0
      %827 = vdwg.mxu0
      %v829 = vlaneseq
      %v830 = vshrl.u32 %v829, 7
      %v831 = vsub.s32 0, %v830
      %v832 = vrot.slane %v506, %v831
      %v834 = vadd.f32 %v798, %v832
      %v835 = vadd.f32 %v801, %v832
      %v836 = vadd.f32 %v806, %v832
      %v837 = vadd.f32 %v809, %v832
      %v838 = vadd.f32 %v814, %v832
      %v839 = vadd.f32 %v817, %v832
      %v840 = vadd.f32 %v822, %v832
      %v841 = vadd.f32 %v825, %v832
      %s842 = scalar_lea.vmem [#allocation3], 16
      %843 = vst.msk [vmem:[%s842 + $0x1] sm:$0xff] %vm507, %v834
      %844 = vst.msk [vmem:[%s842 + $0x11] sm:$0xff] %vm507, %v835
      %845 = vst.msk [vmem:[%s842 + $0x21] sm:$0xff] %vm507, %v836
      %846 = vst.msk [vmem:[%s842 + $0x31] sm:$0xff] %vm507, %v837
      %847 = vst.msk [vmem:[%s842 + $0x41] sm:$0xff] %vm507, %v838
      %848 = vst.msk [vmem:[%s842 + $0x51] sm:$0xff] %vm507, %v839
      %849 = vst.msk [vmem:[%s842 + $0x61] sm:$0xff] %vm507, %v840
      %850 = vst.msk [vmem:[%s842 + $0x71] sm:$0xff] %vm507, %v841
      %851 = vmatprep.subr.bf16.mxu0 0
      %852 = vmatpush1.bf16.msra.mxu0 %v761
      %853 = vmatprep.subr.bf16.mxu0 0
      %854 = vmatpush1.bf16.msra.mxu0 0
      %855 = vmatprep.subr.bf16.mxu0 0
      %856 = vmatpush1.bf16.msra.mxu0 0
      %857 = vmatprep.subr.bf16.mxu0 0
      %858 = vmatpush1.bf16.msra.mxu0 0
      %859 = vmatprep.subr.bf16.mxu0 0
      %860 = vmatpush1.bf16.msra.mxu0 0
      %861 = vmatprep.subr.bf16.mxu0 0
      %862 = vmatpush1.bf16.msra.mxu0 0
      %863 = vmatprep.subr.bf16.mxu0 0
      %864 = vmatpush1.bf16.msra.mxu0 0
      %865 = vmatprep.subr.bf16.mxu0 0
      %866 = vmatpush1.bf16.msra.mxu0 0
      %867 = vmatprep.subr.bf16.mxu0 0
      %868 = vmatpush1.bf16.msra.mxu0 0
      %869 = vmatprep.subr.bf16.mxu0 0
      %870 = vmatpush1.bf16.msra.mxu0 0
      %871 = vmatprep.subr.bf16.mxu0 0
      %872 = vmatpush1.bf16.msra.mxu0 0
      %873 = vmatprep.subr.bf16.mxu0 0
      %874 = vmatpush1.bf16.msra.mxu0 0
      %875 = vmatprep.subr.bf16.mxu0 0
      %876 = vmatpush1.bf16.msra.mxu0 0
      %877 = vmatprep.subr.bf16.mxu0 0
      %878 = vmatpush1.bf16.msra.mxu0 0
      %879 = vmatprep.subr.bf16.mxu0 0
      %880 = vmatpush1.bf16.msra.mxu0 0
      %881 = vmatprep.subr.bf16.mxu0 0
      %882 = vmatpush1.bf16.msra.mxu0 0
      %883 = vmatprep.mubr.bf16.mxu0 0
      %884 = vmatmul.mubr.bf16.gmra.mrb[0].mxu0 %v641
      %v885 = vpop.f32.mrb[0].mxu0
      %v886 = vadd.f32 0.0, %v885
      %v887 = vpop.f32.mrb[0].mxu0
      %v888 = vpop.f32.mrb[0].mxu0
      %v889 = vpop.f32.mrb[0].mxu0
      %890 = vdwg.mxu0
      %v891 = vadd.f32 %v886, %v832
      %v892 = vsel %vm686, 0.0, %v891
      %893 = vst.msk [vmem:[#allocation3 + $0x1] sm:$0xff] %vm507, %v892
      %894 = vmatprep.subr.bf16.mxu0 0
      %895 = vmatpush1.bf16.msra.mxu0 %v761
      %896 = vmatprep.subr.bf16.mxu0 0
      %897 = vmatpush1.bf16.msra.mxu0 0
      %898 = vmatprep.subr.bf16.mxu0 0
      %899 = vmatpush1.bf16.msra.mxu0 0
      %900 = vmatprep.subr.bf16.mxu0 0
      %901 = vmatpush1.bf16.msra.mxu0 0
      %902 = vmatprep.subr.bf16.mxu0 0
      %903 = vmatpush1.bf16.msra.mxu0 0
      %904 = vmatprep.subr.bf16.mxu0 0
      %905 = vmatpush1.bf16.msra.mxu0 0
      %906 = vmatprep.subr.bf16.mxu0 0
      %907 = vmatpush1.bf16.msra.mxu0 0
      %908 = vmatprep.subr.bf16.mxu0 0
      %909 = vmatpush1.bf16.msra.mxu0 0
      %910 = vmatprep.subr.bf16.mxu0 0
      %911 = vmatpush1.bf16.msra.mxu0 0
      %912 = vmatprep.subr.bf16.mxu0 0
      %913 = vmatpush1.bf16.msra.mxu0 0
      %914 = vmatprep.subr.bf16.mxu0 0
      %915 = vmatpush1.bf16.msra.mxu0 0
      %916 = vmatprep.subr.bf16.mxu0 0
      %917 = vmatpush1.bf16.msra.mxu0 0
      %918 = vmatprep.subr.bf16.mxu0 0
      %919 = vmatpush1.bf16.msra.mxu0 0
      %920 = vmatprep.subr.bf16.mxu0 0
      %921 = vmatpush1.bf16.msra.mxu0 0
      %922 = vmatprep.subr.bf16.mxu0 0
      %923 = vmatpush1.bf16.msra.mxu0 0
      %924 = vmatprep.subr.bf16.mxu0 0
      %925 = vmatpush1.bf16.msra.mxu0 0
      %926 = vmatprep.mubr.bf16.mxu0 0
      %927 = vmatmul.mubr.bf16.gmra.mrb[0].mxu0 %v691
      %v928 = vpop.f32.mrb[0].mxu0
      %v929 = vadd.f32 0.0, %v928
      %v930 = vpop.f32.mrb[0].mxu0
      %v931 = vpop.f32.mrb[0].mxu0
      %v932 = vpop.f32.mrb[0].mxu0
      %933 = vdwg.mxu0
      %v934 = vadd.f32 %v929, %v832
      %v935 = vsel %vm686, 0.0, %v934
      %s936 = scalar_lea.vmem [#allocation3], 144
      %937 = vst.msk [vmem:[%s936 + $0x1] sm:$0xff] %vm507, %v935
      %v938 = vld [vmem:[%s5] sm:$0x7]
      %v939 = vld [vmem:[%s5 + $0x4] sm:$0x7]
      %v940 = vld [vmem:[%s5 + $0x8] sm:$0x7]
      %s941 = scalar_lea.vmem %s5, 12
      %v942 = vld [vmem:[%s941] sm:$0x7]
      %v943 = vld [vmem:[%s941 + $0x4] sm:$0x7]
      %v944 = vld [vmem:[%s941 + $0x8] sm:$0x7]
      %v945 = vld [vmem:[#allocation2] sm:$0xff]
      %v946 = vld [vmem:[#allocation2 + $0x10] sm:$0xff]
      %v947 = vld [vmem:[#allocation2 + $0x20] sm:$0xff]
      %v948 = vld [vmem:[#allocation2 + $0x30] sm:$0xff]
      %v949 = vld [vmem:[#allocation2 + $0x40] sm:$0xff]
      %v950 = vld [vmem:[#allocation2 + $0x50] sm:$0xff]
      %v951 = vld [vmem:[#allocation2 + $0x60] sm:$0xff]
      %v952 = vld [vmem:[#allocation2 + $0x70] sm:$0xff]
      %v953 = vlaneseq
      %v954 = vshrl.u32 %v953, 7
      %v955 = vsub.s32 0, %v954
      %v956 = vrot.slane %v938, %v955
      %v957 = vmul.f32 %v945, %v956
      %v958 = vmul.f32 %v946, %v956
      %v959 = vmul.f32 %v947, %v956
      %v960 = vmul.f32 %v948, %v956
      %v961 = vmul.f32 %v949, %v956
      %v962 = vmul.f32 %v950, %v956
      %v963 = vmul.f32 %v951, %v956
      %v964 = vmul.f32 %v952, %v956
      %v965 = vadd.f32 %v957, 0.0
      %v966 = vadd.f32 %v958, 0.0
      %v967 = vadd.f32 %v959, 0.0
      %v968 = vadd.f32 %v960, 0.0
      %v969 = vadd.f32 %v961, 0.0
      %v970 = vadd.f32 %v962, 0.0
      %v971 = vadd.f32 %v963, 0.0
      %v972 = vadd.f32 %v964, 0.0
      %v973 = vld [vmem:[#allocation3] sm:$0xff]
      %v974 = vld [vmem:[#allocation3 + $0x10] sm:$0xff]
      %v975 = vld [vmem:[#allocation3 + $0x20] sm:$0xff]
      %v976 = vld [vmem:[#allocation3 + $0x30] sm:$0xff]
      %v977 = vld [vmem:[#allocation3 + $0x40] sm:$0xff]
      %v978 = vld [vmem:[#allocation3 + $0x50] sm:$0xff]
      %v979 = vld [vmem:[#allocation3 + $0x60] sm:$0xff]
      %v980 = vld [vmem:[#allocation3 + $0x70] sm:$0xff]
      %v981 = vlaneseq
      %v982 = vshrl.u32 %v981, 7
      %v983 = vsub.s32 0, %v982
      %v984 = vrot.slane %v942, %v983
      %v985 = vmul.f32 %v973, %v984
      %v986 = vmul.f32 %v974, %v984
      %v987 = vmul.f32 %v975, %v984
      %v988 = vmul.f32 %v976, %v984
      %v989 = vmul.f32 %v977, %v984
      %v990 = vmul.f32 %v978, %v984
      %v991 = vmul.f32 %v979, %v984
      %v992 = vmul.f32 %v980, %v984
      %v993 = vadd.f32 %v985, 0.0
      %v994 = vadd.f32 %v986, 0.0
      %v995 = vadd.f32 %v987, 0.0
      %v996 = vadd.f32 %v988, 0.0
      %v997 = vadd.f32 %v989, 0.0
      %v998 = vadd.f32 %v990, 0.0
      %v999 = vadd.f32 %v991, 0.0
      %v1000 = vadd.f32 %v992, 0.0
      %v1001 = vld [vmem:[#allocation2 + $0x1] sm:$0xff]
      %v1002 = vld [vmem:[#allocation2 + $0x11] sm:$0xff]
      %v1003 = vld [vmem:[#allocation2 + $0x21] sm:$0xff]
      %v1004 = vld [vmem:[#allocation2 + $0x31] sm:$0xff]
      %v1005 = vld [vmem:[#allocation2 + $0x41] sm:$0xff]
      %v1006 = vld [vmem:[#allocation2 + $0x51] sm:$0xff]
      %v1007 = vld [vmem:[#allocation2 + $0x61] sm:$0xff]
      %v1008 = vld [vmem:[#allocation2 + $0x71] sm:$0xff]
      %v1009 = vlaneseq
      %v1010 = vshrl.u32 %v1009, 7
      %v1011 = vsub.s32 1, %v1010
      %v1012 = vrot.slane %v938, %v1011
      %v1013 = vmul.f32 %v1001, %v1012
      %v1014 = vmul.f32 %v1002, %v1012
      %v1015 = vmul.f32 %v1003, %v1012
      %v1016 = vmul.f32 %v1004, %v1012
      %v1017 = vmul.f32 %v1005, %v1012
      %v1018 = vmul.f32 %v1006, %v1012
      %v1019 = vmul.f32 %v1007, %v1012
      %v1020 = vmul.f32 %v1008, %v1012
      %v1021 = vadd.f32 %v965, %v1013
      %v1022 = vadd.f32 %v966, %v1014
      %v1023 = vadd.f32 %v967, %v1015
      %v1024 = vadd.f32 %v968, %v1016
      %v1025 = vadd.f32 %v969, %v1017
      %v1026 = vadd.f32 %v970, %v1018
      %v1027 = vadd.f32 %v971, %v1019
      %v1028 = vadd.f32 %v972, %v1020
      %v1029 = vld [vmem:[#allocation3 + $0x1] sm:$0xff]
      %v1030 = vld [vmem:[#allocation3 + $0x11] sm:$0xff]
      %v1031 = vld [vmem:[#allocation3 + $0x21] sm:$0xff]
      %v1032 = vld [vmem:[#allocation3 + $0x31] sm:$0xff]
      %v1033 = vld [vmem:[#allocation3 + $0x41] sm:$0xff]
      %v1034 = vld [vmem:[#allocation3 + $0x51] sm:$0xff]
      %v1035 = vld [vmem:[#allocation3 + $0x61] sm:$0xff]
      %v1036 = vld [vmem:[#allocation3 + $0x71] sm:$0xff]
      %v1037 = vlaneseq
      %v1038 = vshrl.u32 %v1037, 7
      %v1039 = vsub.s32 1, %v1038
      %v1040 = vrot.slane %v942, %v1039
      %v1041 = vmul.f32 %v1029, %v1040
      %v1042 = vmul.f32 %v1030, %v1040
      %v1043 = vmul.f32 %v1031, %v1040
      %v1044 = vmul.f32 %v1032, %v1040
      %v1045 = vmul.f32 %v1033, %v1040
      %v1046 = vmul.f32 %v1034, %v1040
      %v1047 = vmul.f32 %v1035, %v1040
      %v1048 = vmul.f32 %v1036, %v1040
      %v1049 = vadd.f32 %v993, %v1041
      %v1050 = vadd.f32 %v994, %v1042
      %v1051 = vadd.f32 %v995, %v1043
      %v1052 = vadd.f32 %v996, %v1044
      %v1053 = vadd.f32 %v997, %v1045
      %v1054 = vadd.f32 %v998, %v1046
      %v1055 = vadd.f32 %v999, %v1047
      %v1056 = vadd.f32 %v1000, %v1048
      %v1057 = vld [vmem:[#allocation2 + $0x2] sm:$0xff]
      %v1058 = vld [vmem:[#allocation2 + $0x12] sm:$0xff]
      %v1059 = vld [vmem:[#allocation2 + $0x22] sm:$0xff]
      %v1060 = vld [vmem:[#allocation2 + $0x32] sm:$0xff]
      %v1061 = vld [vmem:[#allocation2 + $0x42] sm:$0xff]
      %v1062 = vld [vmem:[#allocation2 + $0x52] sm:$0xff]
      %v1063 = vld [vmem:[#allocation2 + $0x62] sm:$0xff]
      %v1064 = vld [vmem:[#allocation2 + $0x72] sm:$0xff]
      %v1065 = vlaneseq
      %v1066 = vshrl.u32 %v1065, 7
      %v1067 = vsub.s32 2, %v1066
      %v1068 = vrot.slane %v938, %v1067
      %v1069 = vmul.f32 %v1057, %v1068
      %v1070 = vmul.f32 %v1058, %v1068
      %v1071 = vmul.f32 %v1059, %v1068
      %v1072 = vmul.f32 %v1060, %v1068
      %v1073 = vmul.f32 %v1061, %v1068
      %v1074 = vmul.f32 %v1062, %v1068
      %v1075 = vmul.f32 %v1063, %v1068
      %v1076 = vmul.f32 %v1064, %v1068
      %v1077 = vadd.f32 %v1021, %v1069
      %v1078 = vadd.f32 %v1022, %v1070
      %v1079 = vadd.f32 %v1023, %v1071
      %v1080 = vadd.f32 %v1024, %v1072
      %v1081 = vadd.f32 %v1025, %v1073
      %v1082 = vadd.f32 %v1026, %v1074
      %v1083 = vadd.f32 %v1027, %v1075
      %v1084 = vadd.f32 %v1028, %v1076
      %v1085 = vld [vmem:[#allocation3 + $0x2] sm:$0xff]
      %v1086 = vld [vmem:[#allocation3 + $0x12] sm:$0xff]
      %v1087 = vld [vmem:[#allocation3 + $0x22] sm:$0xff]
      %v1088 = vld [vmem:[#allocation3 + $0x32] sm:$0xff]
      %v1089 = vld [vmem:[#allocation3 + $0x42] sm:$0xff]
      %v1090 = vld [vmem:[#allocation3 + $0x52] sm:$0xff]
      %v1091 = vld [vmem:[#allocation3 + $0x62] sm:$0xff]
      %v1092 = vld [vmem:[#allocation3 + $0x72] sm:$0xff]
      %v1093 = vlaneseq
      %v1094 = vshrl.u32 %v1093, 7
      %v1095 = vsub.s32 2, %v1094
      %v1096 = vrot.slane %v942, %v1095
      %v1097 = vmul.f32 %v1085, %v1096
      %v1098 = vmul.f32 %v1086, %v1096
      %v1099 = vmul.f32 %v1087, %v1096
      %v1100 = vmul.f32 %v1088, %v1096
      %v1101 = vmul.f32 %v1089, %v1096
      %v1102 = vmul.f32 %v1090, %v1096
      %v1103 = vmul.f32 %v1091, %v1096
      %v1104 = vmul.f32 %v1092, %v1096
      %v1105 = vadd.f32 %v1049, %v1097
      %v1106 = vadd.f32 %v1050, %v1098
      %v1107 = vadd.f32 %v1051, %v1099
      %v1108 = vadd.f32 %v1052, %v1100
      %v1109 = vadd.f32 %v1053, %v1101
      %v1110 = vadd.f32 %v1054, %v1102
      %v1111 = vadd.f32 %v1055, %v1103
      %v1112 = vadd.f32 %v1056, %v1104
      %v1113 = vld [vmem:[%s630] sm:$0xff]
      %v1114 = vld [vmem:[%s630 + $0x10] sm:$0xff]
      %v1115 = vld [vmem:[%s630 + $0x20] sm:$0xff]
      %v1116 = vld [vmem:[%s630 + $0x30] sm:$0xff]
      %v1117 = vld [vmem:[%s630 + $0x40] sm:$0xff]
      %v1118 = vld [vmem:[%s630 + $0x50] sm:$0xff]
      %v1119 = vld [vmem:[%s630 + $0x60] sm:$0xff]
      %v1120 = vld [vmem:[%s630 + $0x70] sm:$0xff]
      %v1121 = vlaneseq
      %v1122 = vshrl.u32 %v1121, 7
      %v1123 = vsub.s32 0, %v1122
      %v1124 = vrot.slane %v939, %v1123
      %v1125 = vmul.f32 %v1113, %v1124
      %v1126 = vmul.f32 %v1114, %v1124
      %v1127 = vmul.f32 %v1115, %v1124
      %v1128 = vmul.f32 %v1116, %v1124
      %v1129 = vmul.f32 %v1117, %v1124
      %v1130 = vmul.f32 %v1118, %v1124
      %v1131 = vmul.f32 %v1119, %v1124
      %v1132 = vmul.f32 %v1120, %v1124
      %v1133 = vadd.f32 %v1077, %v1125
      %v1134 = vadd.f32 %v1078, %v1126
      %v1135 = vadd.f32 %v1079, %v1127
      %v1136 = vadd.f32 %v1080, %v1128
      %v1137 = vadd.f32 %v1081, %v1129
      %v1138 = vadd.f32 %v1082, %v1130
      %v1139 = vadd.f32 %v1083, %v1131
      %v1140 = vadd.f32 %v1084, %v1132
      %v1141 = vld [vmem:[%s842] sm:$0xff]
      %v1142 = vld [vmem:[%s842 + $0x10] sm:$0xff]
      %v1143 = vld [vmem:[%s842 + $0x20] sm:$0xff]
      %v1144 = vld [vmem:[%s842 + $0x30] sm:$0xff]
      %v1145 = vld [vmem:[%s842 + $0x40] sm:$0xff]
      %v1146 = vld [vmem:[%s842 + $0x50] sm:$0xff]
      %v1147 = vld [vmem:[%s842 + $0x60] sm:$0xff]
      %v1148 = vld [vmem:[%s842 + $0x70] sm:$0xff]
      %v1149 = vlaneseq
      %v1150 = vshrl.u32 %v1149, 7
      %v1151 = vsub.s32 0, %v1150
      %v1152 = vrot.slane %v943, %v1151
      %v1153 = vmul.f32 %v1141, %v1152
      %v1154 = vmul.f32 %v1142, %v1152
      %v1155 = vmul.f32 %v1143, %v1152
      %v1156 = vmul.f32 %v1144, %v1152
      %v1157 = vmul.f32 %v1145, %v1152
      %v1158 = vmul.f32 %v1146, %v1152
      %v1159 = vmul.f32 %v1147, %v1152
      %v1160 = vmul.f32 %v1148, %v1152
      %v1161 = vadd.f32 %v1105, %v1153
      %v1162 = vadd.f32 %v1106, %v1154
      %v1163 = vadd.f32 %v1107, %v1155
      %v1164 = vadd.f32 %v1108, %v1156
      %v1165 = vadd.f32 %v1109, %v1157
      %v1166 = vadd.f32 %v1110, %v1158
      %v1167 = vadd.f32 %v1111, %v1159
      %v1168 = vadd.f32 %v1112, %v1160
      %v1169 = vld [vmem:[%s630 + $0x1] sm:$0xff]
      %v1170 = vld [vmem:[%s630 + $0x11] sm:$0xff]
      %v1171 = vld [vmem:[%s630 + $0x21] sm:$0xff]
      %v1172 = vld [vmem:[%s630 + $0x31] sm:$0xff]
      %v1173 = vld [vmem:[%s630 + $0x41] sm:$0xff]
      %v1174 = vld [vmem:[%s630 + $0x51] sm:$0xff]
      %v1175 = vld [vmem:[%s630 + $0x61] sm:$0xff]
      %v1176 = vld [vmem:[%s630 + $0x71] sm:$0xff]
      %v1177 = vlaneseq
      %v1178 = vshrl.u32 %v1177, 7
      %v1179 = vsub.s32 1, %v1178
      %v1180 = vrot.slane %v939, %v1179
      %v1181 = vmul.f32 %v1169, %v1180
      %v1182 = vmul.f32 %v1170, %v1180
      %v1183 = vmul.f32 %v1171, %v1180
      %v1184 = vmul.f32 %v1172, %v1180
      %v1185 = vmul.f32 %v1173, %v1180
      %v1186 = vmul.f32 %v1174, %v1180
      %v1187 = vmul.f32 %v1175, %v1180
      %v1188 = vmul.f32 %v1176, %v1180
      %v1189 = vadd.f32 %v1133, %v1181
      %v1190 = vadd.f32 %v1134, %v1182
      %v1191 = vadd.f32 %v1135, %v1183
      %v1192 = vadd.f32 %v1136, %v1184
      %v1193 = vadd.f32 %v1137, %v1185
      %v1194 = vadd.f32 %v1138, %v1186
      %v1195 = vadd.f32 %v1139, %v1187
      %v1196 = vadd.f32 %v1140, %v1188
      %v1197 = vld [vmem:[%s842 + $0x1] sm:$0xff]
      %v1198 = vld [vmem:[%s842 + $0x11] sm:$0xff]
      %v1199 = vld [vmem:[%s842 + $0x21] sm:$0xff]
      %v1200 = vld [vmem:[%s842 + $0x31] sm:$0xff]
      %v1201 = vld [vmem:[%s842 + $0x41] sm:$0xff]
      %v1202 = vld [vmem:[%s842 + $0x51] sm:$0xff]
      %v1203 = vld [vmem:[%s842 + $0x61] sm:$0xff]
      %v1204 = vld [vmem:[%s842 + $0x71] sm:$0xff]
      %v1205 = vlaneseq
      %v1206 = vshrl.u32 %v1205, 7
      %v1207 = vsub.s32 1, %v1206
      %v1208 = vrot.slane %v943, %v1207
      %v1209 = vmul.f32 %v1197, %v1208
      %v1210 = vmul.f32 %v1198, %v1208
      %v1211 = vmul.f32 %v1199, %v1208
      %v1212 = vmul.f32 %v1200, %v1208
      %v1213 = vmul.f32 %v1201, %v1208
      %v1214 = vmul.f32 %v1202, %v1208
      %v1215 = vmul.f32 %v1203, %v1208
      %v1216 = vmul.f32 %v1204, %v1208
      %v1217 = vadd.f32 %v1161, %v1209
      %v1218 = vadd.f32 %v1162, %v1210
      %v1219 = vadd.f32 %v1163, %v1211
      %v1220 = vadd.f32 %v1164, %v1212
      %v1221 = vadd.f32 %v1165, %v1213
      %v1222 = vadd.f32 %v1166, %v1214
      %v1223 = vadd.f32 %v1167, %v1215
      %v1224 = vadd.f32 %v1168, %v1216
      %v1225 = vld [vmem:[%s630 + $0x2] sm:$0xff]
      %v1226 = vld [vmem:[%s630 + $0x12] sm:$0xff]
      %v1227 = vld [vmem:[%s630 + $0x22] sm:$0xff]
      %v1228 = vld [vmem:[%s630 + $0x32] sm:$0xff]
      %v1229 = vld [vmem:[%s630 + $0x42] sm:$0xff]
      %v1230 = vld [vmem:[%s630 + $0x52] sm:$0xff]
      %v1231 = vld [vmem:[%s630 + $0x62] sm:$0xff]
      %v1232 = vld [vmem:[%s630 + $0x72] sm:$0xff]
      %v1233 = vlaneseq
      %v1234 = vshrl.u32 %v1233, 7
      %v1235 = vsub.s32 2, %v1234
      %v1236 = vrot.slane %v939, %v1235
      %v1237 = vmul.f32 %v1225, %v1236
      %v1238 = vmul.f32 %v1226, %v1236
      %v1239 = vmul.f32 %v1227, %v1236
      %v1240 = vmul.f32 %v1228, %v1236
      %v1241 = vmul.f32 %v1229, %v1236
      %v1242 = vmul.f32 %v1230, %v1236
      %v1243 = vmul.f32 %v1231, %v1236
      %v1244 = vmul.f32 %v1232, %v1236
      %v1245 = vadd.f32 %v1189, %v1237
      %v1246 = vadd.f32 %v1190, %v1238
      %v1247 = vadd.f32 %v1191, %v1239
      %v1248 = vadd.f32 %v1192, %v1240
      %v1249 = vadd.f32 %v1193, %v1241
      %v1250 = vadd.f32 %v1194, %v1242
      %v1251 = vadd.f32 %v1195, %v1243
      %v1252 = vadd.f32 %v1196, %v1244
      %v1253 = vld [vmem:[%s842 + $0x2] sm:$0xff]
      %v1254 = vld [vmem:[%s842 + $0x12] sm:$0xff]
      %v1255 = vld [vmem:[%s842 + $0x22] sm:$0xff]
      %v1256 = vld [vmem:[%s842 + $0x32] sm:$0xff]
      %v1257 = vld [vmem:[%s842 + $0x42] sm:$0xff]
      %v1258 = vld [vmem:[%s842 + $0x52] sm:$0xff]
      %v1259 = vld [vmem:[%s842 + $0x62] sm:$0xff]
      %v1260 = vld [vmem:[%s842 + $0x72] sm:$0xff]
      %v1261 = vlaneseq
      %v1262 = vshrl.u32 %v1261, 7
      %v1263 = vsub.s32 2, %v1262
      %v1264 = vrot.slane %v943, %v1263
      %v1265 = vmul.f32 %v1253, %v1264
      %v1266 = vmul.f32 %v1254, %v1264
      %v1267 = vmul.f32 %v1255, %v1264
      %v1268 = vmul.f32 %v1256, %v1264
      %v1269 = vmul.f32 %v1257, %v1264
      %v1270 = vmul.f32 %v1258, %v1264
      %v1271 = vmul.f32 %v1259, %v1264
      %v1272 = vmul.f32 %v1260, %v1264
      %v1273 = vadd.f32 %v1217, %v1265
      %v1274 = vadd.f32 %v1218, %v1266
      %v1275 = vadd.f32 %v1219, %v1267
      %v1276 = vadd.f32 %v1220, %v1268
      %v1277 = vadd.f32 %v1221, %v1269
      %v1278 = vadd.f32 %v1222, %v1270
      %v1279 = vadd.f32 %v1223, %v1271
      %v1280 = vadd.f32 %v1224, %v1272
      %s1281 = scalar_lea.vmem [#allocation2], 32
      %v1282 = vld [vmem:[%s1281] sm:$0xff]
      %v1283 = vld [vmem:[%s1281 + $0x10] sm:$0xff]
      %v1284 = vld [vmem:[%s1281 + $0x20] sm:$0xff]
      %v1285 = vld [vmem:[%s1281 + $0x30] sm:$0xff]
      %v1286 = vld [vmem:[%s1281 + $0x40] sm:$0xff]
      %v1287 = vld [vmem:[%s1281 + $0x50] sm:$0xff]
      %v1288 = vld [vmem:[%s1281 + $0x60] sm:$0xff]
      %v1289 = vld [vmem:[%s1281 + $0x70] sm:$0xff]
      %v1290 = vlaneseq
      %v1291 = vshrl.u32 %v1290, 7
      %v1292 = vsub.s32 0, %v1291
      %v1293 = vrot.slane %v940, %v1292
      %v1294 = vmul.f32 %v1282, %v1293
      %v1295 = vmul.f32 %v1283, %v1293
      %v1296 = vmul.f32 %v1284, %v1293
      %v1297 = vmul.f32 %v1285, %v1293
      %v1298 = vmul.f32 %v1286, %v1293
      %v1299 = vmul.f32 %v1287, %v1293
      %v1300 = vmul.f32 %v1288, %v1293
      %v1301 = vmul.f32 %v1289, %v1293
      %v1302 = vadd.f32 %v1245, %v1294
      %v1303 = vadd.f32 %v1246, %v1295
      %v1304 = vadd.f32 %v1247, %v1296
      %v1305 = vadd.f32 %v1248, %v1297
      %v1306 = vadd.f32 %v1249, %v1298
      %v1307 = vadd.f32 %v1250, %v1299
      %v1308 = vadd.f32 %v1251, %v1300
      %v1309 = vadd.f32 %v1252, %v1301
      %s1310 = scalar_lea.vmem [#allocation3], 32
      %v1311 = vld [vmem:[%s1310] sm:$0xff]
      %v1312 = vld [vmem:[%s1310 + $0x10] sm:$0xff]
      %v1313 = vld [vmem:[%s1310 + $0x20] sm:$0xff]
      %v1314 = vld [vmem:[%s1310 + $0x30] sm:$0xff]
      %v1315 = vld [vmem:[%s1310 + $0x40] sm:$0xff]
      %v1316 = vld [vmem:[%s1310 + $0x50] sm:$0xff]
      %v1317 = vld [vmem:[%s1310 + $0x60] sm:$0xff]
      %v1318 = vld [vmem:[%s1310 + $0x70] sm:$0xff]
      %v1319 = vlaneseq
      %v1320 = vshrl.u32 %v1319, 7
      %v1321 = vsub.s32 0, %v1320
      %v1322 = vrot.slane %v944, %v1321
      %v1323 = vmul.f32 %v1311, %v1322
      %v1324 = vmul.f32 %v1312, %v1322
      %v1325 = vmul.f32 %v1313, %v1322
      %v1326 = vmul.f32 %v1314, %v1322
      %v1327 = vmul.f32 %v1315, %v1322
      %v1328 = vmul.f32 %v1316, %v1322
      %v1329 = vmul.f32 %v1317, %v1322
      %v1330 = vmul.f32 %v1318, %v1322
      %v1331 = vadd.f32 %v1273, %v1323
      %v1332 = vadd.f32 %v1274, %v1324
      %v1333 = vadd.f32 %v1275, %v1325
      %v1334 = vadd.f32 %v1276, %v1326
      %v1335 = vadd.f32 %v1277, %v1327
      %v1336 = vadd.f32 %v1278, %v1328
      %v1337 = vadd.f32 %v1279, %v1329
      %v1338 = vadd.f32 %v1280, %v1330
      %v1339 = vld [vmem:[%s1281 + $0x1] sm:$0xff]
      %v1340 = vld [vmem:[%s1281 + $0x11] sm:$0xff]
      %v1341 = vld [vmem:[%s1281 + $0x21] sm:$0xff]
      %v1342 = vld [vmem:[%s1281 + $0x31] sm:$0xff]
      %v1343 = vld [vmem:[%s1281 + $0x41] sm:$0xff]
      %v1344 = vld [vmem:[%s1281 + $0x51] sm:$0xff]
      %v1345 = vld [vmem:[%s1281 + $0x61] sm:$0xff]
      %v1346 = vld [vmem:[%s1281 + $0x71] sm:$0xff]
      %v1347 = vlaneseq
      %v1348 = vshrl.u32 %v1347, 7
      %v1349 = vsub.s32 1, %v1348
      %v1350 = vrot.slane %v940, %v1349
      %v1351 = vmul.f32 %v1339, %v1350
      %v1352 = vmul.f32 %v1340, %v1350
      %v1353 = vmul.f32 %v1341, %v1350
      %v1354 = vmul.f32 %v1342, %v1350
      %v1355 = vmul.f32 %v1343, %v1350
      %v1356 = vmul.f32 %v1344, %v1350
      %v1357 = vmul.f32 %v1345, %v1350
      %v1358 = vmul.f32 %v1346, %v1350
      %v1359 = vadd.f32 %v1302, %v1351
      %v1360 = vadd.f32 %v1303, %v1352
      %v1361 = vadd.f32 %v1304, %v1353
      %v1362 = vadd.f32 %v1305, %v1354
      %v1363 = vadd.f32 %v1306, %v1355
      %v1364 = vadd.f32 %v1307, %v1356
      %v1365 = vadd.f32 %v1308, %v1357
      %v1366 = vadd.f32 %v1309, %v1358
      %v1367 = vld [vmem:[%s1310 + $0x1] sm:$0xff]
      %v1368 = vld [vmem:[%s1310 + $0x11] sm:$0xff]
      %v1369 = vld [vmem:[%s1310 + $0x21] sm:$0xff]
      %v1370 = vld [vmem:[%s1310 + $0x31] sm:$0xff]
      %v1371 = vld [vmem:[%s1310 + $0x41] sm:$0xff]
      %v1372 = vld [vmem:[%s1310 + $0x51] sm:$0xff]
      %v1373 = vld [vmem:[%s1310 + $0x61] sm:$0xff]
      %v1374 = vld [vmem:[%s1310 + $0x71] sm:$0xff]
      %v1375 = vlaneseq
      %v1376 = vshrl.u32 %v1375, 7
      %v1377 = vsub.s32 1, %v1376
      %v1378 = vrot.slane %v944, %v1377
      %v1379 = vmul.f32 %v1367, %v1378
      %v1380 = vmul.f32 %v1368, %v1378
      %v1381 = vmul.f32 %v1369, %v1378
      %v1382 = vmul.f32 %v1370, %v1378
      %v1383 = vmul.f32 %v1371, %v1378
      %v1384 = vmul.f32 %v1372, %v1378
      %v1385 = vmul.f32 %v1373, %v1378
      %v1386 = vmul.f32 %v1374, %v1378
      %v1387 = vadd.f32 %v1331, %v1379
      %v1388 = vadd.f32 %v1332, %v1380
      %v1389 = vadd.f32 %v1333, %v1381
      %v1390 = vadd.f32 %v1334, %v1382
      %v1391 = vadd.f32 %v1335, %v1383
      %v1392 = vadd.f32 %v1336, %v1384
      %v1393 = vadd.f32 %v1337, %v1385
      %v1394 = vadd.f32 %v1338, %v1386
      %v1395 = vld [vmem:[%s1281 + $0x2] sm:$0xff]
      %v1396 = vld [vmem:[%s1281 + $0x12] sm:$0xff]
      %v1397 = vld [vmem:[%s1281 + $0x22] sm:$0xff]
      %v1398 = vld [vmem:[%s1281 + $0x32] sm:$0xff]
      %v1399 = vld [vmem:[%s1281 + $0x42] sm:$0xff]
      %v1400 = vld [vmem:[%s1281 + $0x52] sm:$0xff]
      %v1401 = vld [vmem:[%s1281 + $0x62] sm:$0xff]
      %v1402 = vld [vmem:[%s1281 + $0x72] sm:$0xff]
      %v1403 = vlaneseq
      %v1404 = vshrl.u32 %v1403, 7
      %v1405 = vsub.s32 2, %v1404
      %v1406 = vrot.slane %v940, %v1405
      %v1407 = vmul.f32 %v1395, %v1406
      %v1408 = vmul.f32 %v1396, %v1406
      %v1409 = vmul.f32 %v1397, %v1406
      %v1410 = vmul.f32 %v1398, %v1406
      %v1411 = vmul.f32 %v1399, %v1406
      %v1412 = vmul.f32 %v1400, %v1406
      %v1413 = vmul.f32 %v1401, %v1406
      %v1414 = vmul.f32 %v1402, %v1406
      %v1415 = vadd.f32 %v1359, %v1407
      %v1416 = vadd.f32 %v1360, %v1408
      %v1417 = vadd.f32 %v1361, %v1409
      %v1418 = vadd.f32 %v1362, %v1410
      %v1419 = vadd.f32 %v1363, %v1411
      %v1420 = vadd.f32 %v1364, %v1412
      %v1421 = vadd.f32 %v1365, %v1413
      %v1422 = vadd.f32 %v1366, %v1414
      %v1423 = vld [vmem:[%s1310 + $0x2] sm:$0xff]
      %v1424 = vld [vmem:[%s1310 + $0x12] sm:$0xff]
      %v1425 = vld [vmem:[%s1310 + $0x22] sm:$0xff]
      %v1426 = vld [vmem:[%s1310 + $0x32] sm:$0xff]
      %v1427 = vld [vmem:[%s1310 + $0x42] sm:$0xff]
      %v1428 = vld [vmem:[%s1310 + $0x52] sm:$0xff]
      %v1429 = vld [vmem:[%s1310 + $0x62] sm:$0xff]
      %v1430 = vld [vmem:[%s1310 + $0x72] sm:$0xff]
      %v1431 = vlaneseq
      %v1432 = vshrl.u32 %v1431, 7
      %v1433 = vsub.s32 2, %v1432
      %v1434 = vrot.slane %v944, %v1433
      %v1435 = vmul.f32 %v1423, %v1434
      %v1436 = vmul.f32 %v1424, %v1434
      %v1437 = vmul.f32 %v1425, %v1434
      %v1438 = vmul.f32 %v1426, %v1434
      %v1439 = vmul.f32 %v1427, %v1434
      %v1440 = vmul.f32 %v1428, %v1434
      %v1441 = vmul.f32 %v1429, %v1434
      %v1442 = vmul.f32 %v1430, %v1434
      %v1443 = vadd.f32 %v1387, %v1435
      %v1444 = vadd.f32 %v1388, %v1436
      %v1445 = vadd.f32 %v1389, %v1437
      %v1446 = vadd.f32 %v1390, %v1438
      %v1447 = vadd.f32 %v1391, %v1439
      %v1448 = vadd.f32 %v1392, %v1440
      %v1449 = vadd.f32 %v1393, %v1441
      %v1450 = vadd.f32 %v1394, %v1442
      %v1451 = vld [vmem:[%s6] sm:$0x1]
      %v1453 = vlaneseq
      %v1454 = vshrl.u32 %v1453, 7
      %v1455 = vsub.s32 0, %v1454
      %v1456 = vrot.slane %v1451, %v1455
      %v1458 = vadd.f32 %v1415, %v1456
      %v1459 = vadd.f32 %v1416, %v1456
      %v1460 = vadd.f32 %v1417, %v1456
      %v1461 = vadd.f32 %v1418, %v1456
      %v1462 = vadd.f32 %v1419, %v1456
      %v1463 = vadd.f32 %v1420, %v1456
      %v1464 = vadd.f32 %v1421, %v1456
      %v1465 = vadd.f32 %v1422, %v1456
      %s1466 = scalar_lea.vmem %s6, 1
      %v1467 = vld [vmem:[%s1466] sm:$0x1]
      %v1469 = vlaneseq
      %v1470 = vshrl.u32 %v1469, 7
      %v1471 = vsub.s32 0, %v1470
      %v1472 = vrot.slane %v1467, %v1471
      %v1474 = vadd.f32 %v1443, %v1472
      %v1475 = vadd.f32 %v1444, %v1472
      %v1476 = vadd.f32 %v1445, %v1472
      %v1477 = vadd.f32 %v1446, %v1472
      %v1478 = vadd.f32 %v1447, %v1472
      %v1479 = vadd.f32 %v1448, %v1472
      %v1480 = vadd.f32 %v1449, %v1472
      %v1481 = vadd.f32 %v1450, %v1472
      %1482 = vst.msk [vmem:[%s475] sm:$0xff] %vm507, %v1458
      %1483 = vst.msk [vmem:[%s475 + $0x8] sm:$0xff] %vm507, %v1459
      %1484 = vst.msk [vmem:[%s475 + $0x10] sm:$0xff] %vm507, %v1460
      %1485 = vst.msk [vmem:[%s475 + $0x18] sm:$0xff] %vm507, %v1461
      %1486 = vst.msk [vmem:[%s475 + $0x20] sm:$0xff] %vm507, %v1462
      %1487 = vst.msk [vmem:[%s475 + $0x28] sm:$0xff] %vm507, %v1463
      %1488 = vst.msk [vmem:[%s475 + $0x30] sm:$0xff] %vm507, %v1464
      %1489 = vst.msk [vmem:[%s475 + $0x38] sm:$0xff] %vm507, %v1465
      %1490 = vst.msk [vmem:[%s485] sm:$0xff] %vm507, %v1474
      %1491 = vst.msk [vmem:[%s485 + $0x8] sm:$0xff] %vm507, %v1475
      %1492 = vst.msk [vmem:[%s485 + $0x10] sm:$0xff] %vm507, %v1476
      %1493 = vst.msk [vmem:[%s485 + $0x18] sm:$0xff] %vm507, %v1477
      %1494 = vst.msk [vmem:[%s485 + $0x20] sm:$0xff] %vm507, %v1478
      %1495 = vst.msk [vmem:[%s485 + $0x28] sm:$0xff] %vm507, %v1479
      %1496 = vst.msk [vmem:[%s485 + $0x30] sm:$0xff] %vm507, %v1480
      %1497 = vst.msk [vmem:[%s485 + $0x38] sm:$0xff] %vm507, %v1481
      %s1498 = smul.u32 8, %s25
      %p1499 = scmp.lt.s32.totalorder %s24, 1
      %s1500 = scalar_select %p1499, %s24, 1
      %p1501 = scmp.lt.s32.totalorder %s1498, 7
      %s1502 = scalar_select %p1501, %s1498, 7
      %s1503 = smul.addr %s1500, 8
      %s1504 = sadd.s32 %s1502, %s1503
      %s1505 = smul.addr %s1504, 8
      %s1506 = scalar_lea.vmem %s7, %s1505
      %s1507 = smul.u32 8, %s25
      %p1508 = scmp.lt.s32.totalorder %s24, 1
      %s1509 = scalar_select %p1508, %s24, 1
      %p1510 = scmp.lt.s32.totalorder %s1507, 7
      %s1511 = scalar_select %p1510, %s1507, 7
      %s1512 = smul.addr %s1509, 8
      %s1513 = sadd.s32 %s1511, %s1512
      %s1514 = smul.addr %s1513, 8
      %s1515 = scalar_lea.vmem %s8, %s1514
      // Predicated region
      $region49: #{gated_attention_forward.4} parent=47 // pred_check
        %p1516 = pneg %p236
      $region50: #{gated_attention_forward.4} parent=47 // pred_check_branch
        %1518 = sbr.rel (%p1516) target = $region52
      $region51: #{gated_attention_forward.4} parent=47 // pred_region
        %s1519 = smul.u32 8, %s25
      $region52: #{gated_attention_forward.4} parent=47 // pred_fallthru
        _
      // Predicated region
      $region53: #{gated_attention_forward.4} parent=47 // pred_check
        %p1520 = pneg %p264
      $region54: #{gated_attention_forward.4} parent=47 // pred_check_branch
        %1522 = sbr.rel (%p1520) target = $region56
      $region55: #{gated_attention_forward.4} parent=47 // pred_region
        %s1523 = smul.u32 8, %s25
      $region56: #{gated_attention_forward.4} parent=47 // pred_fallthru
        _
    $region48: #{gated_attention_forward.4} parent=5 // pred_fallthru
      _
    %p1524 = scmp.le.s32.totalorder 2, %s15
    // Predicated region
    $region57: #{gated_attention_forward.4} parent=5 // pred_check
      %p1525 = pneg %p1524
    $region58: #{gated_attention_forward.4} parent=5 // pred_check_branch
      %1527 = sbr.rel (%p1525) target = $region60
    $region59: #{gated_attention_forward.4} parent=5 // pred_region
      %s1528 = ssub.s32 %s15, 2
      // Predicated region
      $region61: #{gated_attention_forward.4} parent=59 // pred_check
        %p1529 = pneg %p242
      $region62: #{gated_attention_forward.4} parent=59 // pred_check_branch
        %1531 = sbr.rel (%p1529) target = $region64
      $region63: #{gated_attention_forward.4} parent=59 // pred_region
        %s1532 = smul.u32 8, %s27
        %p1533 = scmp.lt.s32.totalorder %s26, 1
        %s1534 = scalar_select %p1533, %s26, 1
        %p1535 = scmp.lt.s32.totalorder %s1532, 7
        %s1536 = scalar_select %p1535, %s1532, 7
        %s1537 = smul.addr %s1534, 8
        %s1538 = sadd.s32 %s1536, %s1537
        %s1539 = smul.addr %s1538, 8
        %s1540 = scalar_lea.vmem %s7, %s1539
      $region64: #{gated_attention_forward.4} parent=59 // pred_fallthru
        _
      // Predicated region
      $region65: #{gated_attention_forward.4} parent=59 // pred_check
        %p1541 = pneg %p270
      $region66: #{gated_attention_forward.4} parent=59 // pred_check_branch
        %1543 = sbr.rel (%p1541) target = $region68
      $region67: #{gated_attention_forward.4} parent=59 // pred_region
        %s1544 = smul.u32 8, %s27
        %p1545 = scmp.lt.s32.totalorder %s26, 1
        %s1546 = scalar_select %p1545, %s26, 1
        %p1547 = scmp.lt.s32.totalorder %s1544, 7
        %s1548 = scalar_select %p1547, %s1544, 7
        %s1549 = smul.addr %s1546, 8
        %s1550 = sadd.s32 %s1548, %s1549
        %s1551 = smul.addr %s1550, 8
        %s1552 = scalar_lea.vmem %s8, %s1551
      $region68: #{gated_attention_forward.4} parent=59 // pred_fallthru
        _
    $region60: #{gated_attention_forward.4} parent=5 // pred_fallthru
      _
  $region6: #{gated_attention_forward.4} parent=0 // loop_footer
    %s19 = sadd.s32 1, %s15
  $region7: #{gated_attention_forward.4} parent=0 // loop_footer_branch
    %14 = sbr.rel target = $region3
  $region8: #{gated_attention_forward.4} parent=0 // loop_exit
    _

// kernel: gated_attention_forward.3
$region0: #{gated_attention_forward.3}
  #allocation0 [shape = 'u32[]', space=smem, size = 0x4, offset = 0x4, fixed_abs, tag = 'smem constant byte address 0x4 - core index']
  #allocation1 [shape = 'u32[144,128]{1,0:T(1,128)}', space=vmem, size = 0x12000, scoped, tag = 'internal scratch']
  #allocation2 [shape = 'f32[10,10,16]{2,1,0:T(8,128)}', space=vmem, size = 0x14000, scoped, tag = 'scratch operand']
  #allocation3 [shape = 'f32[10,10,16]{2,1,0:T(8,128)}', space=vmem, size = 0x14000, scoped, tag = 'scratch operand']
  %s0 = inlined_call_operand.vmem [shape: f32[2,8,8,16], index: 0, kind: input, shape index: {}, may-alias: {0,1,2}]
  %s1 = inlined_call_operand.vmem [shape: f32[2,8,8,16], index: 1, kind: input, shape index: {}, may-alias: {0,1,2}]
  %s2 = inlined_call_operand.vmem [shape: f32[2,8,8,16], index: 2, kind: input, shape index: {}, may-alias: {0,1,2}]
  %s3 = inlined_call_operand.vmem [shape: bf16[2,16,16], index: 3, kind: input, shape index: {}]
  %s4 = inlined_call_operand.vmem [shape: f32[2,1,16], index: 4, kind: input, shape index: {}]
  %s5 = inlined_call_operand.vmem [shape: f32[2,3,3,16], index: 5, kind: input, shape index: {}]
  %s6 = inlined_call_operand.vmem [shape: f32[2,1,16], index: 6, kind: input, shape index: {}]
  %s7 = inlined_call_operand.vmem [shape: f32[2,8,8,16], index: 7, kind: output, shape index: {}]
  %s8 = sld [smem:[#allocation0]]
  $region61: #{gated_attention_forward.3} parent=0
    _
  %s10 = ssub.s32 1, %s8
  %s11 = scalar_select 0, %s10, %s8
  loop: start=0, step=1, limit=4
  $region2: #{gated_attention_forward.3} parent=0 // loop_pre_header
    _
  $region3: #{gated_attention_forward.3} parent=0 // loop_header
    %s13 = sphi 0, %s17
    %p14 = scmp.ge.s32.totalorder %s13, 4
    %s20 = sphi 0, %s32
    %s21 = sphi 0, %s28
    %s22 = sphi 0, %s20
    %s23 = sphi 0, %s21
    %s24 = sphi 0, %s22
    %s25 = sphi 0, %s23
    %s37 = sphi 0, %s39
    %s40 = sphi 0, %s37
    %s41 = sphi 0, %s40
    %s57 = sphi 0, %s41
    %s73 = sphi 0, %s75
    %s76 = sphi 0, %s73
    %s77 = sphi 0, %s76
    %s93 = sphi 0, %s77
    %s109 = sphi 0, %s111
    %s112 = sphi 0, %s109
    %s113 = sphi 0, %s112
    %s129 = sphi 0, %s113
    %s133 = sphi 0, %s133
    %s135 = sphi 0, %s133
    %s136 = sphi 0, %s135
    %s150 = sphi 0, %s136
    %s154 = sphi 0, %s154
    %s156 = sphi 0, %s154
    %s157 = sphi 0, %s156
    %s171 = sphi 0, %s157
    %s175 = sphi 0, %s175
    %s177 = sphi 0, %s175
    %s178 = sphi 0, %s177
    %s192 = sphi 0, %s178
    %s196 = sphi 0, %s196
    %s198 = sphi 0, %s196
    %s199 = sphi 0, %s198
    %s213 = sphi 0, %s199
    %s221 = sphi 0, %s223
    %s224 = sphi 0, %s221
    %s225 = sphi 0, %s224
    %s241 = sphi 0, %s225
  $region4: #{gated_attention_forward.3} parent=0 // loop_header_branch
    %16 = sbr.rel (%p14) target = $region8
  $region5: #{gated_attention_forward.3} parent=0 // loop_body
    %s18 = ssub.s32 %s13, 1
    %s19 = ssub.s32 %s13, 2
    %s26 = sadd.s32 1, %s21
    %p27 = scmp.ge.s32.totalorder %s26, 1
    %s28 = scalar_select %p27, 0, %s26
    %s29 = sadd.s32 1, %s20
    %s30 = scalar_select %p27, %s29, %s20
    %p31 = scmp.ge.s32.totalorder %s30, 2
    %s32 = scalar_select %p31, 0, %s30
    %s33 = ssub.s32 %s20, %s32
    %s34 = ssub.s32 %s21, %s28
    %s35 = sor.u32 %s33, %s34
    %p36 = scmp.eq.s32.totalorder %s35, 0
    %s38 = sadd.s32 %s37, 1
    %s39 = scalar_select %p36, %s37, %s38
    %p42 = pneg %p36
    %p43 = scmp.eq.s32.totalorder %s13, 1
    %p44 = por %p42, %p43
    %p45 = scmp.ne.s32.totalorder %s37, %s40
    %p46 = scmp.eq.s32.totalorder %s13, 0
    %p47 = por %p45, %p46
    %p48 = scmp.ne.s32.totalorder %s37, %s40
    %p49 = scmp.eq.s32.totalorder %s18, 1
    %p50 = por %p48, %p49
    %p51 = scmp.ne.s32.totalorder %s40, %s41
    %p52 = scmp.eq.s32.totalorder %s18, 0
    %p53 = por %p51, %p52
    %p54 = scmp.ne.s32.totalorder %s40, %s41
    %p55 = scmp.eq.s32.totalorder %s19, 1
    %p56 = por %p54, %p55
    %p58 = scmp.ne.s32.totalorder %s41, %s57
    %p59 = scmp.eq.s32.totalorder %s19, 0
    %p60 = por %p58, %p59
    %s61 = smul.u32 %s21, 8
    %s62 = ssub.s32 %s61, 1
    %p63 = scmp.gt.s32.totalorder %s62, 0
    %s64 = scalar_select %p63, %s62, 0
    %s65 = smul.u32 %s28, 8
    %s66 = ssub.s32 %s65, 1
    %p67 = scmp.gt.s32.totalorder %s66, 0
    %s68 = scalar_select %p67, %s66, 0
    %s69 = ssub.s32 %s20, %s32
    %s70 = ssub.s32 %s64, %s68
    %s71 = sor.u32 %s69, %s70
    %p72 = scmp.eq.s32.totalorder %s71, 0
    %s74 = sadd.s32 %s73, 1
    %s75 = scalar_select %p72, %s73, %s74
    %p78 = pneg %p72
    %p79 = scmp.eq.s32.totalorder %s13, 1
    %p80 = por %p78, %p79
    %p81 = scmp.ne.s32.totalorder %s73, %s76
    %p82 = scmp.eq.s32.totalorder %s13, 0
    %p83 = por %p81, %p82
    %p84 = scmp.ne.s32.totalorder %s73, %s76
    %p85 = scmp.eq.s32.totalorder %s18, 1
    %p86 = por %p84, %p85
    %p87 = scmp.ne.s32.totalorder %s76, %s77
    %p88 = scmp.eq.s32.totalorder %s18, 0
    %p89 = por %p87, %p88
    %p90 = scmp.ne.s32.totalorder %s76, %s77
    %p91 = scmp.eq.s32.totalorder %s19, 1
    %p92 = por %p90, %p91
    %p94 = scmp.ne.s32.totalorder %s77, %s93
    %p95 = scmp.eq.s32.totalorder %s19, 0
    %p96 = por %p94, %p95
    %s97 = smul.u32 %s21, 8
    %s98 = sadd.s32 %s97, 8
    %p99 = scmp.lt.s32.totalorder %s98, 7
    %s100 = scalar_select %p99, %s98, 7
    %s101 = smul.u32 %s28, 8
    %s102 = sadd.s32 %s101, 8
    %p103 = scmp.lt.s32.totalorder %s102, 7
    %s104 = scalar_select %p103, %s102, 7
    %s105 = ssub.s32 %s20, %s32
    %s106 = ssub.s32 %s100, %s104
    %s107 = sor.u32 %s105, %s106
    %p108 = scmp.eq.s32.totalorder %s107, 0
    %s110 = sadd.s32 %s109, 1
    %s111 = scalar_select %p108, %s109, %s110
    %p114 = pneg %p108
    %p115 = scmp.eq.s32.totalorder %s13, 1
    %p116 = por %p114, %p115
    %p117 = scmp.ne.s32.totalorder %s109, %s112
    %p118 = scmp.eq.s32.totalorder %s13, 0
    %p119 = por %p117, %p118
    %p120 = scmp.ne.s32.totalorder %s109, %s112
    %p121 = scmp.eq.s32.totalorder %s18, 1
    %p122 = por %p120, %p121
    %p123 = scmp.ne.s32.totalorder %s112, %s113
    %p124 = scmp.eq.s32.totalorder %s18, 0
    %p125 = por %p123, %p124
    %p126 = scmp.ne.s32.totalorder %s112, %s113
    %p127 = scmp.eq.s32.totalorder %s19, 1
    %p128 = por %p126, %p127
    %p130 = scmp.ne.s32.totalorder %s113, %s129
    %p131 = scmp.eq.s32.totalorder %s19, 0
    %p132 = por %p130, %p131
    %s134 = sadd.s32 %s133, 1
    %p137 = scmp.eq.s32.totalorder %s13, 1
    %p138 = scmp.ne.s32.totalorder %s133, %s135
    %p139 = scmp.eq.s32.totalorder %s13, 0
    %p140 = por %p138, %p139
    %p141 = scmp.ne.s32.totalorder %s133, %s135
    %p142 = scmp.eq.s32.totalorder %s18, 1
    %p143 = por %p141, %p142
    %p144 = scmp.ne.s32.totalorder %s135, %s136
    %p145 = scmp.eq.s32.totalorder %s18, 0
    %p146 = por %p144, %p145
    %p147 = scmp.ne.s32.totalorder %s135, %s136
    %p148 = scmp.eq.s32.totalorder %s19, 1
    %p149 = por %p147, %p148
    %p151 = scmp.ne.s32.totalorder %s136, %s150
    %p152 = scmp.eq.s32.totalorder %s19, 0
    %p153 = por %p151, %p152
    %s155 = sadd.s32 %s154, 1
    %p158 = scmp.eq.s32.totalorder %s13, 1
    %p159 = scmp.ne.s32.totalorder %s154, %s156
    %p160 = scmp.eq.s32.totalorder %s13, 0
    %p161 = por %p159, %p160
    %p162 = scmp.ne.s32.totalorder %s154, %s156
    %p163 = scmp.eq.s32.totalorder %s18, 1
    %p164 = por %p162, %p163
    %p165 = scmp.ne.s32.totalorder %s156, %s157
    %p166 = scmp.eq.s32.totalorder %s18, 0
    %p167 = por %p165, %p166
    %p168 = scmp.ne.s32.totalorder %s156, %s157
    %p169 = scmp.eq.s32.totalorder %s19, 1
    %p170 = por %p168, %p169
    %p172 = scmp.ne.s32.totalorder %s157, %s171
    %p173 = scmp.eq.s32.totalorder %s19, 0
    %p174 = por %p172, %p173
    %s176 = sadd.s32 %s175, 1
    %p179 = scmp.eq.s32.totalorder %s13, 1
    %p180 = scmp.ne.s32.totalorder %s175, %s177
    %p181 = scmp.eq.s32.totalorder %s13, 0
    %p182 = por %p180, %p181
    %p183 = scmp.ne.s32.totalorder %s175, %s177
    %p184 = scmp.eq.s32.totalorder %s18, 1
    %p185 = por %p183, %p184
    %p186 = scmp.ne.s32.totalorder %s177, %s178
    %p187 = scmp.eq.s32.totalorder %s18, 0
    %p188 = por %p186, %p187
    %p189 = scmp.ne.s32.totalorder %s177, %s178
    %p190 = scmp.eq.s32.totalorder %s19, 1
    %p191 = por %p189, %p190
    %p193 = scmp.ne.s32.totalorder %s178, %s192
    %p194 = scmp.eq.s32.totalorder %s19, 0
    %p195 = por %p193, %p194
    %s197 = sadd.s32 %s196, 1
    %p200 = scmp.eq.s32.totalorder %s13, 1
    %p201 = scmp.ne.s32.totalorder %s196, %s198
    %p202 = scmp.eq.s32.totalorder %s13, 0
    %p203 = por %p201, %p202
    %p204 = scmp.ne.s32.totalorder %s196, %s198
    %p205 = scmp.eq.s32.totalorder %s18, 1
    %p206 = por %p204, %p205
    %p207 = scmp.ne.s32.totalorder %s198, %s199
    %p208 = scmp.eq.s32.totalorder %s18, 0
    %p209 = por %p207, %p208
    %p210 = scmp.ne.s32.totalorder %s198, %s199
    %p211 = scmp.eq.s32.totalorder %s19, 1
    %p212 = por %p210, %p211
    %p214 = scmp.ne.s32.totalorder %s199, %s213
    %p215 = scmp.eq.s32.totalorder %s19, 0
    %p216 = por %p214, %p215
    %s217 = ssub.s32 %s20, %s32
    %s218 = ssub.s32 %s21, %s28
    %s219 = sor.u32 %s217, %s218
    %p220 = scmp.eq.s32.totalorder %s219, 0
    %s222 = sadd.s32 %s221, 1
    %s223 = scalar_select %p220, %s221, %s222
    %p226 = pneg %p220
    %p227 = scmp.eq.s32.totalorder %s13, 1
    %p228 = por %p226, %p227
    %p229 = scmp.ne.s32.totalorder %s221, %s224
    %p230 = scmp.eq.s32.totalorder %s13, 0
    %p231 = por %p229, %p230
    %p232 = scmp.ne.s32.totalorder %s221, %s224
    %p233 = scmp.eq.s32.totalorder %s18, 1
    %p234 = por %p232, %p233
    %p235 = scmp.ne.s32.totalorder %s224, %s225
    %p236 = scmp.eq.s32.totalorder %s18, 0
    %p237 = por %p235, %p236
    %p238 = scmp.ne.s32.totalorder %s224, %s225
    %p239 = scmp.eq.s32.totalorder %s19, 1
    %p240 = por %p238, %p239
    %p242 = scmp.ne.s32.totalorder %s225, %s241
    %p243 = scmp.eq.s32.totalorder %s19, 0
    %p244 = por %p242, %p243
    %p245 = scmp.le.s32.totalorder 1, %s13
    %p246 = scmp.lt.s32.totalorder %s13, 3
    %p247 = pnand %p245, %p246
    %p248 = pneg %p247
    // Predicated region
    $region9: #{gated_attention_forward.3} parent=5 // pred_check
      _
    $region10: #{gated_attention_forward.3} parent=5 // pred_check_branch
      %250 = sbr.rel (%p247) target = $region12
    $region11: #{gated_attention_forward.3} parent=5 // pred_region
      %s251 = ssub.s32 %s13, 1
      // Predicated region
      $region13: #{gated_attention_forward.3} parent=11 // pred_check
        %p252 = pneg %p146
      $region14: #{gated_attention_forward.3} parent=11 // pred_check_branch
        %254 = sbr.rel (%p252) target = $region16
      $region15: #{gated_attention_forward.3} parent=11 // pred_region
        _
      $region16: #{gated_attention_forward.3} parent=11 // pred_fallthru
        _
      // Predicated region
      $region17: #{gated_attention_forward.3} parent=11 // pred_check
        %p255 = pneg %p167
      $region18: #{gated_attention_forward.3} parent=11 // pred_check_branch
        %257 = sbr.rel (%p255) target = $region20
      $region19: #{gated_attention_forward.3} parent=11 // pred_region
        _
      $region20: #{gated_attention_forward.3} parent=11 // pred_fallthru
        _
      // Predicated region
      $region21: #{gated_attention_forward.3} parent=11 // pred_check
        %p258 = pneg %p188
      $region22: #{gated_attention_forward.3} parent=11 // pred_check_branch
        %260 = sbr.rel (%p258) target = $region24
      $region23: #{gated_attention_forward.3} parent=11 // pred_region
        _
      $region24: #{gated_attention_forward.3} parent=11 // pred_fallthru
        _
      // Predicated region
      $region25: #{gated_attention_forward.3} parent=11 // pred_check
        %p261 = pneg %p209
      $region26: #{gated_attention_forward.3} parent=11 // pred_check_branch
        %263 = sbr.rel (%p261) target = $region28
      $region27: #{gated_attention_forward.3} parent=11 // pred_region
        _
      $region28: #{gated_attention_forward.3} parent=11 // pred_fallthru
        _
    $region12: #{gated_attention_forward.3} parent=5 // pred_fallthru
      _
    %p264 = scmp.lt.s32.totalorder %s13, 2
    // Predicated region
    $region29: #{gated_attention_forward.3} parent=5 // pred_check
      %p265 = pneg %p264
    $region30: #{gated_attention_forward.3} parent=5 // pred_check_branch
      %267 = sbr.rel (%p265) target = $region32
    $region31: #{gated_attention_forward.3} parent=5 // pred_region
      // Predicated region
      $region33: #{gated_attention_forward.3} parent=31 // pred_check
        %p268 = pneg %p47
      $region34: #{gated_attention_forward.3} parent=31 // pred_check_branch
        %270 = sbr.rel (%p268) target = $region36
      $region35: #{gated_attention_forward.3} parent=31 // pred_region
        %s271 = smul.u32 8, %s21
        %p272 = scmp.lt.s32.totalorder %s20, 1
        %s273 = scalar_select %p272, %s20, 1
        %p274 = scmp.lt.s32.totalorder %s271, 7
        %s275 = scalar_select %p274, %s271, 7
        %s276 = smul.addr %s273, 8
        %s277 = sadd.s32 %s275, %s276
        %s278 = smul.addr %s277, 8
        %s279 = scalar_lea.vmem %s0, %s278
        %s280 = smul.u32 8, %s21
      $region36: #{gated_attention_forward.3} parent=31 // pred_fallthru
        _
      // Predicated region
      $region37: #{gated_attention_forward.3} parent=31 // pred_check
        %p281 = pneg %p83
      $region38: #{gated_attention_forward.3} parent=31 // pred_check_branch
        %283 = sbr.rel (%p281) target = $region40
      $region39: #{gated_attention_forward.3} parent=31 // pred_region
        %s284 = smul.u32 %s21, 8
        %s285 = ssub.s32 %s284, 1
        %p286 = scmp.gt.s32.totalorder %s285, 0
        %s287 = scalar_select %p286, %s285, 0
        %p288 = scmp.lt.s32.totalorder %s20, 1
        %s289 = scalar_select %p288, %s20, 1
        %p290 = scmp.lt.s32.totalorder %s287, 7
        %s291 = scalar_select %p290, %s287, 7
        %s292 = smul.addr %s289, 8
        %s293 = sadd.s32 %s291, %s292
        %s294 = smul.addr %s293, 8
        %s295 = scalar_lea.vmem %s1, %s294
        %s296 = smul.u32 %s21, 8
        %s297 = ssub.s32 %s296, 1
        %p298 = scmp.gt.s32.totalorder %s297, 0
        %s299 = scalar_select %p298, %s297, 0
      $region40: #{gated_attention_forward.3} parent=31 // pred_fallthru
        _
      // Predicated region
      $region41: #{gated_attention_forward.3} parent=31 // pred_check
        %p300 = pneg %p119
      $region42: #{gated_attention_forward.3} parent=31 // pred_check_branch
        %302 = sbr.rel (%p300) target = $region44
      $region43: #{gated_attention_forward.3} parent=31 // pred_region
        %s303 = smul.u32 %s21, 8
        %s304 = sadd.s32 %s303, 8
        %p305 = scmp.lt.s32.totalorder %s304, 7
        %s306 = scalar_select %p305, %s304, 7
        %p307 = scmp.lt.s32.totalorder %s20, 1
        %s308 = scalar_select %p307, %s20, 1
        %p309 = scmp.lt.s32.totalorder %s306, 7
        %s310 = scalar_select %p309, %s306, 7
        %s311 = smul.addr %s308, 8
        %s312 = sadd.s32 %s310, %s311
        %s313 = smul.addr %s312, 8
        %s314 = scalar_lea.vmem %s2, %s313
        %s315 = smul.u32 %s21, 8
        %s316 = sadd.s32 %s315, 8
        %p317 = scmp.lt.s32.totalorder %s316, 7
        %s318 = scalar_select %p317, %s316, 7
      $region44: #{gated_attention_forward.3} parent=31 // pred_fallthru
        _
    $region32: #{gated_attention_forward.3} parent=5 // pred_fallthru
      _
    %p319 = scmp.le.s32.totalorder 1, %s13
    %p320 = scmp.lt.s32.totalorder %s13, 3
    %p321 = pnand %p319, %p320
    %p322 = pneg %p321
    // Predicated region
    $region45: #{gated_attention_forward.3} parent=5 // pred_check
      _
    $region46: #{gated_attention_forward.3} parent=5 // pred_check_branch
      %324 = sbr.rel (%p321) target = $region48
    $region47: #{gated_attention_forward.3} parent=5 // pred_region
      %s325 = ssub.s32 %s13, 1
      %s326 = smul.u32 8, %s23
      %p327 = scmp.lt.s32.totalorder %s22, 1
      %s328 = scalar_select %p327, %s22, 1
      %p329 = scmp.lt.s32.totalorder %s326, 7
      %s330 = scalar_select %p329, %s326, 7
      %s331 = smul.addr %s328, 8
      %s332 = sadd.s32 %s330, %s331
      %s333 = smul.addr %s332, 8
      %s334 = scalar_lea.vmem %s0, %s333
      %p335 = pneg %p53
      %p336 = pneg %p50
      %s337 = smul.u32 %s23, 8
      %s338 = ssub.s32 %s337, 1
      %p339 = scmp.gt.s32.totalorder %s338, 0
      %s340 = scalar_select %p339, %s338, 0
      %p341 = scmp.lt.s32.totalorder %s22, 1
      %s342 = scalar_select %p341, %s22, 1
      %p343 = scmp.lt.s32.totalorder %s340, 7
      %s344 = scalar_select %p343, %s340, 7
      %s345 = smul.addr %s342, 8
      %s346 = sadd.s32 %s344, %s345
      %s347 = smul.addr %s346, 8
      %s348 = scalar_lea.vmem %s1, %s347
      %p349 = pneg %p89
      %p350 = pneg %p86
      %s351 = smul.u32 %s23, 8
      %s352 = sadd.s32 %s351, 8
      %p353 = scmp.lt.s32.totalorder %s352, 7
      %s354 = scalar_select %p353, %s352, 7
      %p355 = scmp.lt.s32.totalorder %s22, 1
      %s356 = scalar_select %p355, %s22, 1
      %p357 = scmp.lt.s32.totalorder %s354, 7
      %s358 = scalar_select %p357, %s354, 7
      %s359 = smul.addr %s356, 8
      %s360 = sadd.s32 %s358, %s359
      %s361 = smul.addr %s360, 8
      %s362 = scalar_lea.vmem %s2, %s361
      %p363 = pneg %p125
      %p364 = pneg %p122
      %p365 = pneg %p146
      %p366 = pneg %p143
      %p367 = pneg %p167
      %p368 = pneg %p164
      %p369 = pneg %p188
      %p370 = pneg %p185
      %p371 = pneg %p209
      %p372 = pneg %p206
      %p373 = pneg %p237
      %p374 = pneg %p234
      %s375 = smul.u32 8, %s23
      %p376 = scmp.lt.s32.totalorder %s22, 1
      %s377 = scalar_select %p376, %s22, 1
      %p378 = scmp.lt.s32.totalorder %s375, 7
      %s379 = scalar_select %p378, %s375, 7
      %s380 = smul.addr %s377, 8
      %s381 = sadd.s32 %s379, %s380
      %s382 = smul.addr %s381, 8
      %s383 = scalar_lea.vmem %s7, %s382
      %s384 = smul.u32 8, %s23
      %p385 = scmp.lt.s32.totalorder %s22, 1
      %s386 = scalar_select %p385, %s22, 1
      %p387 = scmp.lt.s32.totalorder %s384, 7
      %s388 = scalar_select %p387, %s384, 7
      %s389 = smul.addr %s386, 8
      %s390 = sadd.s32 %s388, %s389
      %s391 = smul.addr %s390, 8
      %s392 = scalar_lea.vmem %s0, %s391
      %s393 = smul.u32 8, %s23
      %s394 = smul.u32 %s23, 8
      %s395 = ssub.s32 %s394, 1
      %p396 = scmp.gt.s32.totalorder %s395, 0
      %s397 = scalar_select %p396, %s395, 0
      %p398 = scmp.lt.s32.totalorder %s22, 1
      %s399 = scalar_select %p398, %s22, 1
      %p400 = scmp.lt.s32.totalorder %s397, 7
      %s401 = scalar_select %p400, %s397, 7
      %s402 = smul.addr %s399, 8
      %s403 = sadd.s32 %s401, %s402
      %s404 = smul.addr %s403, 8
      %s405 = scalar_lea.vmem %s1, %s404
      %s406 = smul.u32 %s23, 8
      %s407 = ssub.s32 %s406, 1
      %p408 = scmp.gt.s32.totalorder %s407, 0
      %s409 = scalar_select %p408, %s407, 0
      %s410 = smul.u32 %s23, 8
      %s411 = sadd.s32 %s410, 8
      %p412 = scmp.lt.s32.totalorder %s411, 7
      %s413 = scalar_select %p412, %s411, 7
      %p414 = scmp.lt.s32.totalorder %s22, 1
      %s415 = scalar_select %p414, %s22, 1
      %p416 = scmp.lt.s32.totalorder %s413, 7
      %s417 = scalar_select %p416, %s413, 7
      %s418 = smul.addr %s415, 8
      %s419 = sadd.s32 %s417, %s418
      %s420 = smul.addr %s419, 8
      %s421 = scalar_lea.vmem %s2, %s420
      %s422 = smul.u32 %s23, 8
      %s423 = sadd.s32 %s422, 8
      %p424 = scmp.lt.s32.totalorder %s423, 7
      %s425 = scalar_select %p424, %s423, 7
      %s426 = smul.u32 8, %s23
      %p427 = scmp.lt.s32.totalorder %s22, 1
      %s428 = scalar_select %p427, %s22, 1
      %p429 = scmp.lt.s32.totalorder %s426, 7
      %s430 = scalar_select %p429, %s426, 7
      %s431 = smul.addr %s428, 8
      %s432 = sadd.s32 %s430, %s431
      %s433 = smul.addr %s432, 8
      %s434 = scalar_lea.vmem %s7, %s433
      %s435 = smul.u32 8, %s23
      %p437 = scmp.eq.s32.totalorder %s23, 0
      %v438 = vld [vmem:[%s392] sm:$0xff]
      %v439 = vld [vmem:[%s392 + $0x8] sm:$0xff]
      %v440 = vld [vmem:[%s392 + $0x10] sm:$0xff]
      %v441 = vld [vmem:[%s392 + $0x18] sm:$0xff]
      %v442 = vld [vmem:[%s392 + $0x20] sm:$0xff]
      %v443 = vld [vmem:[%s392 + $0x28] sm:$0xff]
      %v444 = vld [vmem:[%s392 + $0x30] sm:$0xff]
      %v445 = vld [vmem:[%s392 + $0x38] sm:$0xff]
      %v446 = vld [vmem:[%s405] sm:$0xff]
      %v447 = vld [vmem:[%s421] sm:$0xff]
      %v448 = vld [vmem:[%s3] sm:$0xf]
      %v449 = vld [vmem:[%s3 + $0x4] sm:$0xf]
      %v450 = vld [vmem:[%s4] sm:$0x1]
      %s451 = scalar_lea.vmem %s3, 8
      %v452 = vld [vmem:[%s451] sm:$0xf]
      %v453 = vld [vmem:[%s451 + $0x4] sm:$0xf]
      %s454 = scalar_lea.vmem %s4, 1
      %v455 = vld [vmem:[%s454] sm:$0x1]
      %vm456 = vcmask 130048
      %457 = vst.msk [vmem:[#allocation2] sm:$0xff] %vm456, 0.0
      %vm458 = vcmask 123904
      %459 = vst.msk [vmem:[#allocation2 + $0x8] sm:$0x3] %vm458, 0.0
      %460 = vst.msk [vmem:[#allocation2 + $0x10] sm:$0xff] %vm456, 0.0
      %461 = vst.msk [vmem:[#allocation2 + $0x18] sm:$0x3] %vm458, 0.0
      %462 = vst.msk [vmem:[#allocation2 + $0x20] sm:$0xff] %vm456, 0.0
      %463 = vst.msk [vmem:[#allocation2 + $0x28] sm:$0x3] %vm458, 0.0
      %464 = vst.msk [vmem:[#allocation2 + $0x30] sm:$0xff] %vm456, 0.0
      %465 = vst.msk [vmem:[#allocation2 + $0x38] sm:$0x3] %vm458, 0.0
      %466 = vst.msk [vmem:[#allocation2 + $0x40] sm:$0xff] %vm456, 0.0
      %467 = vst.msk [vmem:[#allocation2 + $0x48] sm:$0x3] %vm458, 0.0
      %468 = vst.msk [vmem:[#allocation2 + $0x50] sm:$0xff] %vm456, 0.0
      %469 = vst.msk [vmem:[#allocation2 + $0x58] sm:$0x3] %vm458, 0.0
      %470 = vst.msk [vmem:[#allocation2 + $0x60] sm:$0xff] %vm456, 0.0
      %471 = vst.msk [vmem:[#allocation2 + $0x68] sm:$0x3] %vm458, 0.0
      %472 = vst.msk [vmem:[#allocation2 + $0x70] sm:$0xff] %vm456, 0.0
      %473 = vst.msk [vmem:[#allocation2 + $0x78] sm:$0x3] %vm458, 0.0
      %474 = vst.msk [vmem:[#allocation2 + $0x80] sm:$0xff] %vm456, 0.0
      %475 = vst.msk [vmem:[#allocation2 + $0x88] sm:$0x3] %vm458, 0.0
      %476 = vst.msk [vmem:[#allocation2 + $0x90] sm:$0xff] %vm456, 0.0
      %477 = vst.msk [vmem:[#allocation2 + $0x98] sm:$0x3] %vm458, 0.0
      %v478 = vpack.c.bf16 %v439, %v438
      %v479 = vpack.c.bf16 %v441, %v440
      %v480 = vpack.c.bf16 %v443, %v442
      %v481 = vpack.c.bf16 %v445, %v444
      %v484 = vunpack.c.l.b16 %v448
      %v485 = vunpack.c.l.b16 %v449
      %v486 = vpack.c.b16 %v485, %v484
      %v489 = vsel %vm456, %v478, 0
      %v492 = vsel %vm456, %v479, 0
      %v495 = vsel %vm456, %v480, 0
      %v498 = vsel %vm456, %v481, 0
      %500 = vmatprep.subr.bf16.mxu0 0
      %501 = vmatpush1.bf16.msra.mxu0 %v486
      %502 = vmatprep.subr.bf16.mxu0 0
      %503 = vmatpush1.bf16.msra.mxu0 0
      %504 = vmatprep.subr.bf16.mxu0 0
      %505 = vmatpush1.bf16.msra.mxu0 0
      %506 = vmatprep.subr.bf16.mxu0 0
      %507 = vmatpush1.bf16.msra.mxu0 0
      %508 = vmatprep.subr.bf16.mxu0 0
      %509 = vmatpush1.bf16.msra.mxu0 0
      %510 = vmatprep.subr.bf16.mxu0 0
      %511 = vmatpush1.bf16.msra.mxu0 0
      %512 = vmatprep.subr.bf16.mxu0 0
      %513 = vmatpush1.bf16.msra.mxu0 0
      %514 = vmatprep.subr.bf16.mxu0 0
      %515 = vmatpush1.bf16.msra.mxu0 0
      %516 = vmatprep.subr.bf16.mxu0 0
      %517 = vmatpush1.bf16.msra.mxu0 0
      %518 = vmatprep.subr.bf16.mxu0 0
      %519 = vmatpush1.bf16.msra.mxu0 0
      %520 = vmatprep.subr.bf16.mxu0 0
      %521 = vmatpush1.bf16.msra.mxu0 0
      %522 = vmatprep.subr.bf16.mxu0 0
      %523 = vmatpush1.bf16.msra.mxu0 0
      %524 = vmatprep.subr.bf16.mxu0 0
      %525 = vmatpush1.bf16.msra.mxu0 0
      %526 = vmatprep.subr.bf16.mxu0 0
      %527 = vmatpush1.bf16.msra.mxu0 0
      %528 = vmatprep.subr.bf16.mxu0 0
      %529 = vmatpush1.bf16.msra.mxu0 0
      %530 = vmatprep.subr.bf16.mxu0 0
      %531 = vmatpush1.bf16.msra.mxu0 0
      %532 = vmatprep.mubr.bf16.mxu0 0
      %533 = vmatmul.mubr.bf16.gmra.mrb[0].mxu0 %v489
      %v534 = vpop.f32.mrb[0].mxu0
      %v535 = vadd.f32 0.0, %v534
      %v536 = vpop.f32.mrb[0].mxu0
      %v537 = vpop.f32.mrb[0].mxu0
      %v538 = vadd.f32 0.0, %v537
      %v539 = vpop.f32.mrb[0].mxu0
      %540 = vmatprep.mubr.bf16.mxu0 0
      %541 = vmatmul.mubr.bf16.gmra.mrb[0].mxu0 %v492
      %v542 = vpop.f32.mrb[0].mxu0
      %v543 = vadd.f32 0.0, %v542
      %v544 = vpop.f32.mrb[0].mxu0
      %v545 = vpop.f32.mrb[0].mxu0
      %v546 = vadd.f32 0.0, %v545
      %v547 = vpop.f32.mrb[0].mxu0
      %548 = vmatprep.mubr.bf16.mxu0 0
      %549 = vmatmul.mubr.bf16.gmra.mrb[0].mxu0 %v495
      %v550 = vpop.f32.mrb[0].mxu0
      %v551 = vadd.f32 0.0, %v550
      %v552 = vpop.f32.mrb[0].mxu0
      %v553 = vpop.f32.mrb[0].mxu0
      %v554 = vadd.f32 0.0, %v553
      %v555 = vpop.f32.mrb[0].mxu0
      %556 = vmatprep.mubr.bf16.mxu0 0
      %557 = vmatmul.mubr.bf16.gmra.mrb[0].mxu0 %v498
      %v558 = vpop.f32.mrb[0].mxu0
      %v559 = vadd.f32 0.0, %v558
      %v560 = vpop.f32.mrb[0].mxu0
      %v561 = vpop.f32.mrb[0].mxu0
      %v562 = vadd.f32 0.0, %v561
      %v563 = vpop.f32.mrb[0].mxu0
      %564 = vdwg.mxu0
      %v566 = vlaneseq
      %v567 = vshrl.u32 %v566, 7
      %v568 = vsub.s32 0, %v567
      %v569 = vrot.slane %v450, %v568
      %v571 = vadd.f32 %v535, %v569
      %v572 = vadd.f32 %v538, %v569
      %v573 = vadd.f32 %v543, %v569
      %v574 = vadd.f32 %v546, %v569
      %v575 = vadd.f32 %v551, %v569
      %v576 = vadd.f32 %v554, %v569
      %v577 = vadd.f32 %v559, %v569
      %v578 = vadd.f32 %v562, %v569
      %s579 = scalar_lea.vmem [#allocation2], 16
      %580 = vst.msk [vmem:[%s579 + $0x1] sm:$0xff] %vm456, %v571
      %581 = vst.msk [vmem:[%s579 + $0x11] sm:$0xff] %vm456, %v572
      %582 = vst.msk [vmem:[%s579 + $0x21] sm:$0xff] %vm456, %v573
      %583 = vst.msk [vmem:[%s579 + $0x31] sm:$0xff] %vm456, %v574
      %584 = vst.msk [vmem:[%s579 + $0x41] sm:$0xff] %vm456, %v575
      %585 = vst.msk [vmem:[%s579 + $0x51] sm:$0xff] %vm456, %v576
      %586 = vst.msk [vmem:[%s579 + $0x61] sm:$0xff] %vm456, %v577
      %587 = vst.msk [vmem:[%s579 + $0x71] sm:$0xff] %vm456, %v578
      %v588 = vpack.c.bf16 %v446, %v446
      %v590 = vsel %vm456, %v588, 0
      %592 = vmatprep.subr.bf16.mxu0 0
      %593 = vmatpush1.bf16.msra.mxu0 %v486
      %594 = vmatprep.subr.bf16.mxu0 0
      %595 = vmatpush1.bf16.msra.mxu0 0
      %596 = vmatprep.subr.bf16.mxu0 0
      %597 = vmatpush1.bf16.msra.mxu0 0
      %598 = vmatprep.subr.bf16.mxu0 0
      %599 = vmatpush1.bf16.msra.mxu0 0
      %600 = vmatprep.subr.bf16.mxu0 0
      %601 = vmatpush1.bf16.msra.mxu0 0
      %602 = vmatprep.subr.bf16.mxu0 0
      %603 = vmatpush1.bf16.msra.mxu0 0
      %604 = vmatprep.subr.bf16.mxu0 0
      %605 = vmatpush1.bf16.msra.mxu0 0
      %606 = vmatprep.subr.bf16.mxu0 0
      %607 = vmatpush1.bf16.msra.mxu0 0
      %608 = vmatprep.subr.bf16.mxu0 0
      %609 = vmatpush1.bf16.msra.mxu0 0
      %610 = vmatprep.subr.bf16.mxu0 0
      %611 = vmatpush1.bf16.msra.mxu0 0
      %612 = vmatprep.subr.bf16.mxu0 0
      %613 = vmatpush1.bf16.msra.mxu0 0
      %614 = vmatprep.subr.bf16.mxu0 0
      %615 = vmatpush1.bf16.msra.mxu0 0
      %616 = vmatprep.subr.bf16.mxu0 0
      %617 = vmatpush1.bf16.msra.mxu0 0
      %618 = vmatprep.subr.bf16.mxu0 0
      %619 = vmatpush1.bf16.msra.mxu0 0
      %620 = vmatprep.subr.bf16.mxu0 0
      %621 = vmatpush1.bf16.msra.mxu0 0
      %622 = vmatprep.subr.bf16.mxu0 0
      %623 = vmatpush1.bf16.msra.mxu0 0
      %624 = vmatprep.mubr.bf16.mxu0 0
      %625 = vmatmul.mubr.bf16.gmra.mrb[0].mxu0 %v590
      %v626 = vpop.f32.mrb[0].mxu0
      %v627 = vadd.f32 0.0, %v626
      %v628 = vpop.f32.mrb[0].mxu0
      %v629 = vpop.f32.mrb[0].mxu0
      %v630 = vpop.f32.mrb[0].mxu0
      %631 = vdwg.mxu0
      %v632 = vadd.f32 %v627, %v569
      %s633 = scalar_select %p437, 1, 0
      %v634 = vstv %s633
      %vm635 = vcmp.eq.s32.totalorder %v634, 1
      %v636 = vsel %vm635, 0.0, %v632
      %637 = vst.msk [vmem:[#allocation2 + $0x1] sm:$0xff] %vm456, %v636
      %v638 = vpack.c.bf16 %v447, %v447
      %v640 = vsel %vm456, %v638, 0
      %642 = vmatprep.subr.bf16.mxu0 0
      %643 = vmatpush1.bf16.msra.mxu0 %v486
      %644 = vmatprep.subr.bf16.mxu0 0
      %645 = vmatpush1.bf16.msra.mxu0 0
      %646 = vmatprep.subr.bf16.mxu0 0
      %647 = vmatpush1.bf16.msra.mxu0 0
      %648 = vmatprep.subr.bf16.mxu0 0
      %649 = vmatpush1.bf16.msra.mxu0 0
      %650 = vmatprep.subr.bf16.mxu0 0
      %651 = vmatpush1.bf16.msra.mxu0 0
      %652 = vmatprep.subr.bf16.mxu0 0
      %653 = vmatpush1.bf16.msra.mxu0 0
      %654 = vmatprep.subr.bf16.mxu0 0
      %655 = vmatpush1.bf16.msra.mxu0 0
      %656 = vmatprep.subr.bf16.mxu0 0
      %657 = vmatpush1.bf16.msra.mxu0 0
      %658 = vmatprep.subr.bf16.mxu0 0
      %659 = vmatpush1.bf16.msra.mxu0 0
      %660 = vmatprep.subr.bf16.mxu0 0
      %661 = vmatpush1.bf16.msra.mxu0 0
      %662 = vmatprep.subr.bf16.mxu0 0
      %663 = vmatpush1.bf16.msra.mxu0 0
      %664 = vmatprep.subr.bf16.mxu0 0
      %665 = vmatpush1.bf16.msra.mxu0 0
      %666 = vmatprep.subr.bf16.mxu0 0
      %667 = vmatpush1.bf16.msra.mxu0 0
      %668 = vmatprep.subr.bf16.mxu0 0
      %669 = vmatpush1.bf16.msra.mxu0 0
      %670 = vmatprep.subr.bf16.mxu0 0
      %671 = vmatpush1.bf16.msra.mxu0 0
      %672 = vmatprep.subr.bf16.mxu0 0
      %673 = vmatpush1.bf16.msra.mxu0 0
      %674 = vmatprep.mubr.bf16.mxu0 0
      %675 = vmatmul.mubr.bf16.gmra.mrb[0].mxu0 %v640
      %v676 = vpop.f32.mrb[0].mxu0
      %v677 = vadd.f32 0.0, %v676
      %v678 = vpop.f32.mrb[0].mxu0
      %v679 = vpop.f32.mrb[0].mxu0
      %v680 = vpop.f32.mrb[0].mxu0
      %681 = vdwg.mxu0
      %v682 = vadd.f32 %v677, %v569
      %v683 = vsel %vm635, 0.0, %v682
      %s684 = scalar_lea.vmem [#allocation2], 144
      %685 = vst.msk [vmem:[%s684 + $0x1] sm:$0xff] %vm456, %v683
      %686 = vst.msk [vmem:[#allocation3] sm:$0xff] %vm456, 0.0
      %687 = vst.msk [vmem:[#allocation3 + $0x8] sm:$0x3] %vm458, 0.0
      %688 = vst.msk [vmem:[#allocation3 + $0x10] sm:$0xff] %vm456, 0.0
      %689 = vst.msk [vmem:[#allocation3 + $0x18] sm:$0x3] %vm458, 0.0
      %690 = vst.msk [vmem:[#allocation3 + $0x20] sm:$0xff] %vm456, 0.0
      %691 = vst.msk [vmem:[#allocation3 + $0x28] sm:$0x3] %vm458, 0.0
      %692 = vst.msk [vmem:[#allocation3 + $0x30] sm:$0xff] %vm456, 0.0
      %693 = vst.msk [vmem:[#allocation3 + $0x38] sm:$0x3] %vm458, 0.0
      %694 = vst.msk [vmem:[#allocation3 + $0x40] sm:$0xff] %vm456, 0.0
      %695 = vst.msk [vmem:[#allocation3 + $0x48] sm:$0x3] %vm458, 0.0
      %696 = vst.msk [vmem:[#allocation3 + $0x50] sm:$0xff] %vm456, 0.0
      %697 = vst.msk [vmem:[#allocation3 + $0x58] sm:$0x3] %vm458, 0.0
      %698 = vst.msk [vmem:[#allocation3 + $0x60] sm:$0xff] %vm456, 0.0
      %699 = vst.msk [vmem:[#allocation3 + $0x68] sm:$0x3] %vm458, 0.0
      %700 = vst.msk [vmem:[#allocation3 + $0x70] sm:$0xff] %vm456, 0.0
      %701 = vst.msk [vmem:[#allocation3 + $0x78] sm:$0x3] %vm458, 0.0
      %702 = vst.msk [vmem:[#allocation3 + $0x80] sm:$0xff] %vm456, 0.0
      %703 = vst.msk [vmem:[#allocation3 + $0x88] sm:$0x3] %vm458, 0.0
      %704 = vst.msk [vmem:[#allocation3 + $0x90] sm:$0xff] %vm456, 0.0
      %705 = vst.msk [vmem:[#allocation3 + $0x98] sm:$0x3] %vm458, 0.0
      %v708 = vunpack.c.l.b16 %v452
      %v709 = vunpack.c.l.b16 %v453
      %v710 = vpack.c.b16 %v709, %v708
      %712 = vmatprep.subr.bf16.mxu0 0
      %713 = vmatpush1.bf16.msra.mxu0 %v710
      %714 = vmatprep.subr.bf16.mxu0 0
      %715 = vmatpush1.bf16.msra.mxu0 0
      %716 = vmatprep.subr.bf16.mxu0 0
      %717 = vmatpush1.bf16.msra.mxu0 0
      %718 = vmatprep.subr.bf16.mxu0 0
      %719 = vmatpush1.bf16.msra.mxu0 0
      %720 = vmatprep.subr.bf16.mxu0 0
      %721 = vmatpush1.bf16.msra.mxu0 0
      %722 = vmatprep.subr.bf16.mxu0 0
      %723 = vmatpush1.bf16.msra.mxu0 0
      %724 = vmatprep.subr.bf16.mxu0 0
      %725 = vmatpush1.bf16.msra.mxu0 0
      %726 = vmatprep.subr.bf16.mxu0 0
      %727 = vmatpush1.bf16.msra.mxu0 0
      %728 = vmatprep.subr.bf16.mxu0 0
      %729 = vmatpush1.bf16.msra.mxu0 0
      %730 = vmatprep.subr.bf16.mxu0 0
      %731 = vmatpush1.bf16.msra.mxu0 0
      %732 = vmatprep.subr.bf16.mxu0 0
      %733 = vmatpush1.bf16.msra.mxu0 0
      %734 = vmatprep.subr.bf16.mxu0 0
      %735 = vmatpush1.bf16.msra.mxu0 0
      %736 = vmatprep.subr.bf16.mxu0 0
      %737 = vmatpush1.bf16.msra.mxu0 0
      %738 = vmatprep.subr.bf16.mxu0 0
      %739 = vmatpush1.bf16.msra.mxu0 0
      %740 = vmatprep.subr.bf16.mxu0 0
      %741 = vmatpush1.bf16.msra.mxu0 0
      %742 = vmatprep.subr.bf16.mxu0 0
      %743 = vmatpush1.bf16.msra.mxu0 0
      %744 = vmatprep.mubr.bf16.mxu0 0
      %745 = vmatmul.mubr.bf16.gmra.mrb[0].mxu0 %v489
      %v746 = vpop.f32.mrb[0].mxu0
      %v747 = vadd.f32 0.0, %v746
      %v748 = vpop.f32.mrb[0].mxu0
      %v749 = vpop.f32.mrb[0].mxu0
      %v750 = vadd.f32 0.0, %v749
      %v751 = vpop.f32.mrb[0].mxu0
      %752 = vmatprep.mubr.bf16.mxu0 0
      %753 = vmatmul.mubr.bf16.gmra.mrb[0].mxu0 %v492
      %v754 = vpop.f32.mrb[0].mxu0
      %v755 = vadd.f32 0.0, %v754
      %v756 = vpop.f32.mrb[0].mxu0
      %v757 = vpop.f32.mrb[0].mxu0
      %v758 = vadd.f32 0.0, %v757
      %v759 = vpop.f32.mrb[0].mxu0
      %760 = vmatprep.mubr.bf16.mxu0 0
      %761 = vmatmul.mubr.bf16.gmra.mrb[0].mxu0 %v495
      %v762 = vpop.f32.mrb[0].mxu0
      %v763 = vadd.f32 0.0, %v762
      %v764 = vpop.f32.mrb[0].mxu0
      %v765 = vpop.f32.mrb[0].mxu0
      %v766 = vadd.f32 0.0, %v765
      %v767 = vpop.f32.mrb[0].mxu0
      %768 = vmatprep.mubr.bf16.mxu0 0
      %769 = vmatmul.mubr.bf16.gmra.mrb[0].mxu0 %v498
      %v770 = vpop.f32.mrb[0].mxu0
      %v771 = vadd.f32 0.0, %v770
      %v772 = vpop.f32.mrb[0].mxu0
      %v773 = vpop.f32.mrb[0].mxu0
      %v774 = vadd.f32 0.0, %v773
      %v775 = vpop.f32.mrb[0].mxu0
      %776 = vdwg.mxu0
      %v778 = vlaneseq
      %v779 = vshrl.u32 %v778, 7
      %v780 = vsub.s32 0, %v779
      %v781 = vrot.slane %v455, %v780
      %v783 = vadd.f32 %v747, %v781
      %v784 = vadd.f32 %v750, %v781
      %v785 = vadd.f32 %v755, %v781
      %v786 = vadd.f32 %v758, %v781
      %v787 = vadd.f32 %v763, %v781
      %v788 = vadd.f32 %v766, %v781
      %v789 = vadd.f32 %v771, %v781
      %v790 = vadd.f32 %v774, %v781
      %s791 = scalar_lea.vmem [#allocation3], 16
      %792 = vst.msk [vmem:[%s791 + $0x1] sm:$0xff] %vm456, %v783
      %793 = vst.msk [vmem:[%s791 + $0x11] sm:$0xff] %vm456, %v784
      %794 = vst.msk [vmem:[%s791 + $0x21] sm:$0xff] %vm456, %v785
      %795 = vst.msk [vmem:[%s791 + $0x31] sm:$0xff] %vm456, %v786
      %796 = vst.msk [vmem:[%s791 + $0x41] sm:$0xff] %vm456, %v787
      %797 = vst.msk [vmem:[%s791 + $0x51] sm:$0xff] %vm456, %v788
      %798 = vst.msk [vmem:[%s791 + $0x61] sm:$0xff] %vm456, %v789
      %799 = vst.msk [vmem:[%s791 + $0x71] sm:$0xff] %vm456, %v790
      %800 = vmatprep.subr.bf16.mxu0 0
      %801 = vmatpush1.bf16.msra.mxu0 %v710
      %802 = vmatprep.subr.bf16.mxu0 0
      %803 = vmatpush1.bf16.msra.mxu0 0
      %804 = vmatprep.subr.bf16.mxu0 0
      %805 = vmatpush1.bf16.msra.mxu0 0
      %806 = vmatprep.subr.bf16.mxu0 0
      %807 = vmatpush1.bf16.msra.mxu0 0
      %808 = vmatprep.subr.bf16.mxu0 0
      %809 = vmatpush1.bf16.msra.mxu0 0
      %810 = vmatprep.subr.bf16.mxu0 0
      %811 = vmatpush1.bf16.msra.mxu0 0
      %812 = vmatprep.subr.bf16.mxu0 0
      %813 = vmatpush1.bf16.msra.mxu0 0
      %814 = vmatprep.subr.bf16.mxu0 0
      %815 = vmatpush1.bf16.msra.mxu0 0
      %816 = vmatprep.subr.bf16.mxu0 0
      %817 = vmatpush1.bf16.msra.mxu0 0
      %818 = vmatprep.subr.bf16.mxu0 0
      %819 = vmatpush1.bf16.msra.mxu0 0
      %820 = vmatprep.subr.bf16.mxu0 0
      %821 = vmatpush1.bf16.msra.mxu0 0
      %822 = vmatprep.subr.bf16.mxu0 0
      %823 = vmatpush1.bf16.msra.mxu0 0
      %824 = vmatprep.subr.bf16.mxu0 0
      %825 = vmatpush1.bf16.msra.mxu0 0
      %826 = vmatprep.subr.bf16.mxu0 0
      %827 = vmatpush1.bf16.msra.mxu0 0
      %828 = vmatprep.subr.bf16.mxu0 0
      %829 = vmatpush1.bf16.msra.mxu0 0
      %830 = vmatprep.subr.bf16.mxu0 0
      %831 = vmatpush1.bf16.msra.mxu0 0
      %832 = vmatprep.mubr.bf16.mxu0 0
      %833 = vmatmul.mubr.bf16.gmra.mrb[0].mxu0 %v590
      %v834 = vpop.f32.mrb[0].mxu0
      %v835 = vadd.f32 0.0, %v834
      %v836 = vpop.f32.mrb[0].mxu0
      %v837 = vpop.f32.mrb[0].mxu0
      %v838 = vpop.f32.mrb[0].mxu0
      %839 = vdwg.mxu0
      %v840 = vadd.f32 %v835, %v781
      %v841 = vsel %vm635, 0.0, %v840
      %842 = vst.msk [vmem:[#allocation3 + $0x1] sm:$0xff] %vm456, %v841
      %843 = vmatprep.subr.bf16.mxu0 0
      %844 = vmatpush1.bf16.msra.mxu0 %v710
      %845 = vmatprep.subr.bf16.mxu0 0
      %846 = vmatpush1.bf16.msra.mxu0 0
      %847 = vmatprep.subr.bf16.mxu0 0
      %848 = vmatpush1.bf16.msra.mxu0 0
      %849 = vmatprep.subr.bf16.mxu0 0
      %850 = vmatpush1.bf16.msra.mxu0 0
      %851 = vmatprep.subr.bf16.mxu0 0
      %852 = vmatpush1.bf16.msra.mxu0 0
      %853 = vmatprep.subr.bf16.mxu0 0
      %854 = vmatpush1.bf16.msra.mxu0 0
      %855 = vmatprep.subr.bf16.mxu0 0
      %856 = vmatpush1.bf16.msra.mxu0 0
      %857 = vmatprep.subr.bf16.mxu0 0
      %858 = vmatpush1.bf16.msra.mxu0 0
      %859 = vmatprep.subr.bf16.mxu0 0
      %860 = vmatpush1.bf16.msra.mxu0 0
      %861 = vmatprep.subr.bf16.mxu0 0
      %862 = vmatpush1.bf16.msra.mxu0 0
      %863 = vmatprep.subr.bf16.mxu0 0
      %864 = vmatpush1.bf16.msra.mxu0 0
      %865 = vmatprep.subr.bf16.mxu0 0
      %866 = vmatpush1.bf16.msra.mxu0 0
      %867 = vmatprep.subr.bf16.mxu0 0
      %868 = vmatpush1.bf16.msra.mxu0 0
      %869 = vmatprep.subr.bf16.mxu0 0
      %870 = vmatpush1.bf16.msra.mxu0 0
      %871 = vmatprep.subr.bf16.mxu0 0
      %872 = vmatpush1.bf16.msra.mxu0 0
      %873 = vmatprep.subr.bf16.mxu0 0
      %874 = vmatpush1.bf16.msra.mxu0 0
      %875 = vmatprep.mubr.bf16.mxu0 0
      %876 = vmatmul.mubr.bf16.gmra.mrb[0].mxu0 %v640
      %v877 = vpop.f32.mrb[0].mxu0
      %v878 = vadd.f32 0.0, %v877
      %v879 = vpop.f32.mrb[0].mxu0
      %v880 = vpop.f32.mrb[0].mxu0
      %v881 = vpop.f32.mrb[0].mxu0
      %882 = vdwg.mxu0
      %v883 = vadd.f32 %v878, %v781
      %v884 = vsel %vm635, 0.0, %v883
      %s885 = scalar_lea.vmem [#allocation3], 144
      %886 = vst.msk [vmem:[%s885 + $0x1] sm:$0xff] %vm456, %v884
      %v887 = vld [vmem:[%s5] sm:$0x7]
      %v888 = vld [vmem:[%s5 + $0x4] sm:$0x7]
      %v889 = vld [vmem:[%s5 + $0x8] sm:$0x7]
      %s890 = scalar_lea.vmem %s5, 12
      %v891 = vld [vmem:[%s890] sm:$0x7]
      %v892 = vld [vmem:[%s890 + $0x4] sm:$0x7]
      %v893 = vld [vmem:[%s890 + $0x8] sm:$0x7]
      %v894 = vld [vmem:[#allocation2] sm:$0xff]
      %v895 = vld [vmem:[#allocation2 + $0x10] sm:$0xff]
      %v896 = vld [vmem:[#allocation2 + $0x20] sm:$0xff]
      %v897 = vld [vmem:[#allocation2 + $0x30] sm:$0xff]
      %v898 = vld [vmem:[#allocation2 + $0x40] sm:$0xff]
      %v899 = vld [vmem:[#allocation2 + $0x50] sm:$0xff]
      %v900 = vld [vmem:[#allocation2 + $0x60] sm:$0xff]
      %v901 = vld [vmem:[#allocation2 + $0x70] sm:$0xff]
      %v902 = vlaneseq
      %v903 = vshrl.u32 %v902, 7
      %v904 = vsub.s32 0, %v903
      %v905 = vrot.slane %v887, %v904
      %v906 = vmul.f32 %v894, %v905
      %v907 = vmul.f32 %v895, %v905
      %v908 = vmul.f32 %v896, %v905
      %v909 = vmul.f32 %v897, %v905
      %v910 = vmul.f32 %v898, %v905
      %v911 = vmul.f32 %v899, %v905
      %v912 = vmul.f32 %v900, %v905
      %v913 = vmul.f32 %v901, %v905
      %v914 = vadd.f32 %v906, 0.0
      %v915 = vadd.f32 %v907, 0.0
      %v916 = vadd.f32 %v908, 0.0
      %v917 = vadd.f32 %v909, 0.0
      %v918 = vadd.f32 %v910, 0.0
      %v919 = vadd.f32 %v911, 0.0
      %v920 = vadd.f32 %v912, 0.0
      %v921 = vadd.f32 %v913, 0.0
      %v922 = vld [vmem:[#allocation3] sm:$0xff]
      %v923 = vld [vmem:[#allocation3 + $0x10] sm:$0xff]
      %v924 = vld [vmem:[#allocation3 + $0x20] sm:$0xff]
      %v925 = vld [vmem:[#allocation3 + $0x30] sm:$0xff]
      %v926 = vld [vmem:[#allocation3 + $0x40] sm:$0xff]
      %v927 = vld [vmem:[#allocation3 + $0x50] sm:$0xff]
      %v928 = vld [vmem:[#allocation3 + $0x60] sm:$0xff]
      %v929 = vld [vmem:[#allocation3 + $0x70] sm:$0xff]
      %v930 = vlaneseq
      %v931 = vshrl.u32 %v930, 7
      %v932 = vsub.s32 0, %v931
      %v933 = vrot.slane %v891, %v932
      %v934 = vmul.f32 %v922, %v933
      %v935 = vmul.f32 %v923, %v933
      %v936 = vmul.f32 %v924, %v933
      %v937 = vmul.f32 %v925, %v933
      %v938 = vmul.f32 %v926, %v933
      %v939 = vmul.f32 %v927, %v933
      %v940 = vmul.f32 %v928, %v933
      %v941 = vmul.f32 %v929, %v933
      %v942 = vadd.f32 %v934, 0.0
      %v943 = vadd.f32 %v935, 0.0
      %v944 = vadd.f32 %v936, 0.0
      %v945 = vadd.f32 %v937, 0.0
      %v946 = vadd.f32 %v938, 0.0
      %v947 = vadd.f32 %v939, 0.0
      %v948 = vadd.f32 %v940, 0.0
      %v949 = vadd.f32 %v941, 0.0
      %v950 = vld [vmem:[#allocation2 + $0x1] sm:$0xff]
      %v951 = vld [vmem:[#allocation2 + $0x11] sm:$0xff]
      %v952 = vld [vmem:[#allocation2 + $0x21] sm:$0xff]
      %v953 = vld [vmem:[#allocation2 + $0x31] sm:$0xff]
      %v954 = vld [vmem:[#allocation2 + $0x41] sm:$0xff]
      %v955 = vld [vmem:[#allocation2 + $0x51] sm:$0xff]
      %v956 = vld [vmem:[#allocation2 + $0x61] sm:$0xff]
      %v957 = vld [vmem:[#allocation2 + $0x71] sm:$0xff]
      %v958 = vlaneseq
      %v959 = vshrl.u32 %v958, 7
      %v960 = vsub.s32 1, %v959
      %v961 = vrot.slane %v887, %v960
      %v962 = vmul.f32 %v950, %v961
      %v963 = vmul.f32 %v951, %v961
      %v964 = vmul.f32 %v952, %v961
      %v965 = vmul.f32 %v953, %v961
      %v966 = vmul.f32 %v954, %v961
      %v967 = vmul.f32 %v955, %v961
      %v968 = vmul.f32 %v956, %v961
      %v969 = vmul.f32 %v957, %v961
      %v970 = vadd.f32 %v914, %v962
      %v971 = vadd.f32 %v915, %v963
      %v972 = vadd.f32 %v916, %v964
      %v973 = vadd.f32 %v917, %v965
      %v974 = vadd.f32 %v918, %v966
      %v975 = vadd.f32 %v919, %v967
      %v976 = vadd.f32 %v920, %v968
      %v977 = vadd.f32 %v921, %v969
      %v978 = vld [vmem:[#allocation3 + $0x1] sm:$0xff]
      %v979 = vld [vmem:[#allocation3 + $0x11] sm:$0xff]
      %v980 = vld [vmem:[#allocation3 + $0x21] sm:$0xff]
      %v981 = vld [vmem:[#allocation3 + $0x31] sm:$0xff]
      %v982 = vld [vmem:[#allocation3 + $0x41] sm:$0xff]
      %v983 = vld [vmem:[#allocation3 + $0x51] sm:$0xff]
      %v984 = vld [vmem:[#allocation3 + $0x61] sm:$0xff]
      %v985 = vld [vmem:[#allocation3 + $0x71] sm:$0xff]
      %v986 = vlaneseq
      %v987 = vshrl.u32 %v986, 7
      %v988 = vsub.s32 1, %v987
      %v989 = vrot.slane %v891, %v988
      %v990 = vmul.f32 %v978, %v989
      %v991 = vmul.f32 %v979, %v989
      %v992 = vmul.f32 %v980, %v989
      %v993 = vmul.f32 %v981, %v989
      %v994 = vmul.f32 %v982, %v989
      %v995 = vmul.f32 %v983, %v989
      %v996 = vmul.f32 %v984, %v989
      %v997 = vmul.f32 %v985, %v989
      %v998 = vadd.f32 %v942, %v990
      %v999 = vadd.f32 %v943, %v991
      %v1000 = vadd.f32 %v944, %v992
      %v1001 = vadd.f32 %v945, %v993
      %v1002 = vadd.f32 %v946, %v994
      %v1003 = vadd.f32 %v947, %v995
      %v1004 = vadd.f32 %v948, %v996
      %v1005 = vadd.f32 %v949, %v997
      %v1006 = vld [vmem:[#allocation2 + $0x2] sm:$0xff]
      %v1007 = vld [vmem:[#allocation2 + $0x12] sm:$0xff]
      %v1008 = vld [vmem:[#allocation2 + $0x22] sm:$0xff]
      %v1009 = vld [vmem:[#allocation2 + $0x32] sm:$0xff]
      %v1010 = vld [vmem:[#allocation2 + $0x42] sm:$0xff]
      %v1011 = vld [vmem:[#allocation2 + $0x52] sm:$0xff]
      %v1012 = vld [vmem:[#allocation2 + $0x62] sm:$0xff]
      %v1013 = vld [vmem:[#allocation2 + $0x72] sm:$0xff]
      %v1014 = vlaneseq
      %v1015 = vshrl.u32 %v1014, 7
      %v1016 = vsub.s32 2, %v1015
      %v1017 = vrot.slane %v887, %v1016
      %v1018 = vmul.f32 %v1006, %v1017
      %v1019 = vmul.f32 %v1007, %v1017
      %v1020 = vmul.f32 %v1008, %v1017
      %v1021 = vmul.f32 %v1009, %v1017
      %v1022 = vmul.f32 %v1010, %v1017
      %v1023 = vmul.f32 %v1011, %v1017
      %v1024 = vmul.f32 %v1012, %v1017
      %v1025 = vmul.f32 %v1013, %v1017
      %v1026 = vadd.f32 %v970, %v1018
      %v1027 = vadd.f32 %v971, %v1019
      %v1028 = vadd.f32 %v972, %v1020
      %v1029 = vadd.f32 %v973, %v1021
      %v1030 = vadd.f32 %v974, %v1022
      %v1031 = vadd.f32 %v975, %v1023
      %v1032 = vadd.f32 %v976, %v1024
      %v1033 = vadd.f32 %v977, %v1025
      %v1034 = vld [vmem:[#allocation3 + $0x2] sm:$0xff]
      %v1035 = vld [vmem:[#allocation3 + $0x12] sm:$0xff]
      %v1036 = vld [vmem:[#allocation3 + $0x22] sm:$0xff]
      %v1037 = vld [vmem:[#allocation3 + $0x32] sm:$0xff]
      %v1038 = vld [vmem:[#allocation3 + $0x42] sm:$0xff]
      %v1039 = vld [vmem:[#allocation3 + $0x52] sm:$0xff]
      %v1040 = vld [vmem:[#allocation3 + $0x62] sm:$0xff]
      %v1041 = vld [vmem:[#allocation3 + $0x72] sm:$0xff]
      %v1042 = vlaneseq
      %v1043 = vshrl.u32 %v1042, 7
      %v1044 = vsub.s32 2, %v1043
      %v1045 = vrot.slane %v891, %v1044
      %v1046 = vmul.f32 %v1034, %v1045
      %v1047 = vmul.f32 %v1035, %v1045
      %v1048 = vmul.f32 %v1036, %v1045
      %v1049 = vmul.f32 %v1037, %v1045
      %v1050 = vmul.f32 %v1038, %v1045
      %v1051 = vmul.f32 %v1039, %v1045
      %v1052 = vmul.f32 %v1040, %v1045
      %v1053 = vmul.f32 %v1041, %v1045
      %v1054 = vadd.f32 %v998, %v1046
      %v1055 = vadd.f32 %v999, %v1047
      %v1056 = vadd.f32 %v1000, %v1048
      %v1057 = vadd.f32 %v1001, %v1049
      %v1058 = vadd.f32 %v1002, %v1050
      %v1059 = vadd.f32 %v1003, %v1051
      %v1060 = vadd.f32 %v1004, %v1052
      %v1061 = vadd.f32 %v1005, %v1053
      %v1062 = vld [vmem:[%s579] sm:$0xff]
      %v1063 = vld [vmem:[%s579 + $0x10] sm:$0xff]
      %v1064 = vld [vmem:[%s579 + $0x20] sm:$0xff]
      %v1065 = vld [vmem:[%s579 + $0x30] sm:$0xff]
      %v1066 = vld [vmem:[%s579 + $0x40] sm:$0xff]
      %v1067 = vld [vmem:[%s579 + $0x50] sm:$0xff]
      %v1068 = vld [vmem:[%s579 + $0x60] sm:$0xff]
      %v1069 = vld [vmem:[%s579 + $0x70] sm:$0xff]
      %v1070 = vlaneseq
      %v1071 = vshrl.u32 %v1070, 7
      %v1072 = vsub.s32 0, %v1071
      %v1073 = vrot.slane %v888, %v1072
      %v1074 = vmul.f32 %v1062, %v1073
      %v1075 = vmul.f32 %v1063, %v1073
      %v1076 = vmul.f32 %v1064, %v1073
      %v1077 = vmul.f32 %v1065, %v1073
      %v1078 = vmul.f32 %v1066, %v1073
      %v1079 = vmul.f32 %v1067, %v1073
      %v1080 = vmul.f32 %v1068, %v1073
      %v1081 = vmul.f32 %v1069, %v1073
      %v1082 = vadd.f32 %v1026, %v1074
      %v1083 = vadd.f32 %v1027, %v1075
      %v1084 = vadd.f32 %v1028, %v1076
      %v1085 = vadd.f32 %v1029, %v1077
      %v1086 = vadd.f32 %v1030, %v1078
      %v1087 = vadd.f32 %v1031, %v1079
      %v1088 = vadd.f32 %v1032, %v1080
      %v1089 = vadd.f32 %v1033, %v1081
      %v1090 = vld [vmem:[%s791] sm:$0xff]
      %v1091 = vld [vmem:[%s791 + $0x10] sm:$0xff]
      %v1092 = vld [vmem:[%s791 + $0x20] sm:$0xff]
      %v1093 = vld [vmem:[%s791 + $0x30] sm:$0xff]
      %v1094 = vld [vmem:[%s791 + $0x40] sm:$0xff]
      %v1095 = vld [vmem:[%s791 + $0x50] sm:$0xff]
      %v1096 = vld [vmem:[%s791 + $0x60] sm:$0xff]
      %v1097 = vld [vmem:[%s791 + $0x70] sm:$0xff]
      %v1098 = vlaneseq
      %v1099 = vshrl.u32 %v1098, 7
      %v1100 = vsub.s32 0, %v1099
      %v1101 = vrot.slane %v892, %v1100
      %v1102 = vmul.f32 %v1090, %v1101
      %v1103 = vmul.f32 %v1091, %v1101
      %v1104 = vmul.f32 %v1092, %v1101
      %v1105 = vmul.f32 %v1093, %v1101
      %v1106 = vmul.f32 %v1094, %v1101
      %v1107 = vmul.f32 %v1095, %v1101
      %v1108 = vmul.f32 %v1096, %v1101
      %v1109 = vmul.f32 %v1097, %v1101
      %v1110 = vadd.f32 %v1054, %v1102
      %v1111 = vadd.f32 %v1055, %v1103
      %v1112 = vadd.f32 %v1056, %v1104
      %v1113 = vadd.f32 %v1057, %v1105
      %v1114 = vadd.f32 %v1058, %v1106
      %v1115 = vadd.f32 %v1059, %v1107
      %v1116 = vadd.f32 %v1060, %v1108
      %v1117 = vadd.f32 %v1061, %v1109
      %v1118 = vld [vmem:[%s579 + $0x1] sm:$0xff]
      %v1119 = vld [vmem:[%s579 + $0x11] sm:$0xff]
      %v1120 = vld [vmem:[%s579 + $0x21] sm:$0xff]
      %v1121 = vld [vmem:[%s579 + $0x31] sm:$0xff]
      %v1122 = vld [vmem:[%s579 + $0x41] sm:$0xff]
      %v1123 = vld [vmem:[%s579 + $0x51] sm:$0xff]
      %v1124 = vld [vmem:[%s579 + $0x61] sm:$0xff]
      %v1125 = vld [vmem:[%s579 + $0x71] sm:$0xff]
      %v1126 = vlaneseq
      %v1127 = vshrl.u32 %v1126, 7
      %v1128 = vsub.s32 1, %v1127
      %v1129 = vrot.slane %v888, %v1128
      %v1130 = vmul.f32 %v1118, %v1129
      %v1131 = vmul.f32 %v1119, %v1129
      %v1132 = vmul.f32 %v1120, %v1129
      %v1133 = vmul.f32 %v1121, %v1129
      %v1134 = vmul.f32 %v1122, %v1129
      %v1135 = vmul.f32 %v1123, %v1129
      %v1136 = vmul.f32 %v1124, %v1129
      %v1137 = vmul.f32 %v1125, %v1129
      %v1138 = vadd.f32 %v1082, %v1130
      %v1139 = vadd.f32 %v1083, %v1131
      %v1140 = vadd.f32 %v1084, %v1132
      %v1141 = vadd.f32 %v1085, %v1133
      %v1142 = vadd.f32 %v1086, %v1134
      %v1143 = vadd.f32 %v1087, %v1135
      %v1144 = vadd.f32 %v1088, %v1136
      %v1145 = vadd.f32 %v1089, %v1137
      %v1146 = vld [vmem:[%s791 + $0x1] sm:$0xff]
      %v1147 = vld [vmem:[%s791 + $0x11] sm:$0xff]
      %v1148 = vld [vmem:[%s791 + $0x21] sm:$0xff]
      %v1149 = vld [vmem:[%s791 + $0x31] sm:$0xff]
      %v1150 = vld [vmem:[%s791 + $0x41] sm:$0xff]
      %v1151 = vld [vmem:[%s791 + $0x51] sm:$0xff]
      %v1152 = vld [vmem:[%s791 + $0x61] sm:$0xff]
      %v1153 = vld [vmem:[%s791 + $0x71] sm:$0xff]
      %v1154 = vlaneseq
      %v1155 = vshrl.u32 %v1154, 7
      %v1156 = vsub.s32 1, %v1155
      %v1157 = vrot.slane %v892, %v1156
      %v1158 = vmul.f32 %v1146, %v1157
      %v1159 = vmul.f32 %v1147, %v1157
      %v1160 = vmul.f32 %v1148, %v1157
      %v1161 = vmul.f32 %v1149, %v1157
      %v1162 = vmul.f32 %v1150, %v1157
      %v1163 = vmul.f32 %v1151, %v1157
      %v1164 = vmul.f32 %v1152, %v1157
      %v1165 = vmul.f32 %v1153, %v1157
      %v1166 = vadd.f32 %v1110, %v1158
      %v1167 = vadd.f32 %v1111, %v1159
      %v1168 = vadd.f32 %v1112, %v1160
      %v1169 = vadd.f32 %v1113, %v1161
      %v1170 = vadd.f32 %v1114, %v1162
      %v1171 = vadd.f32 %v1115, %v1163
      %v1172 = vadd.f32 %v1116, %v1164
      %v1173 = vadd.f32 %v1117, %v1165
      %v1174 = vld [vmem:[%s579 + $0x2] sm:$0xff]
      %v1175 = vld [vmem:[%s579 + $0x12] sm:$0xff]
      %v1176 = vld [vmem:[%s579 + $0x22] sm:$0xff]
      %v1177 = vld [vmem:[%s579 + $0x32] sm:$0xff]
      %v1178 = vld [vmem:[%s579 + $0x42] sm:$0xff]
      %v1179 = vld [vmem:[%s579 + $0x52] sm:$0xff]
      %v1180 = vld [vmem:[%s579 + $0x62] sm:$0xff]
      %v1181 = vld [vmem:[%s579 + $0x72] sm:$0xff]
      %v1182 = vlaneseq
      %v1183 = vshrl.u32 %v1182, 7
      %v1184 = vsub.s32 2, %v1183
      %v1185 = vrot.slane %v888, %v1184
      %v1186 = vmul.f32 %v1174, %v1185
      %v1187 = vmul.f32 %v1175, %v1185
      %v1188 = vmul.f32 %v1176, %v1185
      %v1189 = vmul.f32 %v1177, %v1185
      %v1190 = vmul.f32 %v1178, %v1185
      %v1191 = vmul.f32 %v1179, %v1185
      %v1192 = vmul.f32 %v1180, %v1185
      %v1193 = vmul.f32 %v1181, %v1185
      %v1194 = vadd.f32 %v1138, %v1186
      %v1195 = vadd.f32 %v1139, %v1187
      %v1196 = vadd.f32 %v1140, %v1188
      %v1197 = vadd.f32 %v1141, %v1189
      %v1198 = vadd.f32 %v1142, %v1190
      %v1199 = vadd.f32 %v1143, %v1191
      %v1200 = vadd.f32 %v1144, %v1192
      %v1201 = vadd.f32 %v1145, %v1193
      %v1202 = vld [vmem:[%s791 + $0x2] sm:$0xff]
      %v1203 = vld [vmem:[%s791 + $0x12] sm:$0xff]
      %v1204 = vld [vmem:[%s791 + $0x22] sm:$0xff]
      %v1205 = vld [vmem:[%s791 + $0x32] sm:$0xff]
      %v1206 = vld [vmem:[%s791 + $0x42] sm:$0xff]
      %v1207 = vld [vmem:[%s791 + $0x52] sm:$0xff]
      %v1208 = vld [vmem:[%s791 + $0x62] sm:$0xff]
      %v1209 = vld [vmem:[%s791 + $0x72] sm:$0xff]
      %v1210 = vlaneseq
      %v1211 = vshrl.u32 %v1210, 7
      %v1212 = vsub.s32 2, %v1211
      %v1213 = vrot.slane %v892, %v1212
      %v1214 = vmul.f32 %v1202, %v1213
      %v1215 = vmul.f32 %v1203, %v1213
      %v1216 = vmul.f32 %v1204, %v1213
      %v1217 = vmul.f32 %v1205, %v1213
      %v1218 = vmul.f32 %v1206, %v1213
      %v1219 = vmul.f32 %v1207, %v1213
      %v1220 = vmul.f32 %v1208, %v1213
      %v1221 = vmul.f32 %v1209, %v1213
      %v1222 = vadd.f32 %v1166, %v1214
      %v1223 = vadd.f32 %v1167, %v1215
      %v1224 = vadd.f32 %v1168, %v1216
      %v1225 = vadd.f32 %v1169, %v1217
      %v1226 = vadd.f32 %v1170, %v1218
      %v1227 = vadd.f32 %v1171, %v1219
      %v1228 = vadd.f32 %v1172, %v1220
      %v1229 = vadd.f32 %v1173, %v1221
      %s1230 = scalar_lea.vmem [#allocation2], 32
      %v1231 = vld [vmem:[%s1230] sm:$0xff]
      %v1232 = vld [vmem:[%s1230 + $0x10] sm:$0xff]
      %v1233 = vld [vmem:[%s1230 + $0x20] sm:$0xff]
      %v1234 = vld [vmem:[%s1230 + $0x30] sm:$0xff]
      %v1235 = vld [vmem:[%s1230 + $0x40] sm:$0xff]
      %v1236 = vld [vmem:[%s1230 + $0x50] sm:$0xff]
      %v1237 = vld [vmem:[%s1230 + $0x60] sm:$0xff]
      %v1238 = vld [vmem:[%s1230 + $0x70] sm:$0xff]
      %v1239 = vlaneseq
      %v1240 = vshrl.u32 %v1239, 7
      %v1241 = vsub.s32 0, %v1240
      %v1242 = vrot.slane %v889, %v1241
      %v1243 = vmul.f32 %v1231, %v1242
      %v1244 = vmul.f32 %v1232, %v1242
      %v1245 = vmul.f32 %v1233, %v1242
      %v1246 = vmul.f32 %v1234, %v1242
      %v1247 = vmul.f32 %v1235, %v1242
      %v1248 = vmul.f32 %v1236, %v1242
      %v1249 = vmul.f32 %v1237, %v1242
      %v1250 = vmul.f32 %v1238, %v1242
      %v1251 = vadd.f32 %v1194, %v1243
      %v1252 = vadd.f32 %v1195, %v1244
      %v1253 = vadd.f32 %v1196, %v1245
      %v1254 = vadd.f32 %v1197, %v1246
      %v1255 = vadd.f32 %v1198, %v1247
      %v1256 = vadd.f32 %v1199, %v1248
      %v1257 = vadd.f32 %v1200, %v1249
      %v1258 = vadd.f32 %v1201, %v1250
      %s1259 = scalar_lea.vmem [#allocation3], 32
      %v1260 = vld [vmem:[%s1259] sm:$0xff]
      %v1261 = vld [vmem:[%s1259 + $0x10] sm:$0xff]
      %v1262 = vld [vmem:[%s1259 + $0x20] sm:$0xff]
      %v1263 = vld [vmem:[%s1259 + $0x30] sm:$0xff]
      %v1264 = vld [vmem:[%s1259 + $0x40] sm:$0xff]
      %v1265 = vld [vmem:[%s1259 + $0x50] sm:$0xff]
      %v1266 = vld [vmem:[%s1259 + $0x60] sm:$0xff]
      %v1267 = vld [vmem:[%s1259 + $0x70] sm:$0xff]
      %v1268 = vlaneseq
      %v1269 = vshrl.u32 %v1268, 7
      %v1270 = vsub.s32 0, %v1269
      %v1271 = vrot.slane %v893, %v1270
      %v1272 = vmul.f32 %v1260, %v1271
      %v1273 = vmul.f32 %v1261, %v1271
      %v1274 = vmul.f32 %v1262, %v1271
      %v1275 = vmul.f32 %v1263, %v1271
      %v1276 = vmul.f32 %v1264, %v1271
      %v1277 = vmul.f32 %v1265, %v1271
      %v1278 = vmul.f32 %v1266, %v1271
      %v1279 = vmul.f32 %v1267, %v1271
      %v1280 = vadd.f32 %v1222, %v1272
      %v1281 = vadd.f32 %v1223, %v1273
      %v1282 = vadd.f32 %v1224, %v1274
      %v1283 = vadd.f32 %v1225, %v1275
      %v1284 = vadd.f32 %v1226, %v1276
      %v1285 = vadd.f32 %v1227, %v1277
      %v1286 = vadd.f32 %v1228, %v1278
      %v1287 = vadd.f32 %v1229, %v1279
      %v1288 = vld [vmem:[%s1230 + $0x1] sm:$0xff]
      %v1289 = vld [vmem:[%s1230 + $0x11] sm:$0xff]
      %v1290 = vld [vmem:[%s1230 + $0x21] sm:$0xff]
      %v1291 = vld [vmem:[%s1230 + $0x31] sm:$0xff]
      %v1292 = vld [vmem:[%s1230 + $0x41] sm:$0xff]
      %v1293 = vld [vmem:[%s1230 + $0x51] sm:$0xff]
      %v1294 = vld [vmem:[%s1230 + $0x61] sm:$0xff]
      %v1295 = vld [vmem:[%s1230 + $0x71] sm:$0xff]
      %v1296 = vlaneseq
      %v1297 = vshrl.u32 %v1296, 7
      %v1298 = vsub.s32 1, %v1297
      %v1299 = vrot.slane %v889, %v1298
      %v1300 = vmul.f32 %v1288, %v1299
      %v1301 = vmul.f32 %v1289, %v1299
      %v1302 = vmul.f32 %v1290, %v1299
      %v1303 = vmul.f32 %v1291, %v1299
      %v1304 = vmul.f32 %v1292, %v1299
      %v1305 = vmul.f32 %v1293, %v1299
      %v1306 = vmul.f32 %v1294, %v1299
      %v1307 = vmul.f32 %v1295, %v1299
      %v1308 = vadd.f32 %v1251, %v1300
      %v1309 = vadd.f32 %v1252, %v1301
      %v1310 = vadd.f32 %v1253, %v1302
      %v1311 = vadd.f32 %v1254, %v1303
      %v1312 = vadd.f32 %v1255, %v1304
      %v1313 = vadd.f32 %v1256, %v1305
      %v1314 = vadd.f32 %v1257, %v1306
      %v1315 = vadd.f32 %v1258, %v1307
      %v1316 = vld [vmem:[%s1259 + $0x1] sm:$0xff]
      %v1317 = vld [vmem:[%s1259 + $0x11] sm:$0xff]
      %v1318 = vld [vmem:[%s1259 + $0x21] sm:$0xff]
      %v1319 = vld [vmem:[%s1259 + $0x31] sm:$0xff]
      %v1320 = vld [vmem:[%s1259 + $0x41] sm:$0xff]
      %v1321 = vld [vmem:[%s1259 + $0x51] sm:$0xff]
      %v1322 = vld [vmem:[%s1259 + $0x61] sm:$0xff]
      %v1323 = vld [vmem:[%s1259 + $0x71] sm:$0xff]
      %v1324 = vlaneseq
      %v1325 = vshrl.u32 %v1324, 7
      %v1326 = vsub.s32 1, %v1325
      %v1327 = vrot.slane %v893, %v1326
      %v1328 = vmul.f32 %v1316, %v1327
      %v1329 = vmul.f32 %v1317, %v1327
      %v1330 = vmul.f32 %v1318, %v1327
      %v1331 = vmul.f32 %v1319, %v1327
      %v1332 = vmul.f32 %v1320, %v1327
      %v1333 = vmul.f32 %v1321, %v1327
      %v1334 = vmul.f32 %v1322, %v1327
      %v1335 = vmul.f32 %v1323, %v1327
      %v1336 = vadd.f32 %v1280, %v1328
      %v1337 = vadd.f32 %v1281, %v1329
      %v1338 = vadd.f32 %v1282, %v1330
      %v1339 = vadd.f32 %v1283, %v1331
      %v1340 = vadd.f32 %v1284, %v1332
      %v1341 = vadd.f32 %v1285, %v1333
      %v1342 = vadd.f32 %v1286, %v1334
      %v1343 = vadd.f32 %v1287, %v1335
      %v1344 = vld [vmem:[%s1230 + $0x2] sm:$0xff]
      %v1345 = vld [vmem:[%s1230 + $0x12] sm:$0xff]
      %v1346 = vld [vmem:[%s1230 + $0x22] sm:$0xff]
      %v1347 = vld [vmem:[%s1230 + $0x32] sm:$0xff]
      %v1348 = vld [vmem:[%s1230 + $0x42] sm:$0xff]
      %v1349 = vld [vmem:[%s1230 + $0x52] sm:$0xff]
      %v1350 = vld [vmem:[%s1230 + $0x62] sm:$0xff]
      %v1351 = vld [vmem:[%s1230 + $0x72] sm:$0xff]
      %v1352 = vlaneseq
      %v1353 = vshrl.u32 %v1352, 7
      %v1354 = vsub.s32 2, %v1353
      %v1355 = vrot.slane %v889, %v1354
      %v1356 = vmul.f32 %v1344, %v1355
      %v1357 = vmul.f32 %v1345, %v1355
      %v1358 = vmul.f32 %v1346, %v1355
      %v1359 = vmul.f32 %v1347, %v1355
      %v1360 = vmul.f32 %v1348, %v1355
      %v1361 = vmul.f32 %v1349, %v1355
      %v1362 = vmul.f32 %v1350, %v1355
      %v1363 = vmul.f32 %v1351, %v1355
      %v1364 = vadd.f32 %v1308, %v1356
      %v1365 = vadd.f32 %v1309, %v1357
      %v1366 = vadd.f32 %v1310, %v1358
      %v1367 = vadd.f32 %v1311, %v1359
      %v1368 = vadd.f32 %v1312, %v1360
      %v1369 = vadd.f32 %v1313, %v1361
      %v1370 = vadd.f32 %v1314, %v1362
      %v1371 = vadd.f32 %v1315, %v1363
      %v1372 = vld [vmem:[%s1259 + $0x2] sm:$0xff]
      %v1373 = vld [vmem:[%s1259 + $0x12] sm:$0xff]
      %v1374 = vld [vmem:[%s1259 + $0x22] sm:$0xff]
      %v1375 = vld [vmem:[%s1259 + $0x32] sm:$0xff]
      %v1376 = vld [vmem:[%s1259 + $0x42] sm:$0xff]
      %v1377 = vld [vmem:[%s1259 + $0x52] sm:$0xff]
      %v1378 = vld [vmem:[%s1259 + $0x62] sm:$0xff]
      %v1379 = vld [vmem:[%s1259 + $0x72] sm:$0xff]
      %v1380 = vlaneseq
      %v1381 = vshrl.u32 %v1380, 7
      %v1382 = vsub.s32 2, %v1381
      %v1383 = vrot.slane %v893, %v1382
      %v1384 = vmul.f32 %v1372, %v1383
      %v1385 = vmul.f32 %v1373, %v1383
      %v1386 = vmul.f32 %v1374, %v1383
      %v1387 = vmul.f32 %v1375, %v1383
      %v1388 = vmul.f32 %v1376, %v1383
      %v1389 = vmul.f32 %v1377, %v1383
      %v1390 = vmul.f32 %v1378, %v1383
      %v1391 = vmul.f32 %v1379, %v1383
      %v1392 = vadd.f32 %v1336, %v1384
      %v1393 = vadd.f32 %v1337, %v1385
      %v1394 = vadd.f32 %v1338, %v1386
      %v1395 = vadd.f32 %v1339, %v1387
      %v1396 = vadd.f32 %v1340, %v1388
      %v1397 = vadd.f32 %v1341, %v1389
      %v1398 = vadd.f32 %v1342, %v1390
      %v1399 = vadd.f32 %v1343, %v1391
      %v1400 = vld [vmem:[%s6] sm:$0x1]
      %v1402 = vlaneseq
      %v1403 = vshrl.u32 %v1402, 7
      %v1404 = vsub.s32 0, %v1403
      %v1405 = vrot.slane %v1400, %v1404
      %v1407 = vadd.f32 %v1364, %v1405
      %v1408 = vadd.f32 %v1365, %v1405
      %v1409 = vadd.f32 %v1366, %v1405
      %v1410 = vadd.f32 %v1367, %v1405
      %v1411 = vadd.f32 %v1368, %v1405
      %v1412 = vadd.f32 %v1369, %v1405
      %v1413 = vadd.f32 %v1370, %v1405
      %v1414 = vadd.f32 %v1371, %v1405
      %s1415 = scalar_lea.vmem %s6, 1
      %v1416 = vld [vmem:[%s1415] sm:$0x1]
      %v1418 = vlaneseq
      %v1419 = vshrl.u32 %v1418, 7
      %v1420 = vsub.s32 0, %v1419
      %v1421 = vrot.slane %v1416, %v1420
      %v1423 = vadd.f32 %v1392, %v1421
      %v1424 = vadd.f32 %v1393, %v1421
      %v1425 = vadd.f32 %v1394, %v1421
      %v1426 = vadd.f32 %v1395, %v1421
      %v1427 = vadd.f32 %v1396, %v1421
      %v1428 = vadd.f32 %v1397, %v1421
      %v1429 = vadd.f32 %v1398, %v1421
      %v1430 = vadd.f32 %v1399, %v1421
      %v1431 = vmul.f32 %v1407, 0.5
      %v1432 = vmul.f32 %v1408, 0.5
      %v1433 = vmul.f32 %v1409, 0.5
      %v1434 = vmul.f32 %v1410, 0.5
      %v1435 = vmul.f32 %v1411, 0.5
      %v1436 = vmul.f32 %v1412, 0.5
      %v1437 = vmul.f32 %v1413, 0.5
      %v1438 = vmul.f32 %v1414, 0.5
      %v1439 = vmul.f32 %v1407, 0.70710677
      %v1440 = vmul.f32 %v1408, 0.70710677
      %v1441 = vmul.f32 %v1409, 0.70710677
      %v1442 = vmul.f32 %v1410, 0.70710677
      %v1443 = vmul.f32 %v1411, 0.70710677
      %v1444 = vmul.f32 %v1412, 0.70710677
      %v1445 = vmul.f32 %v1413, 0.70710677
      %v1446 = vmul.f32 %v1414, 0.70710677
      %v1447 = vand.u32 2147483647, %v1439
      %v1448 = vand.u32 2147483647, %v1440
      %v1449 = vand.u32 2147483647, %v1441
      %v1450 = vand.u32 2147483647, %v1442
      %v1451 = vand.u32 2147483647, %v1443
      %v1452 = vand.u32 2147483647, %v1444
      %v1453 = vand.u32 2147483647, %v1445
      %v1454 = vand.u32 2147483647, %v1446
      %v1455 = vmul.f32 %v1447, 0.3275911
      %v1456 = vmul.f32 %v1448, 0.3275911
      %v1457 = vmul.f32 %v1449, 0.3275911
      %v1458 = vmul.f32 %v1450, 0.3275911
      %v1459 = vmul.f32 %v1451, 0.3275911
      %v1460 = vmul.f32 %v1452, 0.3275911
      %v1461 = vmul.f32 %v1453, 0.3275911
      %v1462 = vmul.f32 %v1454, 0.3275911
      %v1463 = vadd.f32 %v1455, 1.0
      %v1464 = vadd.f32 %v1456, 1.0
      %v1465 = vadd.f32 %v1457, 1.0
      %v1466 = vadd.f32 %v1458, 1.0
      %v1467 = vadd.f32 %v1459, 1.0
      %v1468 = vadd.f32 %v1460, 1.0
      %v1469 = vadd.f32 %v1461, 1.0
      %v1470 = vadd.f32 %v1462, 1.0
      %v1471 = vrcp.pop %v1463
      %v1472 = vmul.f32 1.0, %v1471
      %v1473 = vrcp.pop %v1464
      %v1474 = vmul.f32 1.0, %v1473
      %v1475 = vrcp.pop %v1465
      %v1476 = vmul.f32 1.0, %v1475
      %v1477 = vrcp.pop %v1466
      %v1478 = vmul.f32 1.0, %v1477
      %v1479 = vrcp.pop %v1467
      %v1480 = vmul.f32 1.0, %v1479
      %v1481 = vrcp.pop %v1468
      %v1482 = vmul.f32 1.0, %v1481
      %v1483 = vrcp.pop %v1469
      %v1484 = vmul.f32 1.0, %v1483
      %v1485 = vrcp.pop %v1470
      %v1486 = vmul.f32 1.0, %v1485
      %v1487 = vmul.f32 %v1472, 1.0614054
      %v1488 = vmul.f32 %v1474, 1.0614054
      %v1489 = vmul.f32 %v1476, 1.0614054
      %v1490 = vmul.f32 %v1478, 1.0614054
      %v1491 = vmul.f32 %v1480, 1.0614054
      %v1492 = vmul.f32 %v1482, 1.0614054
      %v1493 = vmul.f32 %v1484, 1.0614054
      %v1494 = vmul.f32 %v1486, 1.0614054
      %v1495 = vadd.f32 %v1487, -1.4531521
      %v1496 = vadd.f32 %v1488, -1.4531521
      %v1497 = vadd.f32 %v1489, -1.4531521
      %v1498 = vadd.f32 %v1490, -1.4531521
      %v1499 = vadd.f32 %v1491, -1.4531521
      %v1500 = vadd.f32 %v1492, -1.4531521
      %v1501 = vadd.f32 %v1493, -1.4531521
      %v1502 = vadd.f32 %v1494, -1.4531521
      %v1503 = vmul.f32 %v1495, %v1472
      %v1504 = vmul.f32 %v1496, %v1474
      %v1505 = vmul.f32 %v1497, %v1476
      %v1506 = vmul.f32 %v1498, %v1478
      %v1507 = vmul.f32 %v1499, %v1480
      %v1508 = vmul.f32 %v1500, %v1482
      %v1509 = vmul.f32 %v1501, %v1484
      %v1510 = vmul.f32 %v1502, %v1486
      %v1511 = vadd.f32 %v1503, 1.4214138
      %v1512 = vadd.f32 %v1504, 1.4214138
      %v1513 = vadd.f32 %v1505, 1.4214138
      %v1514 = vadd.f32 %v1506, 1.4214138
      %v1515 = vadd.f32 %v1507, 1.4214138
      %v1516 = vadd.f32 %v1508, 1.4214138
      %v1517 = vadd.f32 %v1509, 1.4214138
      %v1518 = vadd.f32 %v1510, 1.4214138
      %v1519 = vmul.f32 %v1511, %v1472
      %v1520 = vmul.f32 %v1512, %v1474
      %v1521 = vmul.f32 %v1513, %v1476
      %v1522 = vmul.f32 %v1514, %v1478
      %v1523 = vmul.f32 %v1515, %v1480
      %v1524 = vmul.f32 %v1516, %v1482
      %v1525 = vmul.f32 %v1517, %v1484
      %v1526 = vmul.f32 %v1518, %v1486
      %v1527 = vadd.f32 %v1519, -0.28449672
      %v1528 = vadd.f32 %v1520, -0.28449672
      %v1529 = vadd.f32 %v1521, -0.28449672
      %v1530 = vadd.f32 %v1522, -0.28449672
      %v1531 = vadd.f32 %v1523, -0.28449672
      %v1532 = vadd.f32 %v1524, -0.28449672
      %v1533 = vadd.f32 %v1525, -0.28449672
      %v1534 = vadd.f32 %v1526, -0.28449672
      %v1535 = vmul.f32 %v1527, %v1472
      %v1536 = vmul.f32 %v1528, %v1474
      %v1537 = vmul.f32 %v1529, %v1476
      %v1538 = vmul.f32 %v1530, %v1478
      %v1539 = vmul.f32 %v1531, %v1480
      %v1540 = vmul.f32 %v1532, %v1482
      %v1541 = vmul.f32 %v1533, %v1484
      %v1542 = vmul.f32 %v1534, %v1486
      %v1543 = vadd.f32 %v1535, 0.2548296
      %v1544 = vadd.f32 %v1536, 0.2548296
      %v1545 = vadd.f32 %v1537, 0.2548296
      %v1546 = vadd.f32 %v1538, 0.2548296
      %v1547 = vadd.f32 %v1539, 0.2548296
      %v1548 = vadd.f32 %v1540, 0.2548296
      %v1549 = vadd.f32 %v1541, 0.2548296
      %v1550 = vadd.f32 %v1542, 0.2548296
      %v1551 = vmul.f32 %v1543, %v1472
      %v1552 = vmul.f32 %v1544, %v1474
      %v1553 = vmul.f32 %v1545, %v1476
      %v1554 = vmul.f32 %v1546, %v1478
      %v1555 = vmul.f32 %v1547, %v1480
      %v1556 = vmul.f32 %v1548, %v1482
      %v1557 = vmul.f32 %v1549, %v1484
      %v1558 = vmul.f32 %v1550, %v1486
      %v1559 = vsub.f32 0.0, %v1447
      %v1560 = vsub.f32 0.0, %v1448
      %v1561 = vsub.f32 0.0, %v1449
      %v1562 = vsub.f32 0.0, %v1450
      %v1563 = vsub.f32 0.0, %v1451
      %v1564 = vsub.f32 0.0, %v1452
      %v1565 = vsub.f32 0.0, %v1453
      %v1566 = vsub.f32 0.0, %v1454
      %v1567 = vmul.f32 %v1559, %v1447
      %v1568 = vmul.f32 %v1560, %v1448
      %v1569 = vmul.f32 %v1561, %v1449
      %v1570 = vmul.f32 %v1562, %v1450
      %v1571 = vmul.f32 %v1563, %v1451
      %v1572 = vmul.f32 %v1564, %v1452
      %v1573 = vmul.f32 %v1565, %v1453
      %v1574 = vmul.f32 %v1566, %v1454
      %v1575 = vmul.f32 %v1567, 1.442695
      %v1576 = vpow.pop %v1575
      %v1577 = vmul.f32 %v1568, 1.442695
      %v1578 = vpow.pop %v1577
      %v1579 = vmul.f32 %v1569, 1.442695
      %v1580 = vpow.pop %v1579
      %v1581 = vmul.f32 %v1570, 1.442695
      %v1582 = vpow.pop %v1581
      %v1583 = vmul.f32 %v1571, 1.442695
      %v1584 = vpow.pop %v1583
      %v1585 = vmul.f32 %v1572, 1.442695
      %v1586 = vpow.pop %v1585
      %v1587 = vmul.f32 %v1573, 1.442695
      %v1588 = vpow.pop %v1587
      %v1589 = vmul.f32 %v1574, 1.442695
      %v1590 = vpow.pop %v1589
      %v1591 = vmul.f32 %v1551, %v1576
      %v1592 = vmul.f32 %v1552, %v1578
      %v1593 = vmul.f32 %v1553, %v1580
      %v1594 = vmul.f32 %v1554, %v1582
      %v1595 = vmul.f32 %v1555, %v1584
      %v1596 = vmul.f32 %v1556, %v1586
      %v1597 = vmul.f32 %v1557, %v1588
      %v1598 = vmul.f32 %v1558, %v1590
      %v1599 = vsub.f32 1.0, %v1591
      %v1600 = vsub.f32 1.0, %v1592
      %v1601 = vsub.f32 1.0, %v1593
      %v1602 = vsub.f32 1.0, %v1594
      %v1603 = vsub.f32 1.0, %v1595
      %v1604 = vsub.f32 1.0, %v1596
      %v1605 = vsub.f32 1.0, %v1597
      %v1606 = vsub.f32 1.0, %v1598
      %vm1607 = vcmp.lt.f32.partialorder %v1439, 0.0
      %vm1608 = vcmp.lt.f32.partialorder %v1440, 0.0
      %vm1609 = vcmp.lt.f32.partialorder %v1441, 0.0
      %vm1610 = vcmp.lt.f32.partialorder %v1442, 0.0
      %vm1611 = vcmp.lt.f32.partialorder %v1443, 0.0
      %vm1612 = vcmp.lt.f32.partialorder %v1444, 0.0
      %vm1613 = vcmp.lt.f32.partialorder %v1445, 0.0
      %vm1614 = vcmp.lt.f32.partialorder %v1446, 0.0
      %v1615 = vsub.f32 0.0, %v1599
      %v1616 = vsub.f32 0.0, %v1600
      %v1617 = vsub.f32 0.0, %v1601
      %v1618 = vsub.f32 0.0, %v1602
      %v1619 = vsub.f32 0.0, %v1603
      %v1620 = vsub.f32 0.0, %v1604
      %v1621 = vsub.f32 0.0, %v1605
      %v1622 = vsub.f32 0.0, %v1606
      %v1623 = vsel %vm1607, %v1615, %v1599
      %v1624 = vsel %vm1608, %v1616, %v1600
      %v1625 = vsel %vm1609, %v1617, %v1601
      %v1626 = vsel %vm1610, %v1618, %v1602
      %v1627 = vsel %vm1611, %v1619, %v1603
      %v1628 = vsel %vm1612, %v1620, %v1604
      %v1629 = vsel %vm1613, %v1621, %v1605
      %v1630 = vsel %vm1614, %v1622, %v1606
      %v1631 = vadd.f32 %v1623, 1.0
      %v1632 = vadd.f32 %v1624, 1.0
      %v1633 = vadd.f32 %v1625, 1.0
      %v1634 = vadd.f32 %v1626, 1.0
      %v1635 = vadd.f32 %v1627, 1.0
      %v1636 = vadd.f32 %v1628, 1.0
      %v1637 = vadd.f32 %v1629, 1.0
      %v1638 = vadd.f32 %v1630, 1.0
      %v1639 = vmul.f32 %v1431, %v1631
      %v1640 = vmul.f32 %v1432, %v1632
      %v1641 = vmul.f32 %v1433, %v1633
      %v1642 = vmul.f32 %v1434, %v1634
      %v1643 = vmul.f32 %v1435, %v1635
      %v1644 = vmul.f32 %v1436, %v1636
      %v1645 = vmul.f32 %v1437, %v1637
      %v1646 = vmul.f32 %v1438, %v1638
      %v1647 = vmul.f32 %v1639, %v1423
      %v1648 = vmul.f32 %v1640, %v1424
      %v1649 = vmul.f32 %v1641, %v1425
      %v1650 = vmul.f32 %v1642, %v1426
      %v1651 = vmul.f32 %v1643, %v1427
      %v1652 = vmul.f32 %v1644, %v1428
      %v1653 = vmul.f32 %v1645, %v1429
      %v1654 = vmul.f32 %v1646, %v1430
      %1655 = vst.msk [vmem:[%s434] sm:$0xff] %vm456, %v1647
      %1656 = vst.msk [vmem:[%s434 + $0x8] sm:$0xff] %vm456, %v1648
      %1657 = vst.msk [vmem:[%s434 + $0x10] sm:$0xff] %vm456, %v1649
      %1658 = vst.msk [vmem:[%s434 + $0x18] sm:$0xff] %vm456, %v1650
      %1659 = vst.msk [vmem:[%s434 + $0x20] sm:$0xff] %vm456, %v1651
      %1660 = vst.msk [vmem:[%s434 + $0x28] sm:$0xff] %vm456, %v1652
      %1661 = vst.msk [vmem:[%s434 + $0x30] sm:$0xff] %vm456, %v1653
      %1662 = vst.msk [vmem:[%s434 + $0x38] sm:$0xff] %vm456, %v1654
      %s1663 = smul.u32 8, %s23
      %p1664 = scmp.lt.s32.totalorder %s22, 1
      %s1665 = scalar_select %p1664, %s22, 1
      %p1666 = scmp.lt.s32.totalorder %s1663, 7
      %s1667 = scalar_select %p1666, %s1663, 7
      %s1668 = smul.addr %s1665, 8
      %s1669 = sadd.s32 %s1667, %s1668
      %s1670 = smul.addr %s1669, 8
      %s1671 = scalar_lea.vmem %s7, %s1670
      // Predicated region
      $region49: #{gated_attention_forward.3} parent=47 // pred_check
        %p1672 = pneg %p234
      $region50: #{gated_attention_forward.3} parent=47 // pred_check_branch
        %1674 = sbr.rel (%p1672) target = $region52
      $region51: #{gated_attention_forward.3} parent=47 // pred_region
        %s1675 = smul.u32 8, %s23
      $region52: #{gated_attention_forward.3} parent=47 // pred_fallthru
        _
    $region48: #{gated_attention_forward.3} parent=5 // pred_fallthru
      _
    %p1676 = scmp.le.s32.totalorder 2, %s13
    // Predicated region
    $region53: #{gated_attention_forward.3} parent=5 // pred_check
      %p1677 = pneg %p1676
    $region54: #{gated_attention_forward.3} parent=5 // pred_check_branch
      %1679 = sbr.rel (%p1677) target = $region56
    $region55: #{gated_attention_forward.3} parent=5 // pred_region
      %s1680 = ssub.s32 %s13, 2
      // Predicated region
      $region57: #{gated_attention_forward.3} parent=55 // pred_check
        %p1681 = pneg %p240
      $region58: #{gated_attention_forward.3} parent=55 // pred_check_branch
        %1683 = sbr.rel (%p1681) target = $region60
      $region59: #{gated_attention_forward.3} parent=55 // pred_region
        %s1684 = smul.u32 8, %s25
        %p1685 = scmp.lt.s32.totalorder %s24, 1
        %s1686 = scalar_select %p1685, %s24, 1
        %p1687 = scmp.lt.s32.totalorder %s1684, 7
        %s1688 = scalar_select %p1687, %s1684, 7
        %s1689 = smul.addr %s1686, 8
        %s1690 = sadd.s32 %s1688, %s1689
        %s1691 = smul.addr %s1690, 8
        %s1692 = scalar_lea.vmem %s7, %s1691
      $region60: #{gated_attention_forward.3} parent=55 // pred_fallthru
        _
    $region56: #{gated_attention_forward.3} parent=5 // pred_fallthru
      _
  $region6: #{gated_attention_forward.3} parent=0 // loop_footer
    %s17 = sadd.s32 1, %s13
  $region7: #{gated_attention_forward.3} parent=0 // loop_footer_branch
    %12 = sbr.rel target = $region3
  $region8: #{gated_attention_forward.3} parent=0 // loop_exit
    _

</llo_original>
